<compile_context>
chip_gen: v7x
topology: tpu7x:2x2x1
jax: 0.10.0
libtpu: 0.0.40
codegen_flags: <defaults>
</compile_context>

<pallas_src>
import jax
import jax.numpy as jnp
import numpy as np
from jax.experimental import pallas as pl
from jax.experimental.pallas import tpu as pltpu

# ----------------------------- configuration --------------------------------
LATENT = 64            # latent_dim
NUM_HEADS = 8          # num_heads (module default)
HEAD_DIM = LATENT // NUM_HEADS
SCALE = HEAD_DIM ** -0.5
KERNEL = (5, 7, 7)     # kernel (module default)
N_LAYERS = 2           # small stack for the demo (module default is 10)

B, D, H, W = 2, 6, 8, 8
N = D * H * W          # 384 (multiple of 128 -> lane friendly)


# ------------------ neighborhood geometry (hoisted, numpy) -------------------
def build_geometry(dims, kernel):
    """Clamped natten-window validity mask and relative-position indices."""
    Dd, Hh, Ww = dims
    kD, kH, kW = kernel
    di, hi, wi = np.meshgrid(np.arange(Dd), np.arange(Hh), np.arange(Ww),
                             indexing="ij")
    di, hi, wi = di.reshape(-1), hi.reshape(-1), wi.reshape(-1)      # (N,)

    def axis_terms(idx, L, K):
        start = np.clip(idx - (K - 1) // 2, 0, L - K)                # (N,)
        valid = (idx[None, :] >= start[:, None]) & (
            idx[None, :] < start[:, None] + K)                       # (N,N)
        rel = idx[None, :] - idx[:, None] + (K - 1)                  # (N,N)
        rel = np.clip(rel, 0, 2 * K - 2)     # explicit clamp (OOB pairs masked)
        return valid, rel

    vd, rd = axis_terms(di, Dd, kD)
    vh, rh = axis_terms(hi, Hh, kH)
    vw, rw = axis_terms(wi, Ww, kW)
    return vd & vh & vw, rd, rh, rw


# ----------------------- parameter / bias preparation ------------------------
def prepare_stacked_params(params, dims):
    """Fold SCALE into the q columns, gather per-layer rpb biases (bf16, masked
    with -1e30) and stack everything along a leading layer axis."""
    valid, rd, rh, rw = build_geometry(dims, KERNEL)
    valid_j = jnp.asarray(valid)
    scale_cols = jnp.concatenate([
        jnp.full((LATENT,), SCALE, jnp.float32),
        jnp.ones((2 * LATENT,), jnp.float32)])

    wqkv, bqkv, wproj, bproj, bias = [], [], [], [], []
    for lp in params:
        wqkv.append(lp["wqkv"] * scale_cols[None, :])
        bqkv.append(lp["bqkv"] * scale_cols[None, :])
        wproj.append(lp["wproj"])
        bproj.append(lp["bproj"])
        b = jnp.where(valid_j[None], lp["rpb"][:, rd, rh, rw],
                      jnp.float32(-1e30))
        bias.append(b.astype(jnp.bfloat16))          # halve the dominant traffic
    return (jnp.stack(wqkv), jnp.stack(bqkv), jnp.stack(wproj),
            jnp.stack(bproj), jnp.stack(bias))


# ------------------------------ Pallas kernel --------------------------------
def na3d_stack_kernel(x_ref, wqkv_ref, bqkv_ref, wproj_ref, bproj_ref, bias_ref,
                      o_ref, state_ref, q_ref, k_ref, vaug_ref, oacc_ref):
    layer = pl.program_id(1)
    head = pl.program_id(2)
    n_layers = pl.num_programs(1)
    n_heads = pl.num_programs(2)
    Nr, C = state_ref.shape
    hd = HEAD_DIM

    @pl.when(jnp.logical_and(layer == 0, head == 0))
    def _():
        state_ref[...] = x_ref[0]                    # load activations once per b

    # ---- per-layer qkv projection (f32 matmul), cast to bf16 once ----------
    @pl.when(head == 0)
    def _():
        x = state_ref[...]                           # (N, C) f32, VMEM-resident
        qkv = jnp.dot(x, wqkv_ref[0], preferred_element_type=jnp.float32)
        qkv = (qkv + bqkv_ref[0]).astype(jnp.bfloat16)   # SCALE pre-folded in q
        q_ref[...] = qkv[:, :C]
        k_ref[...] = qkv[:, C:2 * C]
        vaug_ref[:, :C] = qkv[:, 2 * C:]             # v in lanes [0, C)
        vaug_ref[:, C:] = jnp.ones((Nr, C), jnp.bfloat16)   # ones col at lane C

    # ---- per-head attention (head selected by lane-masking k and v) --------
    lo = head * hd
    lane = jax.lax.broadcasted_iota(jnp.int32, (1, C), 1)
    in_head = jnp.logical_and(lane >= lo, lane < lo + hd)
    k_h = jnp.where(in_head, k_ref[...], 0.0)        # zero non-head channels

    # scores: NT dot_general (contract C) -> no transposes, same MXU passes as K=8
    s = jax.lax.dot_general(q_ref[...], k_h, (((1,), (1,)), ((), ())),
                            preferred_element_type=jnp.float32)     # (N, N)
    s = s + bias_ref[0, 0].astype(jnp.float32)       # masked neighborhood rpb
    m = jnp.max(s, axis=-1, keepdims=True)
    p = jnp.exp((s - m).astype(jnp.bfloat16))        # bf16 exp; bf16 MXU input

    lane2 = jax.lax.broadcasted_iota(jnp.int32, (1, 2 * C), 1)
    vmask = jnp.logical_or(
        jnp.logical_and(lane2 >= lo, lane2 < lo + hd),   # head's v channels
        lane2 == C)                                      # + ones column (denom)
    v_aug = jnp.where(vmask, vaug_ref[...], 0.0)         # (N, 2C) bf16

    # one matmul gives both numerator (head lanes) and denominator (lane C)
    o_aug = jnp.dot(p, v_aug, preferred_element_type=jnp.float32)   # (N, 2C)
    denom = o_aug[:, C:C + 1]
    contrib = o_aug[:, :C] * pl.reciprocal(denom, approx=True)      # (N, C)

    # heads write disjoint lanes -> the accumulation IS the concat
    @pl.when(head == 0)
    def _():
        oacc_ref[...] = contrib

    @pl.when(head != 0)
    def _():
        oacc_ref[...] += contrib

    # ---- per-layer fused output projection + state carry -------------------
    @pl.when(head == n_heads - 1)
    def _():
        y = jnp.dot(oacc_ref[...], wproj_ref[0],
                    preferred_element_type=jnp.float32) + bproj_ref[0]
        state_ref[...] = y                           # carry to next layer

    @pl.when(jnp.logical_and(head == n_heads - 1, layer == n_layers - 1))
    def _():
        o_ref[0] = state_ref[...].astype(o_ref.dtype)    # write once per batch


# ----------------------------- processor wrapper ------------------------------
def weathermesh_processor(x, params):
    """x: (B, D, H, W, C) -> same shape; fused stack of NA3D layers."""
    Bb, Dd, Hh, Ww, C = x.shape
    Nn = Dd * Hh * Ww
    L = len(params)
    nh = NUM_HEADS
    x_flat = x.reshape(Bb, Nn, C)
    wqkv_all, bqkv_all, wproj_all, bproj_all, bias_all = prepare_stacked_params(
        params, (Dd, Hh, Ww))

    out = pl.pallas_call(
        na3d_stack_kernel,
        out_shape=jax.ShapeDtypeStruct((Bb, Nn, C), x_flat.dtype),
        grid_spec=pltpu.PrefetchScalarGridSpec(
            num_scalar_prefetch=0,
            grid=(Bb, L, nh),                        # batch / layer / head
            in_specs=[
                pl.BlockSpec((1, Nn, C), lambda b, l, h: (b, 0, 0)),          # x
                pl.BlockSpec((1, C, 3 * C), lambda b, l, h: (l, 0, 0)),       # wqkv
                pl.BlockSpec((1, 1, 3 * C), lambda b, l, h: (l, 0, 0)),       # bqkv
                pl.BlockSpec((1, C, C), lambda b, l, h: (l, 0, 0)),           # wproj
                pl.BlockSpec((1, 1, C), lambda b, l, h: (l, 0, 0)),           # bproj
                pl.BlockSpec((1, 1, Nn, Nn), lambda b, l, h: (l, h, 0, 0)),   # bias
            ],
            out_specs=pl.BlockSpec((1, Nn, C), lambda b, l, h: (b, 0, 0)),
            scratch_shapes=[
                pltpu.VMEM((Nn, C), jnp.float32),        # resident activations
                pltpu.VMEM((Nn, C), jnp.bfloat16),       # q (bf16, cast once)
                pltpu.VMEM((Nn, C), jnp.bfloat16),       # k
                pltpu.VMEM((Nn, 2 * C), jnp.bfloat16),   # [v | ones | pad]
                pltpu.VMEM((Nn, C), jnp.float32),        # multi-head output acc
            ],
        ),
        compiler_params=pltpu.CompilerParams(
            dimension_semantics=("parallel", "arbitrary", "arbitrary"),
            vmem_limit_bytes=32 * 1024 * 1024),
    )(x_flat, wqkv_all, bqkv_all, wproj_all, bproj_all, bias_all)
    return out.reshape(Bb, Dd, Hh, Ww, C)
    # TODO(synk): for real WeatherMesh resolutions, tile the key axis to a
    # +-(k-1)/2 depth-plane band instead of dense (N,N) scores/bias; for large
    # per-core batch, move B inside the layer axis to amortize the bias DMA.


# --------------------------- pure-JAX reference -------------------------------
def processor_ref(x, params):
    Bb, Dd, Hh, Ww, C = x.shape
    valid, rd, rh, rw = build_geometry((Dd, Hh, Ww), KERNEL)
    valid_j = jnp.asarray(valid)
    xf = x.reshape(Bb, -1, C)
    for lp in params:
        bias = jnp.where(valid_j[None], lp["rpb"][:, rd, rh, rw],
                         jnp.float32(-1e30))
        qkv = xf @ lp["wqkv"] + lp["bqkv"]
        q, k, v = jnp.split(qkv, 3, axis=-1)
        q = q.reshape(Bb, -1, NUM_HEADS, HEAD_DIM) * SCALE
        k = k.reshape(Bb, -1, NUM_HEADS, HEAD_DIM)
        v = v.reshape(Bb, -1, NUM_HEADS, HEAD_DIM)
        scores = jnp.einsum("bind,bjnd->bnij", q, k) + bias[None]
        attn = jax.nn.softmax(scores, axis=-1)
        o = jnp.einsum("bnij,bjnd->bind", attn, v).reshape(Bb, -1, C)
        xf = o @ lp["wproj"] + lp["bproj"]
    return xf.reshape(Bb, Dd, Hh, Ww, C)


# ------------------------------ param init -----------------------------------
def init_params(key, n_layers):
    kD, kH, kW = KERNEL
    params = []
    for _ in range(n_layers):
        key, k1, k2, k3, k4, k5 = jax.random.split(key, 6)
        params.append({
            "wqkv": 0.05 * jax.random.normal(k1, (LATENT, 3 * LATENT), jnp.float32),
            "bqkv": 0.01 * jax.random.normal(k2, (1, 3 * LATENT), jnp.float32),
            "wproj": 0.05 * jax.random.normal(k3, (LATENT, LATENT), jnp.float32),
            "bproj": 0.01 * jax.random.normal(k4, (1, LATENT), jnp.float32),
            "rpb": 0.02 * jax.random.normal(
                k5, (NUM_HEADS, 2 * kD - 1, 2 * kH - 1, 2 * kW - 1), jnp.float32),
        })
    return params


# ---------------------------------- main --------------------------------------
if __name__ == "__main__":
    key = jax.random.PRNGKey(0)
    kx, kp = jax.random.split(key)
    x = jax.random.normal(kx, (B, D, H, W, LATENT), jnp.float32)
    params = init_params(kp, N_LAYERS)

    out = weathermesh_processor(x, params)
    out = jax.block_until_ready(out)
    assert out.shape == x.shape and out.dtype == jnp.float32

    ref = jax.block_until_ready(processor_ref(x, params))
    # bf16 MXU inputs / bf16 bias / bf16 exp / approx reciprocal -> looser check.
    # NOTE: validated for N_LAYERS=2; re-validate tolerance for the 10-layer stack.
    np.testing.assert_allclose(np.asarray(out), np.asarray(ref),
                               rtol=2e-2, atol=2e-2)
    print("KERNEL_OK")
</pallas_src>

<mosaic_0001>
module attributes {stable_mosaic.version = 11 : i64} {
  func.func @na3d_stack_kernel(%arg0: i32, %arg1: i32, %arg2: i32, %arg3: memref<1x384x64xf32, #tpu.memory_space<vmem>>, %arg4: memref<1x64x192xf32, #tpu.memory_space<vmem>>, %arg5: memref<1x1x192xf32, #tpu.memory_space<vmem>>, %arg6: memref<1x64x64xf32, #tpu.memory_space<vmem>>, %arg7: memref<1x1x64xf32, #tpu.memory_space<vmem>>, %arg8: memref<1x1x384x384xbf16, #tpu.memory_space<vmem>>, %arg9: memref<1x384x64xf32, #tpu.memory_space<vmem>>, %arg10: memref<384x64xf32, #tpu.memory_space<vmem>>, %arg11: memref<384x64xbf16, #tpu.memory_space<vmem>>, %arg12: memref<384x64xbf16, #tpu.memory_space<vmem>>, %arg13: memref<384x128xbf16, #tpu.memory_space<vmem>>, %arg14: memref<384x64xf32, #tpu.memory_space<vmem>>) attributes {dimension_semantics = [#tpu.dimension_semantics<parallel>, #tpu.dimension_semantics<arbitrary>, #tpu.dimension_semantics<arbitrary>], iteration_bounds = array<i64: 2, 2, 8>, scalar_prefetch = 0 : i64, scratch_operands = 5 : i64, tpu.core_type = #tpu.core_type<tc>, window_params = [{transform_indices = @transform_0, window_bounds = array<i64: 1, 384, 64>}, {transform_indices = @transform_1, window_bounds = array<i64: 1, 64, 192>}, {transform_indices = @transform_2, window_bounds = array<i64: 1, 1, 192>}, {transform_indices = @transform_3, window_bounds = array<i64: 1, 64, 64>}, {transform_indices = @transform_4, window_bounds = array<i64: 1, 1, 64>}, {transform_indices = @transform_5, window_bounds = array<i64: 1, 1, 384, 384>}, {transform_indices = @transform_6, window_bounds = array<i64: 1, 384, 64>}]} {
    %c0_i32 = arith.constant 0 : i32
    %0 = arith.cmpi eq, %arg1, %c0_i32 : i32
    %c0_i32_0 = arith.constant 0 : i32
    %1 = arith.cmpi eq, %arg2, %c0_i32_0 : i32
    %2 = arith.andi %0, %1 : i1
    %3 = arith.extui %2 : i1 to i32
    %c0_i32_1 = arith.constant 0 : i32
    %4 = arith.cmpi ne, %3, %c0_i32_1 : i32
    scf.if %4 {
      %c0_26 = arith.constant 0 : index
      %c0_27 = arith.constant 0 : index
      %c0_28 = arith.constant 0 : index
      %70 = vector.load %arg3[%c0_26, %c0_27, %c0_28] : memref<1x384x64xf32, #tpu.memory_space<vmem>>, vector<1x384x64xf32>
      %71 = vector.shape_cast %70 : vector<1x384x64xf32> to vector<384x64xf32>
      %c0_29 = arith.constant 0 : index
      %c0_30 = arith.constant 0 : index
      %72 = vector.load %arg10[%c0_29, %c0_30] : memref<384x64xf32, #tpu.memory_space<vmem>>, vector<384x64xf32>
      tpu.vector_store %arg10[%c0_29, %c0_30], %71 {strides = array<i32>} : memref<384x64xf32, #tpu.memory_space<vmem>>, vector<384x64xf32>,
    } else {
    }
    %c0_i32_2 = arith.constant 0 : i32
    %5 = arith.cmpi eq, %arg2, %c0_i32_2 : i32
    %6 = arith.extui %5 : i1 to i32
    %c0_i32_3 = arith.constant 0 : i32
    %7 = arith.cmpi ne, %6, %c0_i32_3 : i32
    scf.if %7 {
      %c0_26 = arith.constant 0 : index
      %c0_27 = arith.constant 0 : index
      %70 = vector.load %arg10[%c0_26, %c0_27] : memref<384x64xf32, #tpu.memory_space<vmem>>, vector<384x64xf32>
      %c0_28 = arith.constant 0 : index
      %c0_29 = arith.constant 0 : index
      %c0_30 = arith.constant 0 : index
      %71 = vector.load %arg4[%c0_28, %c0_29, %c0_30] : memref<1x64x192xf32, #tpu.memory_space<vmem>>, vector<1x64x192xf32>
      %72 = vector.shape_cast %71 : vector<1x64x192xf32> to vector<64x192xf32>
      %cst_31 = arith.constant dense<0.000000e+00> : vector<384x192xf32>
      %73 = tpu.matmul %70, %72, %cst_31 {dimension_numbers = #tpu.dot_dimension_numbers<[1], [0], [0], [1], [0, 0, 1, 1], [], []>} : vector<384x64xf32>, vector<64x192xf32>, vector<384x192xf32> -> vector<384x192xf32>
      %c0_32 = arith.constant 0 : index
      %c0_33 = arith.constant 0 : index
      %c0_34 = arith.constant 0 : index
      %74 = vector.load %arg5[%c0_32, %c0_33, %c0_34] : memref<1x1x192xf32, #tpu.memory_space<vmem>>, vector<1x1x192xf32>
      %75 = vector.shape_cast %74 : vector<1x1x192xf32> to vector<1x192xf32>
      %76 = vector.broadcast %75 : vector<1x192xf32> to vector<384x192xf32>
      %77 = arith.addf %73, %76 : vector<384x192xf32>
      %78 = arith.truncf %77 : vector<384x192xf32> to vector<384x192xbf16>
      %79 = vector.extract_strided_slice %78 {offsets = [0, 0], sizes = [384, 64], strides = [1, 1]} : vector<384x192xbf16> to vector<384x64xbf16>
      %c0_35 = arith.constant 0 : index
      %c0_36 = arith.constant 0 : index
      %80 = vector.load %arg11[%c0_35, %c0_36] : memref<384x64xbf16, #tpu.memory_space<vmem>>, vector<384x64xbf16>
      tpu.vector_store %arg11[%c0_35, %c0_36], %79 {strides = array<i32>} : memref<384x64xbf16, #tpu.memory_space<vmem>>, vector<384x64xbf16>,
      %81 = vector.extract_strided_slice %78 {offsets = [0, 64], sizes = [384, 64], strides = [1, 1]} : vector<384x192xbf16> to vector<384x64xbf16>
      %c0_37 = arith.constant 0 : index
      %c0_38 = arith.constant 0 : index
      %82 = vector.load %arg12[%c0_37, %c0_38] : memref<384x64xbf16, #tpu.memory_space<vmem>>, vector<384x64xbf16>
      tpu.vector_store %arg12[%c0_37, %c0_38], %81 {strides = array<i32>} : memref<384x64xbf16, #tpu.memory_space<vmem>>, vector<384x64xbf16>,
      %83 = vector.extract_strided_slice %78 {offsets = [0, 128], sizes = [384, 64], strides = [1, 1]} : vector<384x192xbf16> to vector<384x64xbf16>
      %c0_39 = arith.constant 0 : index
      %c0_40 = arith.constant 0 : index
      %84 = vector.load %arg13[%c0_39, %c0_40] : memref<384x128xbf16, #tpu.memory_space<vmem>>, vector<384x64xbf16>
      tpu.vector_store %arg13[%c0_39, %c0_40], %83 {strides = array<i32>} : memref<384x128xbf16, #tpu.memory_space<vmem>>, vector<384x64xbf16>,
      %cst_41 = arith.constant 1.000000e+00 : bf16
      %85 = vector.broadcast %cst_41 : bf16 to vector<384x64xbf16>
      %c0_42 = arith.constant 0 : index
      %c64 = arith.constant 64 : index
      %86 = vector.load %arg13[%c0_42, %c64] : memref<384x128xbf16, #tpu.memory_space<vmem>>, vector<384x64xbf16>
      tpu.vector_store %arg13[%c0_42, %c64], %85 {strides = array<i32>} : memref<384x128xbf16, #tpu.memory_space<vmem>>, vector<384x64xbf16>,
    } else {
    }
    %c8_i32 = arith.constant 8 : i32
    %8 = arith.muli %arg2, %c8_i32 : i32
    %9 = tpu.iota {dimensions = array<i32: 1>} : vector<1x64xi32>
    %10 = vector.broadcast %8 : i32 to vector<1x64xi32>
    %11 = arith.cmpi sge, %9, %10 : vector<1x64xi32>
    %c8_i32_4 = arith.constant 8 : i32
    %12 = arith.addi %8, %c8_i32_4 : i32
    %13 = vector.broadcast %12 : i32 to vector<1x64xi32>
    %14 = arith.cmpi slt, %9, %13 : vector<1x64xi32>
    %15 = arith.andi %11, %14 : vector<1x64xi1>
    %c0 = arith.constant 0 : index
    %c0_5 = arith.constant 0 : index
    %16 = vector.load %arg12[%c0, %c0_5] : memref<384x64xbf16, #tpu.memory_space<vmem>>, vector<384x64xbf16>
    %cst = arith.constant 0.000000e+00 : f32
    %17 = arith.truncf %cst : f32 to bf16
    %18 = vector.shape_cast %15 : vector<1x64xi1> to vector<1x64xi1>
    %19 = vector.broadcast %18 : vector<1x64xi1> to vector<384x64xi1>
    %20 = vector.broadcast %17 : bf16 to vector<384x64xbf16>
    %21 = arith.select %19, %16, %20 : vector<384x64xi1>, vector<384x64xbf16>
    %c0_6 = arith.constant 0 : index
    %c0_7 = arith.constant 0 : index
    %22 = vector.load %arg11[%c0_6, %c0_7] : memref<384x64xbf16, #tpu.memory_space<vmem>>, vector<384x64xbf16>
    %cst_8 = arith.constant dense<0.000000e+00> : vector<384x384xf32>
    %23 = tpu.matmul %22, %21, %cst_8 {dimension_numbers = #tpu.dot_dimension_numbers<[1], [1], [0], [0], [0, 0, 1, 0], [], []>} : vector<384x64xbf16>, vector<384x64xbf16>, vector<384x384xf32> -> vector<384x384xf32>
    %c0_9 = arith.constant 0 : index
    %c0_10 = arith.constant 0 : index
    %c0_11 = arith.constant 0 : index
    %c0_12 = arith.constant 0 : index
    %24 = vector.load %arg8[%c0_9, %c0_10, %c0_11, %c0_12] : memref<1x1x384x384xbf16, #tpu.memory_space<vmem>>, vector<1x1x384x384xbf16>
    %25 = vector.shape_cast %24 : vector<1x1x384x384xbf16> to vector<384x384xbf16>
    %26 = arith.extf %25 : vector<384x384xbf16> to vector<384x384xf32>
    %27 = arith.addf %23, %26 : vector<384x384xf32>
    %cst_13 = arith.constant dense<0xFF800000> : vector<384xf32>
    %28 = vector.multi_reduction <maximumf>, %27, %cst_13 [1] : vector<384x384xf32> to vector<384xf32>
    %29 = vector.shape_cast %28 : vector<384xf32> to vector<384x1xf32>
    %30 = vector.broadcast %29 : vector<384x1xf32> to vector<384x384xf32>
    %31 = arith.subf %27, %30 : vector<384x384xf32>
    %32 = arith.truncf %31 : vector<384x384xf32> to vector<384x384xbf16>
    %33 = math.exp %32 : vector<384x384xbf16>
    %34 = tpu.iota {dimensions = array<i32: 1>} : vector<1x128xi32>
    %35 = vector.broadcast %8 : i32 to vector<1x128xi32>
    %36 = arith.cmpi sge, %34, %35 : vector<1x128xi32>
    %c8_i32_14 = arith.constant 8 : i32
    %37 = arith.addi %8, %c8_i32_14 : i32
    %38 = vector.broadcast %37 : i32 to vector<1x128xi32>
    %39 = arith.cmpi slt, %34, %38 : vector<1x128xi32>
    %40 = arith.andi %36, %39 : vector<1x128xi1>
    %c64_i32 = arith.constant 64 : i32
    %41 = vector.broadcast %c64_i32 : i32 to vector<1x128xi32>
    %42 = arith.cmpi eq, %34, %41 : vector<1x128xi32>
    %43 = arith.ori %40, %42 : vector<1x128xi1>
    %c0_15 = arith.constant 0 : index
    %c0_16 = arith.constant 0 : index
    %44 = vector.load %arg13[%c0_15, %c0_16] : memref<384x128xbf16, #tpu.memory_space<vmem>>, vector<384x128xbf16>
    %cst_17 = arith.constant 0.000000e+00 : f32
    %45 = arith.truncf %cst_17 : f32 to bf16
    %46 = vector.shape_cast %43 : vector<1x128xi1> to vector<1x128xi1>
    %47 = vector.broadcast %46 : vector<1x128xi1> to vector<384x128xi1>
    %48 = vector.broadcast %45 : bf16 to vector<384x128xbf16>
    %49 = arith.select %47, %44, %48 : vector<384x128xi1>, vector<384x128xbf16>
    %cst_18 = arith.constant dense<0.000000e+00> : vector<384x128xf32>
    %50 = tpu.matmul %33, %49, %cst_18 {dimension_numbers = #tpu.dot_dimension_numbers<[1], [0], [0], [1], [0, 0, 1, 1], [], []>} : vector<384x384xbf16>, vector<384x128xbf16>, vector<384x128xf32> -> vector<384x128xf32>
    %51 = vector.extract_strided_slice %50 {offsets = [0, 64], sizes = [384, 1], strides = [1, 1]} : vector<384x128xf32> to vector<384x1xf32>
    %52 = vector.extract_strided_slice %50 {offsets = [0, 0], sizes = [384, 64], strides = [1, 1]} : vector<384x128xf32> to vector<384x64xf32>
    %53 = tpu.reciprocal %51 {approx = true} : vector<384x1xf32> -> vector<384x1xf32>
    %54 = vector.broadcast %53 : vector<384x1xf32> to vector<384x64xf32>
    %55 = arith.mulf %52, %54 : vector<384x64xf32>
    %c0_i32_19 = arith.constant 0 : i32
    %56 = arith.cmpi eq, %arg2, %c0_i32_19 : i32
    %57 = arith.extui %56 : i1 to i32
    %c0_i32_20 = arith.constant 0 : i32
    %58 = arith.cmpi ne, %57, %c0_i32_20 : i32
    scf.if %58 {
      %c0_26 = arith.constant 0 : index
      %c0_27 = arith.constant 0 : index
      %70 = vector.load %arg14[%c0_26, %c0_27] : memref<384x64xf32, #tpu.memory_space<vmem>>, vector<384x64xf32>
      tpu.vector_store %arg14[%c0_26, %c0_27], %55 {strides = array<i32>} : memref<384x64xf32, #tpu.memory_space<vmem>>, vector<384x64xf32>,
    } else {
    }
    %c0_i32_21 = arith.constant 0 : i32
    %59 = arith.cmpi ne, %arg2, %c0_i32_21 : i32
    %60 = arith.extui %59 : i1 to i32
    %c0_i32_22 = arith.constant 0 : i32
    %61 = arith.cmpi ne, %60, %c0_i32_22 : i32
    scf.if %61 {
      %c0_26 = arith.constant 0 : index
      %c0_27 = arith.constant 0 : index
      %70 = vector.load %arg14[%c0_26, %c0_27] : memref<384x64xf32, #tpu.memory_space<vmem>>, vector<384x64xf32>
      %71 = arith.addf %70, %55 : vector<384x64xf32>
      %c0_28 = arith.constant 0 : index
      %c0_29 = arith.constant 0 : index
      %72 = vector.load %arg14[%c0_28, %c0_29] : memref<384x64xf32, #tpu.memory_space<vmem>>, vector<384x64xf32>
      tpu.vector_store %arg14[%c0_28, %c0_29], %71 {strides = array<i32>} : memref<384x64xf32, #tpu.memory_space<vmem>>, vector<384x64xf32>,
    } else {
    }
    %c7_i32 = arith.constant 7 : i32
    %62 = arith.cmpi eq, %arg2, %c7_i32 : i32
    %63 = arith.extui %62 : i1 to i32
    %c0_i32_23 = arith.constant 0 : i32
    %64 = arith.cmpi ne, %63, %c0_i32_23 : i32
    scf.if %64 {
      %c0_26 = arith.constant 0 : index
      %c0_27 = arith.constant 0 : index
      %70 = vector.load %arg14[%c0_26, %c0_27] : memref<384x64xf32, #tpu.memory_space<vmem>>, vector<384x64xf32>
      %c0_28 = arith.constant 0 : index
      %c0_29 = arith.constant 0 : index
      %c0_30 = arith.constant 0 : index
      %71 = vector.load %arg6[%c0_28, %c0_29, %c0_30] : memref<1x64x64xf32, #tpu.memory_space<vmem>>, vector<1x64x64xf32>
      %72 = vector.shape_cast %71 : vector<1x64x64xf32> to vector<64x64xf32>
      %cst_31 = arith.constant dense<0.000000e+00> : vector<384x64xf32>
      %73 = tpu.matmul %70, %72, %cst_31 {dimension_numbers = #tpu.dot_dimension_numbers<[1], [0], [0], [1], [0, 0, 1, 1], [], []>} : vector<384x64xf32>, vector<64x64xf32>, vector<384x64xf32> -> vector<384x64xf32>
      %c0_32 = arith.constant 0 : index
      %c0_33 = arith.constant 0 : index
      %c0_34 = arith.constant 0 : index
      %74 = vector.load %arg7[%c0_32, %c0_33, %c0_34] : memref<1x1x64xf32, #tpu.memory_space<vmem>>, vector<1x1x64xf32>
      %75 = vector.shape_cast %74 : vector<1x1x64xf32> to vector<1x64xf32>
      %76 = vector.broadcast %75 : vector<1x64xf32> to vector<384x64xf32>
      %77 = arith.addf %73, %76 : vector<384x64xf32>
      %c0_35 = arith.constant 0 : index
      %c0_36 = arith.constant 0 : index
      %78 = vector.load %arg10[%c0_35, %c0_36] : memref<384x64xf32, #tpu.memory_space<vmem>>, vector<384x64xf32>
      tpu.vector_store %arg10[%c0_35, %c0_36], %77 {strides = array<i32>} : memref<384x64xf32, #tpu.memory_space<vmem>>, vector<384x64xf32>,
    } else {
    }
    %c7_i32_24 = arith.constant 7 : i32
    %65 = arith.cmpi eq, %arg2, %c7_i32_24 : i32
    %c1_i32 = arith.constant 1 : i32
    %66 = arith.cmpi eq, %arg1, %c1_i32 : i32
    %67 = arith.andi %65, %66 : i1
    %68 = arith.extui %67 : i1 to i32
    %c0_i32_25 = arith.constant 0 : i32
    %69 = arith.cmpi ne, %68, %c0_i32_25 : i32
    scf.if %69 {
      %c0_26 = arith.constant 0 : index
      %c0_27 = arith.constant 0 : index
      %70 = vector.load %arg10[%c0_26, %c0_27] : memref<384x64xf32, #tpu.memory_space<vmem>>, vector<384x64xf32>
      %c0_28 = arith.constant 0 : index
      %c0_29 = arith.constant 0 : index
      %c0_30 = arith.constant 0 : index
      %71 = vector.load %arg9[%c0_28, %c0_29, %c0_30] : memref<1x384x64xf32, #tpu.memory_space<vmem>>, vector<1x384x64xf32>
      %72 = vector.shape_cast %71 : vector<1x384x64xf32> to vector<384x64xf32>
      %73 = vector.shape_cast %70 : vector<384x64xf32> to vector<1x384x64xf32>
      tpu.vector_store %arg9[%c0_28, %c0_29, %c0_30], %73 {strides = array<i32>} : memref<1x384x64xf32, #tpu.memory_space<vmem>>, vector<1x384x64xf32>,
    } else {
    }
    return
  }
  func.func @transform_0(%arg0: i32, %arg1: i32, %arg2: i32) -> (i32, i32, i32) {
    %c0_i32 = arith.constant 0 : i32
    %c0_i32_0 = arith.constant 0 : i32
    %c0_i32_1 = arith.constant 0 : i32
    return %arg0, %c0_i32, %c0_i32_0 : i32, i32, i32
  }
  func.func @transform_1(%arg0: i32, %arg1: i32, %arg2: i32) -> (i32, i32, i32) {
    %c0_i32 = arith.constant 0 : i32
    %c0_i32_0 = arith.constant 0 : i32
    %c0_i32_1 = arith.constant 0 : i32
    return %arg1, %c0_i32, %c0_i32_0 : i32, i32, i32
  }
  func.func @transform_2(%arg0: i32, %arg1: i32, %arg2: i32) -> (i32, i32, i32) {
    %c0_i32 = arith.constant 0 : i32
    %c0_i32_0 = arith.constant 0 : i32
    %c0_i32_1 = arith.constant 0 : i32
    return %arg1, %c0_i32, %c0_i32_0 : i32, i32, i32
  }
  func.func @transform_3(%arg0: i32, %arg1: i32, %arg2: i32) -> (i32, i32, i32) {
    %c0_i32 = arith.constant 0 : i32
    %c0_i32_0 = arith.constant 0 : i32
    %c0_i32_1 = arith.constant 0 : i32
    return %arg1, %c0_i32, %c0_i32_0 : i32, i32, i32
  }
  func.func @transform_4(%arg0: i32, %arg1: i32, %arg2: i32) -> (i32, i32, i32) {
    %c0_i32 = arith.constant 0 : i32
    %c0_i32_0 = arith.constant 0 : i32
    %c0_i32_1 = arith.constant 0 : i32
    return %arg1, %c0_i32, %c0_i32_0 : i32, i32, i32
  }
  func.func @transform_5(%arg0: i32, %arg1: i32, %arg2: i32) -> (i32, i32, i32, i32) {
    %c0_i32 = arith.constant 0 : i32
    %c0_i32_0 = arith.constant 0 : i32
    %c0_i32_1 = arith.constant 0 : i32
    return %arg1, %arg2, %c0_i32, %c0_i32_0 : i32, i32, i32, i32
  }
  func.func @transform_6(%arg0: i32, %arg1: i32, %arg2: i32) -> (i32, i32, i32) {
    %c0_i32 = arith.constant 0 : i32
    %c0_i32_0 = arith.constant 0 : i32
    %c0_i32_1 = arith.constant 0 : i32
    return %arg0, %c0_i32, %c0_i32_0 : i32, i32, i32
  }
}

</mosaic_0001>

<llo_original>
// kernel: tpu_custom_call.1
$region0: #{tpu_custom_call.1}
  #allocation0 [shape = 'u32[]', space=smem, size = 0x4, offset = 0x4, fixed_abs, tag = 'smem constant byte address 0x4 - core index']
  #allocation1 [shape = 'u32[144,128]{1,0:T(1,128)}', space=vmem, size = 0x12000, scoped, tag = 'internal scratch']
  #allocation2 [shape = 'f32[384,64]{1,0:T(8,128)}', space=vmem, size = 0x30000, scoped, tag = 'scratch operand']
  #allocation3 [shape = 'bf16[384,64]{1,0:T(16,128)(2,1)}', space=vmem, size = 0x18000, scoped, tag = 'scratch operand']
  #allocation4 [shape = 'bf16[384,64]{1,0:T(16,128)(2,1)}', space=vmem, size = 0x18000, scoped, tag = 'scratch operand']
  #allocation5 [shape = 'bf16[384,128]{1,0:T(16,128)(2,1)}', space=vmem, size = 0x18000, scoped, tag = 'scratch operand']
  #allocation6 [shape = 'f32[384,64]{1,0:T(8,128)}', space=vmem, size = 0x30000, scoped, tag = 'scratch operand']
  %s0 = inlined_call_operand.vmem [shape: f32[2,384,64], index: 0, kind: input, shape index: {}]
  %s1 = inlined_call_operand.hbm [shape: f32[2,64,192], index: 1, kind: input, shape index: {}]
  %s2 = inlined_call_operand.hbm [shape: f32[2,1,192], index: 2, kind: input, shape index: {}]
  %s3 = inlined_call_operand.hbm [shape: f32[2,64,64], index: 3, kind: input, shape index: {}]
  %s4 = inlined_call_operand.hbm [shape: f32[2,1,64], index: 4, kind: input, shape index: {}]
  %s5 = inlined_call_operand.hbm [shape: bf16[2,8,384,384], index: 5, kind: input, shape index: {}]
  %s6 = inlined_call_operand.vmem [shape: f32[2,384,64], index: 6, kind: output, shape index: {}]
  %s7 = sld [smem:[#allocation0]]
  $region101: #{tpu_custom_call.1} parent=0
    _
  %s9 = ssub.s32 1, %s7
  %s10 = scalar_select 0, %s9, %s7
  $region1: #{tpu_custom_call.1} parent=0
    #allocation7 [shape = 'u8[131072]{0}', space=vmem, size = 0x20000, scoped, tag = 'input window, operand 1']
    #allocation8 [shape = 's32[2]{0}', space=sflag, size = 0x8, scoped, tag = 'scoped memory for tpu_custom_call.1']
    #allocation9 [shape = 'u8[2048]{0}', space=vmem, size = 0x800, scoped, tag = 'input window, operand 2']
    #allocation10 [shape = 's32[2]{0}', space=sflag, size = 0x8, scoped, tag = 'scoped memory for tpu_custom_call.1']
    #allocation11 [shape = 'u8[65536]{0}', space=vmem, size = 0x10000, scoped, tag = 'input window, operand 3']
    #allocation12 [shape = 'u8[1024]{0}', space=vmem, size = 0x400, scoped, tag = 'input window, operand 4']
    #allocation13 [shape = 's32[2]{0}', space=sflag, size = 0x8, scoped, tag = 'scoped memory for tpu_custom_call.1']
    #allocation14 [shape = 'u8[589824]{0}', space=vmem, size = 0x90000, scoped, tag = 'input window, operand 5']
    %11 = vsyncpa [#allocation8], 0
    %s12 = scalar_lea.sflag [#allocation8], 1
    %13 = vsyncpa %s12, 0
    %14 = vsyncpa [#allocation10], 0
    %s15 = scalar_lea.sflag [#allocation10], 1
    %16 = vsyncpa %s15, 0
    %17 = vsyncpa [#allocation13], 0
    %s18 = scalar_lea.sflag [#allocation13], 1
    %19 = vsyncpa %s18, 0
    loop: start=0, step=1, limit=34
    $region2: #{tpu_custom_call.1} parent=1 // loop_pre_header
      _
    $region3: #{tpu_custom_call.1} parent=1 // loop_header
      %s21 = sphi 0, %s25
      %p22 = scmp.ge.s32.totalorder %s21, 34
      %s28 = sphi 0, %s47
      %s29 = sphi 0, %s43
      %s30 = sphi 0, %s39
      %s31 = sphi 0, %s28
      %s32 = sphi 0, %s29
      %s33 = sphi 0, %s30
      %s34 = sphi 0, %s31
      %s35 = sphi 0, %s32
      %s36 = sphi 0, %s33
      %s50 = sphi 0, %s52
      %s53 = sphi 0, %s50
      %s54 = sphi 0, %s53
      %s70 = sphi 0, %s54
      %s76 = sphi 0, %s78
      %s79 = sphi 0, %s76
      %s80 = sphi 0, %s79
      %s96 = sphi 0, %s80
      %s102 = sphi 0, %s104
      %s105 = sphi 0, %s102
      %s106 = sphi 0, %s105
      %s122 = sphi 0, %s106
      %s128 = sphi 0, %s130
      %s131 = sphi 0, %s128
      %s132 = sphi 0, %s131
      %s148 = sphi 0, %s132
      %s154 = sphi 0, %s156
      %s157 = sphi 0, %s154
      %s158 = sphi 0, %s157
      %s174 = sphi 0, %s158
      %s182 = sphi 0, %s184
      %s185 = sphi 0, %s182
      %s186 = sphi 0, %s185
      %s202 = sphi 0, %s186
      %s208 = sphi 0, %s210
      %s211 = sphi 0, %s208
      %s212 = sphi 0, %s211
      %s228 = sphi 0, %s212
    $region4: #{tpu_custom_call.1} parent=1 // loop_header_branch
      %24 = sbr.rel (%p22) target = $region8
    $region5: #{tpu_custom_call.1} parent=1 // loop_body
      %s26 = ssub.s32 %s21, 1
      %s27 = ssub.s32 %s21, 2
      %s37 = sadd.s32 1, %s30
      %p38 = scmp.ge.s32.totalorder %s37, 8
      %s39 = scalar_select %p38, 0, %s37
      %s40 = sadd.s32 1, %s29
      %s41 = scalar_select %p38, %s40, %s29
      %p42 = scmp.ge.s32.totalorder %s41, 2
      %s43 = scalar_select %p42, 0, %s41
      %s44 = sadd.s32 1, %s28
      %s45 = scalar_select %p42, %s44, %s28
      %p46 = scmp.ge.s32.totalorder %s45, 2
      %s47 = scalar_select %p46, 0, %s45
      %s48 = ssub.s32 %s28, %s47
      %p49 = scmp.eq.s32.totalorder %s48, 0
      %s51 = sadd.s32 %s50, 1
      %s52 = scalar_select %p49, %s50, %s51
      %p55 = pneg %p49
      %p56 = scmp.eq.s32.totalorder %s21, 31
      %p57 = por %p55, %p56
      %p58 = scmp.ne.s32.totalorder %s50, %s53
      %p59 = scmp.eq.s32.totalorder %s21, 0
      %p60 = por %p58, %p59
      %p61 = scmp.ne.s32.totalorder %s50, %s53
      %p62 = scmp.eq.s32.totalorder %s26, 31
      %p63 = por %p61, %p62
      %p64 = scmp.ne.s32.totalorder %s53, %s54
      %p65 = scmp.eq.s32.totalorder %s26, 0
      %p66 = por %p64, %p65
      %p67 = scmp.ne.s32.totalorder %s53, %s54
      %p68 = scmp.eq.s32.totalorder %s27, 31
      %p69 = por %p67, %p68
      %p71 = scmp.ne.s32.totalorder %s54, %s70
      %p72 = scmp.eq.s32.totalorder %s27, 0
      %p73 = por %p71, %p72
      %s74 = ssub.s32 %s29, %s43
      %p75 = scmp.eq.s32.totalorder %s74, 0
      %s77 = sadd.s32 %s76, 1
      %s78 = scalar_select %p75, %s76, %s77
      %p81 = pneg %p75
      %p82 = scmp.eq.s32.totalorder %s21, 31
      %p83 = por %p81, %p82
      %p84 = scmp.ne.s32.totalorder %s76, %s79
      %p85 = scmp.eq.s32.totalorder %s21, 0
      %p86 = por %p84, %p85
      %p87 = scmp.ne.s32.totalorder %s76, %s79
      %p88 = scmp.eq.s32.totalorder %s26, 31
      %p89 = por %p87, %p88
      %p90 = scmp.ne.s32.totalorder %s79, %s80
      %p91 = scmp.eq.s32.totalorder %s26, 0
      %p92 = por %p90, %p91
      %p93 = scmp.ne.s32.totalorder %s79, %s80
      %p94 = scmp.eq.s32.totalorder %s27, 31
      %p95 = por %p93, %p94
      %p97 = scmp.ne.s32.totalorder %s80, %s96
      %p98 = scmp.eq.s32.totalorder %s27, 0
      %p99 = por %p97, %p98
      %s100 = ssub.s32 %s29, %s43
      %p101 = scmp.eq.s32.totalorder %s100, 0
      %s103 = sadd.s32 %s102, 1
      %s104 = scalar_select %p101, %s102, %s103
      %p107 = pneg %p101
      %p108 = scmp.eq.s32.totalorder %s21, 31
      %p109 = por %p107, %p108
      %p110 = scmp.ne.s32.totalorder %s102, %s105
      %p111 = scmp.eq.s32.totalorder %s21, 0
      %p112 = por %p110, %p111
      %p113 = scmp.ne.s32.totalorder %s102, %s105
      %p114 = scmp.eq.s32.totalorder %s26, 31
      %p115 = por %p113, %p114
      %p116 = scmp.ne.s32.totalorder %s105, %s106
      %p117 = scmp.eq.s32.totalorder %s26, 0
      %p118 = por %p116, %p117
      %p119 = scmp.ne.s32.totalorder %s105, %s106
      %p120 = scmp.eq.s32.totalorder %s27, 31
      %p121 = por %p119, %p120
      %p123 = scmp.ne.s32.totalorder %s106, %s122
      %p124 = scmp.eq.s32.totalorder %s27, 0
      %p125 = por %p123, %p124
      %s126 = ssub.s32 %s29, %s43
      %p127 = scmp.eq.s32.totalorder %s126, 0
      %s129 = sadd.s32 %s128, 1
      %s130 = scalar_select %p127, %s128, %s129
      %p133 = pneg %p127
      %p134 = scmp.eq.s32.totalorder %s21, 31
      %p135 = por %p133, %p134
      %p136 = scmp.ne.s32.totalorder %s128, %s131
      %p137 = scmp.eq.s32.totalorder %s21, 0
      %p138 = por %p136, %p137
      %p139 = scmp.ne.s32.totalorder %s128, %s131
      %p140 = scmp.eq.s32.totalorder %s26, 31
      %p141 = por %p139, %p140
      %p142 = scmp.ne.s32.totalorder %s131, %s132
      %p143 = scmp.eq.s32.totalorder %s26, 0
      %p144 = por %p142, %p143
      %p145 = scmp.ne.s32.totalorder %s131, %s132
      %p146 = scmp.eq.s32.totalorder %s27, 31
      %p147 = por %p145, %p146
      %p149 = scmp.ne.s32.totalorder %s132, %s148
      %p150 = scmp.eq.s32.totalorder %s27, 0
      %p151 = por %p149, %p150
      %s152 = ssub.s32 %s29, %s43
      %p153 = scmp.eq.s32.totalorder %s152, 0
      %s155 = sadd.s32 %s154, 1
      %s156 = scalar_select %p153, %s154, %s155
      %p159 = pneg %p153
      %p160 = scmp.eq.s32.totalorder %s21, 31
      %p161 = por %p159, %p160
      %p162 = scmp.ne.s32.totalorder %s154, %s157
      %p163 = scmp.eq.s32.totalorder %s21, 0
      %p164 = por %p162, %p163
      %p165 = scmp.ne.s32.totalorder %s154, %s157
      %p166 = scmp.eq.s32.totalorder %s26, 31
      %p167 = por %p165, %p166
      %p168 = scmp.ne.s32.totalorder %s157, %s158
      %p169 = scmp.eq.s32.totalorder %s26, 0
      %p170 = por %p168, %p169
      %p171 = scmp.ne.s32.totalorder %s157, %s158
      %p172 = scmp.eq.s32.totalorder %s27, 31
      %p173 = por %p171, %p172
      %p175 = scmp.ne.s32.totalorder %s158, %s174
      %p176 = scmp.eq.s32.totalorder %s27, 0
      %p177 = por %p175, %p176
      %s178 = ssub.s32 %s29, %s43
      %s179 = ssub.s32 %s30, %s39
      %s180 = sor.u32 %s178, %s179
      %p181 = scmp.eq.s32.totalorder %s180, 0
      %s183 = sadd.s32 %s182, 1
      %s184 = scalar_select %p181, %s182, %s183
      %p187 = pneg %p181
      %p188 = scmp.eq.s32.totalorder %s21, 31
      %p189 = por %p187, %p188
      %p190 = scmp.ne.s32.totalorder %s182, %s185
      %p191 = scmp.eq.s32.totalorder %s21, 0
      %p192 = por %p190, %p191
      %p193 = scmp.ne.s32.totalorder %s182, %s185
      %p194 = scmp.eq.s32.totalorder %s26, 31
      %p195 = por %p193, %p194
      %p196 = scmp.ne.s32.totalorder %s185, %s186
      %p197 = scmp.eq.s32.totalorder %s26, 0
      %p198 = por %p196, %p197
      %p199 = scmp.ne.s32.totalorder %s185, %s186
      %p200 = scmp.eq.s32.totalorder %s27, 31
      %p201 = por %p199, %p200
      %p203 = scmp.ne.s32.totalorder %s186, %s202
      %p204 = scmp.eq.s32.totalorder %s27, 0
      %p205 = por %p203, %p204
      %s206 = ssub.s32 %s28, %s47
      %p207 = scmp.eq.s32.totalorder %s206, 0
      %s209 = sadd.s32 %s208, 1
      %s210 = scalar_select %p207, %s208, %s209
      %p213 = pneg %p207
      %p214 = scmp.eq.s32.totalorder %s21, 31
      %p215 = por %p213, %p214
      %p216 = scmp.ne.s32.totalorder %s208, %s211
      %p217 = scmp.eq.s32.totalorder %s21, 0
      %p218 = por %p216, %p217
      %p219 = scmp.ne.s32.totalorder %s208, %s211
      %p220 = scmp.eq.s32.totalorder %s26, 31
      %p221 = por %p219, %p220
      %p222 = scmp.ne.s32.totalorder %s211, %s212
      %p223 = scmp.eq.s32.totalorder %s26, 0
      %p224 = por %p222, %p223
      %p225 = scmp.ne.s32.totalorder %s211, %s212
      %p226 = scmp.eq.s32.totalorder %s27, 31
      %p227 = por %p225, %p226
      %p229 = scmp.ne.s32.totalorder %s212, %s228
      %p230 = scmp.eq.s32.totalorder %s27, 0
      %p231 = por %p229, %p230
      %p232 = scmp.le.s32.totalorder 1, %s21
      %p233 = scmp.lt.s32.totalorder %s21, 33
      %p234 = pnand %p232, %p233
      %p235 = pneg %p234
      // Predicated region
      $region9: #{tpu_custom_call.1} parent=5 // pred_check
        _
      $region10: #{tpu_custom_call.1} parent=5 // pred_check_branch
        %237 = sbr.rel (%p234) target = $region12
      $region11: #{tpu_custom_call.1} parent=5 // pred_region
        %s238 = ssub.s32 %s21, 1
      $region12: #{tpu_custom_call.1} parent=5 // pred_fallthru
        _
      %p239 = scmp.lt.s32.totalorder %s21, 32
      // Predicated region
      $region13: #{tpu_custom_call.1} parent=5 // pred_check
        %p240 = pneg %p239
      $region14: #{tpu_custom_call.1} parent=5 // pred_check_branch
        %242 = sbr.rel (%p240) target = $region16
      $region15: #{tpu_custom_call.1} parent=5 // pred_region
        // Predicated region
        $region17: #{tpu_custom_call.1} parent=15 // pred_check
          %p243 = pneg %p60
        $region18: #{tpu_custom_call.1} parent=15 // pred_check_branch
          %245 = sbr.rel (%p243) target = $region20
        $region19: #{tpu_custom_call.1} parent=15 // pred_region
          %p246 = scmp.lt.s32.totalorder %s28, 1
          %s247 = scalar_select %p246, %s28, 1
          %s248 = smul.addr %s247, 48
          %s249 = smul.addr %s248, 8
          %s250 = scalar_lea.vmem %s0, %s249
        $region20: #{tpu_custom_call.1} parent=15 // pred_fallthru
          _
        // Predicated region
        $region21: #{tpu_custom_call.1} parent=15 // pred_check
          %p251 = pneg %p86
        $region22: #{tpu_custom_call.1} parent=15 // pred_check_branch
          %253 = sbr.rel (%p251) target = $region24
        $region23: #{tpu_custom_call.1} parent=15 // pred_region
          %s254 = sand.u32 %s76, 1
          %s255 = scalar_lea.sflag [#allocation8], %s254
          %s256 = sand.u32 %s76, 1
          %s257 = smul.addr %s256, 128
          %s258 = scalar_lea.vmem [#allocation7], %s257
          %s260 = ssub.s32 2048, 2048
          %261 = vsyncadd %s255, %s260
          %s262 = smul.addr %s29, 16
          %s263 = smul.addr %s262, 128
          %s264 = scalar_lea.hbm %s1, %s263
          %s265 = sshll.u32 %s258, 4
          %s266 = int_to_ptr.vmem [resolvable:$true] %s265
          %271 = dma.hbm_to_vmem [thread:$0]  %s264, 2048, %s266, %s255, 256, 256, 16
        $region24: #{tpu_custom_call.1} parent=15 // pred_fallthru
          _
        // Predicated region
        $region25: #{tpu_custom_call.1} parent=15 // pred_check
          %p272 = pneg %p112
        $region26: #{tpu_custom_call.1} parent=15 // pred_check_branch
          %274 = sbr.rel (%p272) target = $region28
        $region27: #{tpu_custom_call.1} parent=15 // pred_region
          %s275 = sand.u32 %s21, 1
          %s276 = scalar_lea.sflag [#allocation10], %s275
          %s277 = sand.u32 %s102, 1
          %s278 = smul.addr %s277, 2
          %s279 = scalar_lea.vmem [#allocation9], %s278
          %s281 = ssub.s32 32, 32
          %282 = vsyncadd %s276, %s281
          %s283 = smul.addr %s29, 2
          %s284 = smul.addr %s283, 16
          %s285 = scalar_lea.hbm %s2, %s284
          %s287 = sshll.u32 %s279, 4
          %s288 = int_to_ptr.vmem [resolvable:$true] %s287
          %290 = dma.hbm_to_vmem [thread:$0]  %s285, 32, %s288, %s276
        $region28: #{tpu_custom_call.1} parent=15 // pred_fallthru
          _
        // Predicated region
        $region29: #{tpu_custom_call.1} parent=15 // pred_check
          %p291 = pneg %p138
        $region30: #{tpu_custom_call.1} parent=15 // pred_check_branch
          %293 = sbr.rel (%p291) target = $region32
        $region31: #{tpu_custom_call.1} parent=15 // pred_region
          %s294 = sand.u32 %s21, 1
          %s295 = scalar_lea.sflag [#allocation10], %s294
          %s296 = sand.u32 %s128, 1
          %s297 = smul.addr %s296, 64
          %s298 = scalar_lea.vmem [#allocation11], %s297
          %s300 = ssub.s32 1024, 1024
          %301 = vsyncadd %s295, %s300
          %s302 = smul.addr %s29, 8
          %s303 = smul.addr %s302, 128
          %s304 = scalar_lea.hbm %s3, %s303
          %s305 = sshll.u32 %s298, 4
          %s306 = int_to_ptr.vmem [resolvable:$true] %s305
          %311 = dma.hbm_to_vmem [thread:$0]  %s304, 1024, %s306, %s295, 128, 128, 8
        $region32: #{tpu_custom_call.1} parent=15 // pred_fallthru
          _
        // Predicated region
        $region33: #{tpu_custom_call.1} parent=15 // pred_check
          %p312 = pneg %p164
        $region34: #{tpu_custom_call.1} parent=15 // pred_check_branch
          %314 = sbr.rel (%p312) target = $region36
        $region35: #{tpu_custom_call.1} parent=15 // pred_region
          %s315 = sand.u32 %s21, 1
          %s316 = scalar_lea.sflag [#allocation13], %s315
          %s317 = sand.u32 %s154, 1
          %s318 = scalar_lea.vmem [#allocation12], %s317
          %s320 = ssub.s32 16, 16
          %321 = vsyncadd %s316, %s320
          %s322 = smul.addr %s29, 16
          %s323 = scalar_lea.hbm %s4, %s322
          %s325 = sshll.u32 %s318, 4
          %s326 = int_to_ptr.vmem [resolvable:$true] %s325
          %328 = dma.hbm_to_vmem [thread:$0]  %s323, 16, %s326, %s316
        $region36: #{tpu_custom_call.1} parent=15 // pred_fallthru
          _
        // Predicated region
        $region37: #{tpu_custom_call.1} parent=15 // pred_check
          %p329 = pneg %p192
        $region38: #{tpu_custom_call.1} parent=15 // pred_check_branch
          %331 = sbr.rel (%p329) target = $region40
        $region39: #{tpu_custom_call.1} parent=15 // pred_region
          %s332 = sand.u32 %s21, 1
          %s333 = scalar_lea.sflag [#allocation13], %s332
          %s334 = sand.u32 %s182, 1
          %s335 = smul.addr %s334, 576
          %s336 = scalar_lea.vmem [#allocation14], %s335
          %s338 = ssub.s32 9216, 9216
          %339 = vsyncadd %s333, %s338
          %s340 = smul.addr %s30, 144
          %s341 = smul.addr %s29, 1152
          %s342 = sadd.s32 %s340, %s341
          %s343 = smul.addr %s342, 64
          %s344 = scalar_lea.hbm %s5, %s343
          %s345 = sshll.u32 %s336, 4
          %s346 = int_to_ptr.vmem [resolvable:$true] %s345
          %351 = dma.hbm_to_vmem [thread:$0]  %s344, 9216, %s346, %s333, 192, 192, 12
        $region40: #{tpu_custom_call.1} parent=15 // pred_fallthru
          _
      $region16: #{tpu_custom_call.1} parent=5 // pred_fallthru
        _
      %p352 = scmp.le.s32.totalorder 1, %s21
      %p353 = scmp.lt.s32.totalorder %s21, 33
      %p354 = pnand %p352, %p353
      %p355 = pneg %p354
      // Predicated region
      $region41: #{tpu_custom_call.1} parent=5 // pred_check
        _
      $region42: #{tpu_custom_call.1} parent=5 // pred_check_branch
        %357 = sbr.rel (%p354) target = $region44
      $region43: #{tpu_custom_call.1} parent=5 // pred_region
        %s358 = ssub.s32 %s21, 1
        %s359 = sand.u32 %s79, 1
        %s360 = scalar_lea.sflag [#allocation8], %s359
        %s361 = sand.u32 %s79, 1
        %s362 = smul.addr %s361, 128
        %s363 = scalar_lea.vmem [#allocation7], %s362
        // Predicated region
        $region45: #{tpu_custom_call.1} parent=43 // pred_check
          %p364 = pneg %p92
        $region46: #{tpu_custom_call.1} parent=43 // pred_check_branch
          %366 = sbr.rel (%p364) target = $region48
        $region47: #{tpu_custom_call.1} parent=43 // pred_region
          %367 = dma.done %s360, 2048
        $region48: #{tpu_custom_call.1} parent=43 // pred_fallthru
          _
        %s368 = sand.u32 %s26, 1
        %s369 = scalar_lea.sflag [#allocation10], %s368
        %s370 = sand.u32 %s105, 1
        %s371 = smul.addr %s370, 2
        %s372 = scalar_lea.vmem [#allocation9], %s371
        // Predicated region
        $region49: #{tpu_custom_call.1} parent=43 // pred_check
          %p373 = pneg %p118
        $region50: #{tpu_custom_call.1} parent=43 // pred_check_branch
          %375 = sbr.rel (%p373) target = $region52
        $region51: #{tpu_custom_call.1} parent=43 // pred_region
          %376 = dma.done %s369, 32
        $region52: #{tpu_custom_call.1} parent=43 // pred_fallthru
          _
        %s377 = sand.u32 %s26, 1
        %s378 = scalar_lea.sflag [#allocation10], %s377
        %s379 = sand.u32 %s131, 1
        %s380 = smul.addr %s379, 64
        %s381 = scalar_lea.vmem [#allocation11], %s380
        // Predicated region
        $region53: #{tpu_custom_call.1} parent=43 // pred_check
          %p382 = pneg %p144
        $region54: #{tpu_custom_call.1} parent=43 // pred_check_branch
          %384 = sbr.rel (%p382) target = $region56
        $region55: #{tpu_custom_call.1} parent=43 // pred_region
          %385 = dma.done %s378, 1024
        $region56: #{tpu_custom_call.1} parent=43 // pred_fallthru
          _
        %s386 = sand.u32 %s26, 1
        %s387 = scalar_lea.sflag [#allocation13], %s386
        %s388 = sand.u32 %s157, 1
        %s389 = scalar_lea.vmem [#allocation12], %s388
        // Predicated region
        $region57: #{tpu_custom_call.1} parent=43 // pred_check
          %p390 = pneg %p170
        $region58: #{tpu_custom_call.1} parent=43 // pred_check_branch
          %392 = sbr.rel (%p390) target = $region60
        $region59: #{tpu_custom_call.1} parent=43 // pred_region
          %393 = dma.done %s387, 16
        $region60: #{tpu_custom_call.1} parent=43 // pred_fallthru
          _
        %s394 = sand.u32 %s26, 1
        %s395 = scalar_lea.sflag [#allocation13], %s394
        %s396 = sand.u32 %s185, 1
        %s397 = smul.addr %s396, 576
        %s398 = scalar_lea.vmem [#allocation14], %s397
        // Predicated region
        $region61: #{tpu_custom_call.1} parent=43 // pred_check
          %p399 = pneg %p198
        $region62: #{tpu_custom_call.1} parent=43 // pred_check_branch
          %401 = sbr.rel (%p399) target = $region64
        $region63: #{tpu_custom_call.1} parent=43 // pred_region
          %402 = dma.done %s395, 9216
        $region64: #{tpu_custom_call.1} parent=43 // pred_fallthru
          _
        %p403 = scmp.lt.s32.totalorder %s31, 1
        %s404 = scalar_select %p403, %s31, 1
        %s405 = smul.addr %s404, 48
        %s406 = smul.addr %s405, 8
        %s407 = scalar_lea.vmem %s0, %s406
        %p408 = pneg %p66
        %p409 = pneg %p63
        %s410 = sand.u32 %s79, 1
        %s411 = scalar_lea.sflag [#allocation8], %s410
        %s412 = sand.u32 %s79, 1
        %s413 = smul.addr %s412, 128
        %s414 = scalar_lea.vmem [#allocation7], %s413
        %p415 = pneg %p92
        %p416 = pneg %p89
        %s417 = sand.u32 %s26, 1
        %s418 = scalar_lea.sflag [#allocation10], %s417
        %s419 = sand.u32 %s105, 1
        %s420 = smul.addr %s419, 2
        %s421 = scalar_lea.vmem [#allocation9], %s420
        %p422 = pneg %p118
        %p423 = pneg %p115
        %s424 = sand.u32 %s26, 1
        %s425 = scalar_lea.sflag [#allocation10], %s424
        %s426 = sand.u32 %s131, 1
        %s427 = smul.addr %s426, 64
        %s428 = scalar_lea.vmem [#allocation11], %s427
        %p429 = pneg %p144
        %p430 = pneg %p141
        %s431 = sand.u32 %s26, 1
        %s432 = scalar_lea.sflag [#allocation13], %s431
        %s433 = sand.u32 %s157, 1
        %s434 = scalar_lea.vmem [#allocation12], %s433
        %p435 = pneg %p170
        %p436 = pneg %p167
        %s437 = sand.u32 %s26, 1
        %s438 = scalar_lea.sflag [#allocation13], %s437
        %s439 = sand.u32 %s185, 1
        %s440 = smul.addr %s439, 576
        %s441 = scalar_lea.vmem [#allocation14], %s440
        %p442 = pneg %p198
        %p443 = pneg %p195
        %p444 = pneg %p224
        %p445 = pneg %p221
        %p446 = scmp.lt.s32.totalorder %s31, 1
        %s447 = scalar_select %p446, %s31, 1
        %s448 = smul.addr %s447, 48
        %s449 = smul.addr %s448, 8
        %s450 = scalar_lea.vmem %s6, %s449
        %p451 = scmp.lt.s32.totalorder %s31, 1
        %s452 = scalar_select %p451, %s31, 1
        %s453 = smul.addr %s452, 48
        %s454 = smul.addr %s453, 8
        %s455 = scalar_lea.vmem %s0, %s454
        %p456 = scmp.lt.s32.totalorder %s31, 1
        %s457 = scalar_select %p456, %s31, 1
        %s458 = smul.addr %s457, 48
        %s459 = smul.addr %s458, 8
        %s460 = scalar_lea.vmem %s6, %s459
        %p465 = scmp.eq.s32.totalorder %s32, 0
        %p466 = scmp.eq.s32.totalorder %s33, 0
        %p467 = pnand %p465, %p466
        %p468 = pneg %p467
        // Predicated region
        $region65: #{tpu_custom_call.1} parent=43 // pred_check
          _
        $region66: #{tpu_custom_call.1} parent=43 // pred_check_branch
          %470 = sbr.rel (%p467) target = $region68
        $region67: #{tpu_custom_call.1} parent=43 // pred_region
          %v471 = vld [vmem:[%s455] sm:$0xff]
          %v472 = vld [vmem:[%s455 + $0x8] sm:$0xff]
          %v473 = vld [vmem:[%s455 + $0x10] sm:$0xff]
          %v474 = vld [vmem:[%s455 + $0x18] sm:$0xff]
          %v475 = vld [vmem:[%s455 + $0x20] sm:$0xff]
          %v476 = vld [vmem:[%s455 + $0x28] sm:$0xff]
          %v477 = vld [vmem:[%s455 + $0x30] sm:$0xff]
          %v478 = vld [vmem:[%s455 + $0x38] sm:$0xff]
          %v479 = vld [vmem:[%s455 + $0x40] sm:$0xff]
          %v480 = vld [vmem:[%s455 + $0x48] sm:$0xff]
          %v481 = vld [vmem:[%s455 + $0x50] sm:$0xff]
          %v482 = vld [vmem:[%s455 + $0x58] sm:$0xff]
          %v483 = vld [vmem:[%s455 + $0x60] sm:$0xff]
          %v484 = vld [vmem:[%s455 + $0x68] sm:$0xff]
          %v485 = vld [vmem:[%s455 + $0x70] sm:$0xff]
          %v486 = vld [vmem:[%s455 + $0x78] sm:$0xff]
          %v487 = vld [vmem:[%s455 + $0x80] sm:$0xff]
          %v488 = vld [vmem:[%s455 + $0x88] sm:$0xff]
          %v489 = vld [vmem:[%s455 + $0x90] sm:$0xff]
          %v490 = vld [vmem:[%s455 + $0x98] sm:$0xff]
          %v491 = vld [vmem:[%s455 + $0xa0] sm:$0xff]
          %v492 = vld [vmem:[%s455 + $0xa8] sm:$0xff]
          %v493 = vld [vmem:[%s455 + $0xb0] sm:$0xff]
          %v494 = vld [vmem:[%s455 + $0xb8] sm:$0xff]
          %v495 = vld [vmem:[%s455 + $0xc0] sm:$0xff]
          %v496 = vld [vmem:[%s455 + $0xc8] sm:$0xff]
          %v497 = vld [vmem:[%s455 + $0xd0] sm:$0xff]
          %v498 = vld [vmem:[%s455 + $0xd8] sm:$0xff]
          %v499 = vld [vmem:[%s455 + $0xe0] sm:$0xff]
          %v500 = vld [vmem:[%s455 + $0xe8] sm:$0xff]
          %v501 = vld [vmem:[%s455 + $0xf0] sm:$0xff]
          %v502 = vld [vmem:[%s455 + $0xf8] sm:$0xff]
          %v503 = vld [vmem:[%s455 + $0x100] sm:$0xff]
          %v504 = vld [vmem:[%s455 + $0x108] sm:$0xff]
          %v505 = vld [vmem:[%s455 + $0x110] sm:$0xff]
          %v506 = vld [vmem:[%s455 + $0x118] sm:$0xff]
          %v507 = vld [vmem:[%s455 + $0x120] sm:$0xff]
          %v508 = vld [vmem:[%s455 + $0x128] sm:$0xff]
          %v509 = vld [vmem:[%s455 + $0x130] sm:$0xff]
          %v510 = vld [vmem:[%s455 + $0x138] sm:$0xff]
          %v511 = vld [vmem:[%s455 + $0x140] sm:$0xff]
          %v512 = vld [vmem:[%s455 + $0x148] sm:$0xff]
          %v513 = vld [vmem:[%s455 + $0x150] sm:$0xff]
          %v514 = vld [vmem:[%s455 + $0x158] sm:$0xff]
          %v515 = vld [vmem:[%s455 + $0x160] sm:$0xff]
          %v516 = vld [vmem:[%s455 + $0x168] sm:$0xff]
          %v517 = vld [vmem:[%s455 + $0x170] sm:$0xff]
          %v518 = vld [vmem:[%s455 + $0x178] sm:$0xff]
          %vm519 = vcmask 523264
          %520 = vst.msk [vmem:[#allocation2] sm:$0xff] %vm519, %v471
          %521 = vst.msk [vmem:[#allocation2 + $0x8] sm:$0xff] %vm519, %v472
          %522 = vst.msk [vmem:[#allocation2 + $0x10] sm:$0xff] %vm519, %v473
          %523 = vst.msk [vmem:[#allocation2 + $0x18] sm:$0xff] %vm519, %v474
          %524 = vst.msk [vmem:[#allocation2 + $0x20] sm:$0xff] %vm519, %v475
          %525 = vst.msk [vmem:[#allocation2 + $0x28] sm:$0xff] %vm519, %v476
          %526 = vst.msk [vmem:[#allocation2 + $0x30] sm:$0xff] %vm519, %v477
          %527 = vst.msk [vmem:[#allocation2 + $0x38] sm:$0xff] %vm519, %v478
          %528 = vst.msk [vmem:[#allocation2 + $0x40] sm:$0xff] %vm519, %v479
          %529 = vst.msk [vmem:[#allocation2 + $0x48] sm:$0xff] %vm519, %v480
          %530 = vst.msk [vmem:[#allocation2 + $0x50] sm:$0xff] %vm519, %v481
          %531 = vst.msk [vmem:[#allocation2 + $0x58] sm:$0xff] %vm519, %v482
          %532 = vst.msk [vmem:[#allocation2 + $0x60] sm:$0xff] %vm519, %v483
          %533 = vst.msk [vmem:[#allocation2 + $0x68] sm:$0xff] %vm519, %v484
          %534 = vst.msk [vmem:[#allocation2 + $0x70] sm:$0xff] %vm519, %v485
          %535 = vst.msk [vmem:[#allocation2 + $0x78] sm:$0xff] %vm519, %v486
          %536 = vst.msk [vmem:[#allocation2 + $0x80] sm:$0xff] %vm519, %v487
          %537 = vst.msk [vmem:[#allocation2 + $0x88] sm:$0xff] %vm519, %v488
          %538 = vst.msk [vmem:[#allocation2 + $0x90] sm:$0xff] %vm519, %v489
          %539 = vst.msk [vmem:[#allocation2 + $0x98] sm:$0xff] %vm519, %v490
          %540 = vst.msk [vmem:[#allocation2 + $0xa0] sm:$0xff] %vm519, %v491
          %541 = vst.msk [vmem:[#allocation2 + $0xa8] sm:$0xff] %vm519, %v492
          %542 = vst.msk [vmem:[#allocation2 + $0xb0] sm:$0xff] %vm519, %v493
          %543 = vst.msk [vmem:[#allocation2 + $0xb8] sm:$0xff] %vm519, %v494
          %544 = vst.msk [vmem:[#allocation2 + $0xc0] sm:$0xff] %vm519, %v495
          %545 = vst.msk [vmem:[#allocation2 + $0xc8] sm:$0xff] %vm519, %v496
          %546 = vst.msk [vmem:[#allocation2 + $0xd0] sm:$0xff] %vm519, %v497
          %547 = vst.msk [vmem:[#allocation2 + $0xd8] sm:$0xff] %vm519, %v498
          %548 = vst.msk [vmem:[#allocation2 + $0xe0] sm:$0xff] %vm519, %v499
          %549 = vst.msk [vmem:[#allocation2 + $0xe8] sm:$0xff] %vm519, %v500
          %550 = vst.msk [vmem:[#allocation2 + $0xf0] sm:$0xff] %vm519, %v501
          %551 = vst.msk [vmem:[#allocation2 + $0xf8] sm:$0xff] %vm519, %v502
          %552 = vst.msk [vmem:[#allocation2 + $0x100] sm:$0xff] %vm519, %v503
          %553 = vst.msk [vmem:[#allocation2 + $0x108] sm:$0xff] %vm519, %v504
          %554 = vst.msk [vmem:[#allocation2 + $0x110] sm:$0xff] %vm519, %v505
          %555 = vst.msk [vmem:[#allocation2 + $0x118] sm:$0xff] %vm519, %v506
          %556 = vst.msk [vmem:[#allocation2 + $0x120] sm:$0xff] %vm519, %v507
          %557 = vst.msk [vmem:[#allocation2 + $0x128] sm:$0xff] %vm519, %v508
          %558 = vst.msk [vmem:[#allocation2 + $0x130] sm:$0xff] %vm519, %v509
          %559 = vst.msk [vmem:[#allocation2 + $0x138] sm:$0xff] %vm519, %v510
          %560 = vst.msk [vmem:[#allocation2 + $0x140] sm:$0xff] %vm519, %v511
          %561 = vst.msk [vmem:[#allocation2 + $0x148] sm:$0xff] %vm519, %v512
          %562 = vst.msk [vmem:[#allocation2 + $0x150] sm:$0xff] %vm519, %v513
          %563 = vst.msk [vmem:[#allocation2 + $0x158] sm:$0xff] %vm519, %v514
          %564 = vst.msk [vmem:[#allocation2 + $0x160] sm:$0xff] %vm519, %v515
          %565 = vst.msk [vmem:[#allocation2 + $0x168] sm:$0xff] %vm519, %v516
          %566 = vst.msk [vmem:[#allocation2 + $0x170] sm:$0xff] %vm519, %v517
          %567 = vst.msk [vmem:[#allocation2 + $0x178] sm:$0xff] %vm519, %v518
        $region68: #{tpu_custom_call.1} parent=43 // pred_fallthru
          _
        // Predicated region
        $region69: #{tpu_custom_call.1} parent=43 // pred_check
          %p568 = pneg %p466
        $region70: #{tpu_custom_call.1} parent=43 // pred_check_branch
          %570 = sbr.rel (%p568) target = $region72
        $region71: #{tpu_custom_call.1} parent=43 // pred_region
          %v571 = vld [vmem:[#allocation2] sm:$0xff]
          %v572 = vld [vmem:[#allocation2 + $0x8] sm:$0xff]
          %v573 = vld [vmem:[#allocation2 + $0x10] sm:$0xff]
          %v574 = vld [vmem:[#allocation2 + $0x18] sm:$0xff]
          %v575 = vld [vmem:[#allocation2 + $0x20] sm:$0xff]
          %v576 = vld [vmem:[#allocation2 + $0x28] sm:$0xff]
          %v577 = vld [vmem:[#allocation2 + $0x30] sm:$0xff]
          %v578 = vld [vmem:[#allocation2 + $0x38] sm:$0xff]
          %v579 = vld [vmem:[#allocation2 + $0x40] sm:$0xff]
          %v580 = vld [vmem:[#allocation2 + $0x48] sm:$0xff]
          %v581 = vld [vmem:[#allocation2 + $0x50] sm:$0xff]
          %v582 = vld [vmem:[#allocation2 + $0x58] sm:$0xff]
          %v583 = vld [vmem:[#allocation2 + $0x60] sm:$0xff]
          %v584 = vld [vmem:[#allocation2 + $0x68] sm:$0xff]
          %v585 = vld [vmem:[#allocation2 + $0x70] sm:$0xff]
          %v586 = vld [vmem:[#allocation2 + $0x78] sm:$0xff]
          %v587 = vld [vmem:[#allocation2 + $0x80] sm:$0xff]
          %v588 = vld [vmem:[#allocation2 + $0x88] sm:$0xff]
          %v589 = vld [vmem:[#allocation2 + $0x90] sm:$0xff]
          %v590 = vld [vmem:[#allocation2 + $0x98] sm:$0xff]
          %v591 = vld [vmem:[#allocation2 + $0xa0] sm:$0xff]
          %v592 = vld [vmem:[#allocation2 + $0xa8] sm:$0xff]
          %v593 = vld [vmem:[#allocation2 + $0xb0] sm:$0xff]
          %v594 = vld [vmem:[#allocation2 + $0xb8] sm:$0xff]
          %v595 = vld [vmem:[#allocation2 + $0xc0] sm:$0xff]
          %v596 = vld [vmem:[#allocation2 + $0xc8] sm:$0xff]
          %v597 = vld [vmem:[#allocation2 + $0xd0] sm:$0xff]
          %v598 = vld [vmem:[#allocation2 + $0xd8] sm:$0xff]
          %v599 = vld [vmem:[#allocation2 + $0xe0] sm:$0xff]
          %v600 = vld [vmem:[#allocation2 + $0xe8] sm:$0xff]
          %v601 = vld [vmem:[#allocation2 + $0xf0] sm:$0xff]
          %v602 = vld [vmem:[#allocation2 + $0xf8] sm:$0xff]
          %v603 = vld [vmem:[#allocation2 + $0x100] sm:$0xff]
          %v604 = vld [vmem:[#allocation2 + $0x108] sm:$0xff]
          %v605 = vld [vmem:[#allocation2 + $0x110] sm:$0xff]
          %v606 = vld [vmem:[#allocation2 + $0x118] sm:$0xff]
          %v607 = vld [vmem:[#allocation2 + $0x120] sm:$0xff]
          %v608 = vld [vmem:[#allocation2 + $0x128] sm:$0xff]
          %v609 = vld [vmem:[#allocation2 + $0x130] sm:$0xff]
          %v610 = vld [vmem:[#allocation2 + $0x138] sm:$0xff]
          %v611 = vld [vmem:[#allocation2 + $0x140] sm:$0xff]
          %v612 = vld [vmem:[#allocation2 + $0x148] sm:$0xff]
          %v613 = vld [vmem:[#allocation2 + $0x150] sm:$0xff]
          %v614 = vld [vmem:[#allocation2 + $0x158] sm:$0xff]
          %v615 = vld [vmem:[#allocation2 + $0x160] sm:$0xff]
          %v616 = vld [vmem:[#allocation2 + $0x168] sm:$0xff]
          %v617 = vld [vmem:[#allocation2 + $0x170] sm:$0xff]
          %v618 = vld [vmem:[#allocation2 + $0x178] sm:$0xff]
          %v619 = vld [vmem:[%s363] sm:$0xff]
          %v620 = vld [vmem:[%s363 + $0x8] sm:$0xff]
          %v621 = vld [vmem:[%s363 + $0x10] sm:$0xff]
          %v622 = vld [vmem:[%s363 + $0x18] sm:$0xff]
          %v623 = vld [vmem:[%s363 + $0x20] sm:$0xff]
          %v624 = vld [vmem:[%s363 + $0x28] sm:$0xff]
          %v625 = vld [vmem:[%s363 + $0x30] sm:$0xff]
          %v626 = vld [vmem:[%s363 + $0x38] sm:$0xff]
          %v627 = vld [vmem:[%s363 + $0x40] sm:$0xff]
          %v628 = vld [vmem:[%s363 + $0x48] sm:$0xff]
          %v629 = vld [vmem:[%s363 + $0x50] sm:$0xff]
          %v630 = vld [vmem:[%s363 + $0x58] sm:$0xff]
          %v631 = vld [vmem:[%s363 + $0x60] sm:$0xff]
          %v632 = vld [vmem:[%s363 + $0x68] sm:$0xff]
          %v633 = vld [vmem:[%s363 + $0x70] sm:$0xff]
          %v634 = vld [vmem:[%s363 + $0x78] sm:$0xff]
          %v635 = vld [vmem:[%s372] sm:$0x3]
          %v637 = vlaneseq
          %v638 = vshrl.u32 %v637, 7
          %v639 = vsub.s32 0, %v638
          %v640 = vrot.slane %v635, %v639
          %v641 = vlaneseq
          %v642 = vshrl.u32 %v641, 7
          %v643 = vsub.s32 1, %v642
          %v644 = vrot.slane %v635, %v643
          %vm647 = vcmask 523264
          %v649 = vsel %vm647, %v571, 0
          %v652 = vsel %vm647, %v572, 0
          %v655 = vsel %vm647, %v573, 0
          %v658 = vsel %vm647, %v574, 0
          %v661 = vsel %vm647, %v575, 0
          %v664 = vsel %vm647, %v576, 0
          %v667 = vsel %vm647, %v577, 0
          %v670 = vsel %vm647, %v578, 0
          %v673 = vsel %vm647, %v579, 0
          %v676 = vsel %vm647, %v580, 0
          %v679 = vsel %vm647, %v581, 0
          %v682 = vsel %vm647, %v582, 0
          %v685 = vsel %vm647, %v583, 0
          %v688 = vsel %vm647, %v584, 0
          %v691 = vsel %vm647, %v585, 0
          %v694 = vsel %vm647, %v586, 0
          %v697 = vsel %vm647, %v587, 0
          %v700 = vsel %vm647, %v588, 0
          %v703 = vsel %vm647, %v589, 0
          %v706 = vsel %vm647, %v590, 0
          %v709 = vsel %vm647, %v591, 0
          %v712 = vsel %vm647, %v592, 0
          %v715 = vsel %vm647, %v593, 0
          %v718 = vsel %vm647, %v594, 0
          %v721 = vsel %vm647, %v595, 0
          %v724 = vsel %vm647, %v596, 0
          %v727 = vsel %vm647, %v597, 0
          %v730 = vsel %vm647, %v598, 0
          %v733 = vsel %vm647, %v599, 0
          %v736 = vsel %vm647, %v600, 0
          %v739 = vsel %vm647, %v601, 0
          %v742 = vsel %vm647, %v602, 0
          %v745 = vsel %vm647, %v603, 0
          %v748 = vsel %vm647, %v604, 0
          %v751 = vsel %vm647, %v605, 0
          %v754 = vsel %vm647, %v606, 0
          %v757 = vsel %vm647, %v607, 0
          %v760 = vsel %vm647, %v608, 0
          %v763 = vsel %vm647, %v609, 0
          %v766 = vsel %vm647, %v610, 0
          %v769 = vsel %vm647, %v611, 0
          %v772 = vsel %vm647, %v612, 0
          %v775 = vsel %vm647, %v613, 0
          %v778 = vsel %vm647, %v614, 0
          %v781 = vsel %vm647, %v615, 0
          %v784 = vsel %vm647, %v616, 0
          %v787 = vsel %vm647, %v617, 0
          %v790 = vsel %vm647, %v618, 0
          %792 = vmatprep.subr.mxu0 %v620
          %793 = vmatpush1.msra.mxu0 %v619
          %794 = vmatprep.subr.mxu0 %v622
          %795 = vmatpush1.msra.mxu0 %v621
          %796 = vmatprep.subr.mxu0 %v624
          %797 = vmatpush1.msra.mxu0 %v623
          %798 = vmatprep.subr.mxu0 %v626
          %799 = vmatpush1.msra.mxu0 %v625
          %800 = vmatprep.subr.mxu0 %v628
          %801 = vmatpush1.msra.mxu0 %v627
          %802 = vmatprep.subr.mxu0 %v630
          %803 = vmatpush1.msra.mxu0 %v629
          %804 = vmatprep.subr.mxu0 %v632
          %805 = vmatpush1.msra.mxu0 %v631
          %806 = vmatprep.subr.mxu0 %v634
          %807 = vmatpush1.msra.mxu0 %v633
          %808 = vmatprep.subr.mxu0 0.0
          %809 = vmatpush1.msra.mxu0 0.0
          %810 = vmatprep.subr.mxu0 0.0
          %811 = vmatpush1.msra.mxu0 0.0
          %812 = vmatprep.subr.mxu0 0.0
          %813 = vmatpush1.msra.mxu0 0.0
          %814 = vmatprep.subr.mxu0 0.0
          %815 = vmatpush1.msra.mxu0 0.0
          %816 = vmatprep.subr.mxu0 0.0
          %817 = vmatpush1.msra.mxu0 0.0
          %818 = vmatprep.subr.mxu0 0.0
          %819 = vmatpush1.msra.mxu0 0.0
          %820 = vmatprep.subr.mxu0 0.0
          %821 = vmatpush1.msra.mxu0 0.0
          %822 = vmatprep.subr.mxu0 0.0
          %823 = vmatpush1.msra.mxu0 0.0
          %824 = vmatprep.subr.mxu0 0.0
          %825 = vmatpush1.msra.mxu0 0.0
          %826 = vmatprep.subr.mxu0 0.0
          %827 = vmatpush1.msra.mxu0 0.0
          %828 = vmatprep.subr.mxu0 0.0
          %829 = vmatpush1.msra.mxu0 0.0
          %830 = vmatprep.subr.mxu0 0.0
          %831 = vmatpush1.msra.mxu0 0.0
          %832 = vmatprep.subr.mxu0 0.0
          %833 = vmatpush1.msra.mxu0 0.0
          %834 = vmatprep.subr.mxu0 0.0
          %835 = vmatpush1.msra.mxu0 0.0
          %836 = vmatprep.subr.mxu0 0.0
          %837 = vmatpush1.msra.mxu0 0.0
          %838 = vmatprep.subr.mxu0 0.0
          %839 = vmatpush1.msra.mxu0 0.0
          %840 = vmatprep.subr.mxu0 0.0
          %841 = vmatpush1.msra.mxu0 0.0
          %842 = vmatprep.subr.mxu0 0.0
          %843 = vmatpush1.msra.mxu0 0.0
          %844 = vmatprep.subr.mxu0 0.0
          %845 = vmatpush1.msra.mxu0 0.0
          %846 = vmatprep.subr.mxu0 0.0
          %847 = vmatpush1.msra.mxu0 0.0
          %848 = vmatprep.subr.mxu0 0.0
          %849 = vmatpush1.msra.mxu0 0.0
          %850 = vmatprep.subr.mxu0 0.0
          %851 = vmatpush1.msra.mxu0 0.0
          %852 = vmatprep.subr.mxu0 0.0
          %853 = vmatpush1.msra.mxu0 0.0
          %854 = vmatprep.subr.mxu0 0.0
          %855 = vmatpush1.msra.mxu0 0.0
          %856 = vmatprep.mubr.f32.mxu0 0.0
          %857 = vmatmul.mubr.f32.gmra.mrb[0].mxu0 %v649
          %v858 = vpop.f32.mrb[0].mxu0
          %v859 = vadd.f32 %v640, %v858
          %v860 = vpop.f32.mrb[0].mxu0
          %v861 = vadd.f32 %v644, %v860
          %862 = vmatprep.mubr.f32.mxu0 0.0
          %863 = vmatmul.mubr.f32.gmra.mrb[0].mxu0 %v652
          %v864 = vpop.f32.mrb[0].mxu0
          %v865 = vadd.f32 %v640, %v864
          %v866 = vpop.f32.mrb[0].mxu0
          %v867 = vadd.f32 %v644, %v866
          %868 = vmatprep.mubr.f32.mxu0 0.0
          %869 = vmatmul.mubr.f32.gmra.mrb[0].mxu0 %v655
          %v870 = vpop.f32.mrb[0].mxu0
          %v871 = vadd.f32 %v640, %v870
          %v872 = vpop.f32.mrb[0].mxu0
          %v873 = vadd.f32 %v644, %v872
          %874 = vmatprep.mubr.f32.mxu0 0.0
          %875 = vmatmul.mubr.f32.gmra.mrb[0].mxu0 %v658
          %v876 = vpop.f32.mrb[0].mxu0
          %v877 = vadd.f32 %v640, %v876
          %v878 = vpop.f32.mrb[0].mxu0
          %v879 = vadd.f32 %v644, %v878
          %880 = vmatprep.mubr.f32.mxu0 0.0
          %881 = vmatmul.mubr.f32.gmra.mrb[0].mxu0 %v661
          %v882 = vpop.f32.mrb[0].mxu0
          %v883 = vadd.f32 %v640, %v882
          %v884 = vpop.f32.mrb[0].mxu0
          %v885 = vadd.f32 %v644, %v884
          %886 = vmatprep.mubr.f32.mxu0 0.0
          %887 = vmatmul.mubr.f32.gmra.mrb[0].mxu0 %v664
          %v888 = vpop.f32.mrb[0].mxu0
          %v889 = vadd.f32 %v640, %v888
          %v890 = vpop.f32.mrb[0].mxu0
          %v891 = vadd.f32 %v644, %v890
          %892 = vmatprep.mubr.f32.mxu0 0.0
          %893 = vmatmul.mubr.f32.gmra.mrb[0].mxu0 %v667
          %v894 = vpop.f32.mrb[0].mxu0
          %v895 = vadd.f32 %v640, %v894
          %v896 = vpop.f32.mrb[0].mxu0
          %v897 = vadd.f32 %v644, %v896
          %898 = vmatprep.mubr.f32.mxu0 0.0
          %899 = vmatmul.mubr.f32.gmra.mrb[0].mxu0 %v670
          %v900 = vpop.f32.mrb[0].mxu0
          %v901 = vadd.f32 %v640, %v900
          %v902 = vpop.f32.mrb[0].mxu0
          %v903 = vadd.f32 %v644, %v902
          %904 = vmatprep.mubr.f32.mxu0 0.0
          %905 = vmatmul.mubr.f32.gmra.mrb[0].mxu0 %v673
          %v906 = vpop.f32.mrb[0].mxu0
          %v907 = vadd.f32 %v640, %v906
          %v908 = vpop.f32.mrb[0].mxu0
          %v909 = vadd.f32 %v644, %v908
          %910 = vmatprep.mubr.f32.mxu0 0.0
          %911 = vmatmul.mubr.f32.gmra.mrb[0].mxu0 %v676
          %v912 = vpop.f32.mrb[0].mxu0
          %v913 = vadd.f32 %v640, %v912
          %v914 = vpop.f32.mrb[0].mxu0
          %v915 = vadd.f32 %v644, %v914
          %916 = vmatprep.mubr.f32.mxu0 0.0
          %917 = vmatmul.mubr.f32.gmra.mrb[0].mxu0 %v679
          %v918 = vpop.f32.mrb[0].mxu0
          %v919 = vadd.f32 %v640, %v918
          %v920 = vpop.f32.mrb[0].mxu0
          %v921 = vadd.f32 %v644, %v920
          %922 = vmatprep.mubr.f32.mxu0 0.0
          %923 = vmatmul.mubr.f32.gmra.mrb[0].mxu0 %v682
          %v924 = vpop.f32.mrb[0].mxu0
          %v925 = vadd.f32 %v640, %v924
          %v926 = vpop.f32.mrb[0].mxu0
          %v927 = vadd.f32 %v644, %v926
          %928 = vmatprep.mubr.f32.mxu0 0.0
          %929 = vmatmul.mubr.f32.gmra.mrb[0].mxu0 %v685
          %v930 = vpop.f32.mrb[0].mxu0
          %v931 = vadd.f32 %v640, %v930
          %v932 = vpop.f32.mrb[0].mxu0
          %v933 = vadd.f32 %v644, %v932
          %934 = vmatprep.mubr.f32.mxu0 0.0
          %935 = vmatmul.mubr.f32.gmra.mrb[0].mxu0 %v688
          %v936 = vpop.f32.mrb[0].mxu0
          %v937 = vadd.f32 %v640, %v936
          %v938 = vpop.f32.mrb[0].mxu0
          %v939 = vadd.f32 %v644, %v938
          %940 = vmatprep.mubr.f32.mxu0 0.0
          %941 = vmatmul.mubr.f32.gmra.mrb[0].mxu0 %v691
          %v942 = vpop.f32.mrb[0].mxu0
          %v943 = vadd.f32 %v640, %v942
          %v944 = vpop.f32.mrb[0].mxu0
          %v945 = vadd.f32 %v644, %v944
          %946 = vmatprep.mubr.f32.mxu0 0.0
          %947 = vmatmul.mubr.f32.gmra.mrb[0].mxu0 %v694
          %v948 = vpop.f32.mrb[0].mxu0
          %v949 = vadd.f32 %v640, %v948
          %v950 = vpop.f32.mrb[0].mxu0
          %v951 = vadd.f32 %v644, %v950
          %952 = vmatprep.mubr.f32.mxu0 0.0
          %953 = vmatmul.mubr.f32.gmra.mrb[0].mxu0 %v697
          %v954 = vpop.f32.mrb[0].mxu0
          %v955 = vadd.f32 %v640, %v954
          %v956 = vpop.f32.mrb[0].mxu0
          %v957 = vadd.f32 %v644, %v956
          %958 = vmatprep.mubr.f32.mxu0 0.0
          %959 = vmatmul.mubr.f32.gmra.mrb[0].mxu0 %v700
          %v960 = vpop.f32.mrb[0].mxu0
          %v961 = vadd.f32 %v640, %v960
          %v962 = vpop.f32.mrb[0].mxu0
          %v963 = vadd.f32 %v644, %v962
          %964 = vmatprep.mubr.f32.mxu0 0.0
          %965 = vmatmul.mubr.f32.gmra.mrb[0].mxu0 %v703
          %v966 = vpop.f32.mrb[0].mxu0
          %v967 = vadd.f32 %v640, %v966
          %v968 = vpop.f32.mrb[0].mxu0
          %v969 = vadd.f32 %v644, %v968
          %970 = vmatprep.mubr.f32.mxu0 0.0
          %971 = vmatmul.mubr.f32.gmra.mrb[0].mxu0 %v706
          %v972 = vpop.f32.mrb[0].mxu0
          %v973 = vadd.f32 %v640, %v972
          %v974 = vpop.f32.mrb[0].mxu0
          %v975 = vadd.f32 %v644, %v974
          %976 = vmatprep.mubr.f32.mxu0 0.0
          %977 = vmatmul.mubr.f32.gmra.mrb[0].mxu0 %v709
          %v978 = vpop.f32.mrb[0].mxu0
          %v979 = vadd.f32 %v640, %v978
          %v980 = vpop.f32.mrb[0].mxu0
          %v981 = vadd.f32 %v644, %v980
          %982 = vmatprep.mubr.f32.mxu0 0.0
          %983 = vmatmul.mubr.f32.gmra.mrb[0].mxu0 %v712
          %v984 = vpop.f32.mrb[0].mxu0
          %v985 = vadd.f32 %v640, %v984
          %v986 = vpop.f32.mrb[0].mxu0
          %v987 = vadd.f32 %v644, %v986
          %988 = vmatprep.mubr.f32.mxu0 0.0
          %989 = vmatmul.mubr.f32.gmra.mrb[0].mxu0 %v715
          %v990 = vpop.f32.mrb[0].mxu0
          %v991 = vadd.f32 %v640, %v990
          %v992 = vpop.f32.mrb[0].mxu0
          %v993 = vadd.f32 %v644, %v992
          %994 = vmatprep.mubr.f32.mxu0 0.0
          %995 = vmatmul.mubr.f32.gmra.mrb[0].mxu0 %v718
          %v996 = vpop.f32.mrb[0].mxu0
          %v997 = vadd.f32 %v640, %v996
          %v998 = vpop.f32.mrb[0].mxu0
          %v999 = vadd.f32 %v644, %v998
          %1000 = vmatprep.mubr.f32.mxu0 0.0
          %1001 = vmatmul.mubr.f32.gmra.mrb[0].mxu0 %v721
          %v1002 = vpop.f32.mrb[0].mxu0
          %v1003 = vadd.f32 %v640, %v1002
          %v1004 = vpop.f32.mrb[0].mxu0
          %v1005 = vadd.f32 %v644, %v1004
          %1006 = vmatprep.mubr.f32.mxu0 0.0
          %1007 = vmatmul.mubr.f32.gmra.mrb[0].mxu0 %v724
          %v1008 = vpop.f32.mrb[0].mxu0
          %v1009 = vadd.f32 %v640, %v1008
          %v1010 = vpop.f32.mrb[0].mxu0
          %v1011 = vadd.f32 %v644, %v1010
          %1012 = vmatprep.mubr.f32.mxu0 0.0
          %1013 = vmatmul.mubr.f32.gmra.mrb[0].mxu0 %v727
          %v1014 = vpop.f32.mrb[0].mxu0
          %v1015 = vadd.f32 %v640, %v1014
          %v1016 = vpop.f32.mrb[0].mxu0
          %v1017 = vadd.f32 %v644, %v1016
          %1018 = vmatprep.mubr.f32.mxu0 0.0
          %1019 = vmatmul.mubr.f32.gmra.mrb[0].mxu0 %v730
          %v1020 = vpop.f32.mrb[0].mxu0
          %v1021 = vadd.f32 %v640, %v1020
          %v1022 = vpop.f32.mrb[0].mxu0
          %v1023 = vadd.f32 %v644, %v1022
          %1024 = vmatprep.mubr.f32.mxu0 0.0
          %1025 = vmatmul.mubr.f32.gmra.mrb[0].mxu0 %v733
          %v1026 = vpop.f32.mrb[0].mxu0
          %v1027 = vadd.f32 %v640, %v1026
          %v1028 = vpop.f32.mrb[0].mxu0
          %v1029 = vadd.f32 %v644, %v1028
          %1030 = vmatprep.mubr.f32.mxu0 0.0
          %1031 = vmatmul.mubr.f32.gmra.mrb[0].mxu0 %v736
          %v1032 = vpop.f32.mrb[0].mxu0
          %v1033 = vadd.f32 %v640, %v1032
          %v1034 = vpop.f32.mrb[0].mxu0
          %v1035 = vadd.f32 %v644, %v1034
          %1036 = vmatprep.mubr.f32.mxu0 0.0
          %1037 = vmatmul.mubr.f32.gmra.mrb[0].mxu0 %v739
          %v1038 = vpop.f32.mrb[0].mxu0
          %v1039 = vadd.f32 %v640, %v1038
          %v1040 = vpop.f32.mrb[0].mxu0
          %v1041 = vadd.f32 %v644, %v1040
          %1042 = vmatprep.mubr.f32.mxu0 0.0
          %1043 = vmatmul.mubr.f32.gmra.mrb[0].mxu0 %v742
          %v1044 = vpop.f32.mrb[0].mxu0
          %v1045 = vadd.f32 %v640, %v1044
          %v1046 = vpop.f32.mrb[0].mxu0
          %v1047 = vadd.f32 %v644, %v1046
          %1048 = vmatprep.mubr.f32.mxu0 0.0
          %1049 = vmatmul.mubr.f32.gmra.mrb[0].mxu0 %v745
          %v1050 = vpop.f32.mrb[0].mxu0
          %v1051 = vadd.f32 %v640, %v1050
          %v1052 = vpop.f32.mrb[0].mxu0
          %v1053 = vadd.f32 %v644, %v1052
          %1054 = vmatprep.mubr.f32.mxu0 0.0
          %1055 = vmatmul.mubr.f32.gmra.mrb[0].mxu0 %v748
          %v1056 = vpop.f32.mrb[0].mxu0
          %v1057 = vadd.f32 %v640, %v1056
          %v1058 = vpop.f32.mrb[0].mxu0
          %v1059 = vadd.f32 %v644, %v1058
          %1060 = vmatprep.mubr.f32.mxu0 0.0
          %1061 = vmatmul.mubr.f32.gmra.mrb[0].mxu0 %v751
          %v1062 = vpop.f32.mrb[0].mxu0
          %v1063 = vadd.f32 %v640, %v1062
          %v1064 = vpop.f32.mrb[0].mxu0
          %v1065 = vadd.f32 %v644, %v1064
          %1066 = vmatprep.mubr.f32.mxu0 0.0
          %1067 = vmatmul.mubr.f32.gmra.mrb[0].mxu0 %v754
          %v1068 = vpop.f32.mrb[0].mxu0
          %v1069 = vadd.f32 %v640, %v1068
          %v1070 = vpop.f32.mrb[0].mxu0
          %v1071 = vadd.f32 %v644, %v1070
          %1072 = vmatprep.mubr.f32.mxu0 0.0
          %1073 = vmatmul.mubr.f32.gmra.mrb[0].mxu0 %v757
          %v1074 = vpop.f32.mrb[0].mxu0
          %v1075 = vadd.f32 %v640, %v1074
          %v1076 = vpop.f32.mrb[0].mxu0
          %v1077 = vadd.f32 %v644, %v1076
          %1078 = vmatprep.mubr.f32.mxu0 0.0
          %1079 = vmatmul.mubr.f32.gmra.mrb[0].mxu0 %v760
          %v1080 = vpop.f32.mrb[0].mxu0
          %v1081 = vadd.f32 %v640, %v1080
          %v1082 = vpop.f32.mrb[0].mxu0
          %v1083 = vadd.f32 %v644, %v1082
          %1084 = vmatprep.mubr.f32.mxu0 0.0
          %1085 = vmatmul.mubr.f32.gmra.mrb[0].mxu0 %v763
          %v1086 = vpop.f32.mrb[0].mxu0
          %v1087 = vadd.f32 %v640, %v1086
          %v1088 = vpop.f32.mrb[0].mxu0
          %v1089 = vadd.f32 %v644, %v1088
          %1090 = vmatprep.mubr.f32.mxu0 0.0
          %1091 = vmatmul.mubr.f32.gmra.mrb[0].mxu0 %v766
          %v1092 = vpop.f32.mrb[0].mxu0
          %v1093 = vadd.f32 %v640, %v1092
          %v1094 = vpop.f32.mrb[0].mxu0
          %v1095 = vadd.f32 %v644, %v1094
          %1096 = vmatprep.mubr.f32.mxu0 0.0
          %1097 = vmatmul.mubr.f32.gmra.mrb[0].mxu0 %v769
          %v1098 = vpop.f32.mrb[0].mxu0
          %v1099 = vadd.f32 %v640, %v1098
          %v1100 = vpop.f32.mrb[0].mxu0
          %v1101 = vadd.f32 %v644, %v1100
          %1102 = vmatprep.mubr.f32.mxu0 0.0
          %1103 = vmatmul.mubr.f32.gmra.mrb[0].mxu0 %v772
          %v1104 = vpop.f32.mrb[0].mxu0
          %v1105 = vadd.f32 %v640, %v1104
          %v1106 = vpop.f32.mrb[0].mxu0
          %v1107 = vadd.f32 %v644, %v1106
          %1108 = vmatprep.mubr.f32.mxu0 0.0
          %1109 = vmatmul.mubr.f32.gmra.mrb[0].mxu0 %v775
          %v1110 = vpop.f32.mrb[0].mxu0
          %v1111 = vadd.f32 %v640, %v1110
          %v1112 = vpop.f32.mrb[0].mxu0
          %v1113 = vadd.f32 %v644, %v1112
          %1114 = vmatprep.mubr.f32.mxu0 0.0
          %1115 = vmatmul.mubr.f32.gmra.mrb[0].mxu0 %v778
          %v1116 = vpop.f32.mrb[0].mxu0
          %v1117 = vadd.f32 %v640, %v1116
          %v1118 = vpop.f32.mrb[0].mxu0
          %v1119 = vadd.f32 %v644, %v1118
          %1120 = vmatprep.mubr.f32.mxu0 0.0
          %1121 = vmatmul.mubr.f32.gmra.mrb[0].mxu0 %v781
          %v1122 = vpop.f32.mrb[0].mxu0
          %v1123 = vadd.f32 %v640, %v1122
          %v1124 = vpop.f32.mrb[0].mxu0
          %v1125 = vadd.f32 %v644, %v1124
          %1126 = vmatprep.mubr.f32.mxu0 0.0
          %1127 = vmatmul.mubr.f32.gmra.mrb[0].mxu0 %v784
          %v1128 = vpop.f32.mrb[0].mxu0
          %v1129 = vadd.f32 %v640, %v1128
          %v1130 = vpop.f32.mrb[0].mxu0
          %v1131 = vadd.f32 %v644, %v1130
          %1132 = vmatprep.mubr.f32.mxu0 0.0
          %1133 = vmatmul.mubr.f32.gmra.mrb[0].mxu0 %v787
          %v1134 = vpop.f32.mrb[0].mxu0
          %v1135 = vadd.f32 %v640, %v1134
          %v1136 = vpop.f32.mrb[0].mxu0
          %v1137 = vadd.f32 %v644, %v1136
          %1138 = vmatprep.mubr.f32.mxu0 0.0
          %1139 = vmatmul.mubr.f32.gmra.mrb[0].mxu0 %v790
          %v1140 = vpop.f32.mrb[0].mxu0
          %v1141 = vadd.f32 %v640, %v1140
          %v1142 = vpop.f32.mrb[0].mxu0
          %v1143 = vadd.f32 %v644, %v1142
          %1144 = vdwg.mxu0
          %v1145 = vpack.c.bf16 %v865, %v859
          %v1146 = vpack.c.bf16 %v867, %v861
          %v1147 = vpack.c.bf16 %v877, %v871
          %v1148 = vpack.c.bf16 %v879, %v873
          %v1149 = vpack.c.bf16 %v889, %v883
          %v1150 = vpack.c.bf16 %v891, %v885
          %v1151 = vpack.c.bf16 %v901, %v895
          %v1152 = vpack.c.bf16 %v903, %v897
          %v1153 = vpack.c.bf16 %v913, %v907
          %v1154 = vpack.c.bf16 %v915, %v909
          %v1155 = vpack.c.bf16 %v925, %v919
          %v1156 = vpack.c.bf16 %v927, %v921
          %v1157 = vpack.c.bf16 %v937, %v931
          %v1158 = vpack.c.bf16 %v939, %v933
          %v1159 = vpack.c.bf16 %v949, %v943
          %v1160 = vpack.c.bf16 %v951, %v945
          %v1161 = vpack.c.bf16 %v961, %v955
          %v1162 = vpack.c.bf16 %v963, %v957
          %v1163 = vpack.c.bf16 %v973, %v967
          %v1164 = vpack.c.bf16 %v975, %v969
          %v1165 = vpack.c.bf16 %v985, %v979
          %v1166 = vpack.c.bf16 %v987, %v981
          %v1167 = vpack.c.bf16 %v997, %v991
          %v1168 = vpack.c.bf16 %v999, %v993
          %v1169 = vpack.c.bf16 %v1009, %v1003
          %v1170 = vpack.c.bf16 %v1011, %v1005
          %v1171 = vpack.c.bf16 %v1021, %v1015
          %v1172 = vpack.c.bf16 %v1023, %v1017
          %v1173 = vpack.c.bf16 %v1033, %v1027
          %v1174 = vpack.c.bf16 %v1035, %v1029
          %v1175 = vpack.c.bf16 %v1045, %v1039
          %v1176 = vpack.c.bf16 %v1047, %v1041
          %v1177 = vpack.c.bf16 %v1057, %v1051
          %v1178 = vpack.c.bf16 %v1059, %v1053
          %v1179 = vpack.c.bf16 %v1069, %v1063
          %v1180 = vpack.c.bf16 %v1071, %v1065
          %v1181 = vpack.c.bf16 %v1081, %v1075
          %v1182 = vpack.c.bf16 %v1083, %v1077
          %v1183 = vpack.c.bf16 %v1093, %v1087
          %v1184 = vpack.c.bf16 %v1095, %v1089
          %v1185 = vpack.c.bf16 %v1105, %v1099
          %v1186 = vpack.c.bf16 %v1107, %v1101
          %v1187 = vpack.c.bf16 %v1117, %v1111
          %v1188 = vpack.c.bf16 %v1119, %v1113
          %v1189 = vpack.c.bf16 %v1129, %v1123
          %v1190 = vpack.c.bf16 %v1131, %v1125
          %v1191 = vpack.c.bf16 %v1141, %v1135
          %v1192 = vpack.c.bf16 %v1143, %v1137
          %1193 = vst.msk [vmem:[#allocation3] sm:$0xff] %vm647, %v1145
          %1194 = vst.msk [vmem:[#allocation3 + $0x8] sm:$0xff] %vm647, %v1147
          %1195 = vst.msk [vmem:[#allocation3 + $0x10] sm:$0xff] %vm647, %v1149
          %1196 = vst.msk [vmem:[#allocation3 + $0x18] sm:$0xff] %vm647, %v1151
          %1197 = vst.msk [vmem:[#allocation3 + $0x20] sm:$0xff] %vm647, %v1153
          %1198 = vst.msk [vmem:[#allocation3 + $0x28] sm:$0xff] %vm647, %v1155
          %1199 = vst.msk [vmem:[#allocation3 + $0x30] sm:$0xff] %vm647, %v1157
          %1200 = vst.msk [vmem:[#allocation3 + $0x38] sm:$0xff] %vm647, %v1159
          %1201 = vst.msk [vmem:[#allocation3 + $0x40] sm:$0xff] %vm647, %v1161
          %1202 = vst.msk [vmem:[#allocation3 + $0x48] sm:$0xff] %vm647, %v1163
          %1203 = vst.msk [vmem:[#allocation3 + $0x50] sm:$0xff] %vm647, %v1165
          %1204 = vst.msk [vmem:[#allocation3 + $0x58] sm:$0xff] %vm647, %v1167
          %1205 = vst.msk [vmem:[#allocation3 + $0x60] sm:$0xff] %vm647, %v1169
          %1206 = vst.msk [vmem:[#allocation3 + $0x68] sm:$0xff] %vm647, %v1171
          %1207 = vst.msk [vmem:[#allocation3 + $0x70] sm:$0xff] %vm647, %v1173
          %1208 = vst.msk [vmem:[#allocation3 + $0x78] sm:$0xff] %vm647, %v1175
          %1209 = vst.msk [vmem:[#allocation3 + $0x80] sm:$0xff] %vm647, %v1177
          %1210 = vst.msk [vmem:[#allocation3 + $0x88] sm:$0xff] %vm647, %v1179
          %1211 = vst.msk [vmem:[#allocation3 + $0x90] sm:$0xff] %vm647, %v1181
          %1212 = vst.msk [vmem:[#allocation3 + $0x98] sm:$0xff] %vm647, %v1183
          %1213 = vst.msk [vmem:[#allocation3 + $0xa0] sm:$0xff] %vm647, %v1185
          %1214 = vst.msk [vmem:[#allocation3 + $0xa8] sm:$0xff] %vm647, %v1187
          %1215 = vst.msk [vmem:[#allocation3 + $0xb0] sm:$0xff] %vm647, %v1189
          %1216 = vst.msk [vmem:[#allocation3 + $0xb8] sm:$0xff] %vm647, %v1191
          %1241 = vrot.lane.b32.xlu0 %v1145, 64
          %v1242 = vpop.permute.xlu0 %1241
          %1243 = vrot.lane.b32.xlu0 %v1147, 64
          %v1244 = vpop.permute.xlu0 %1243
          %1245 = vrot.lane.b32.xlu0 %v1149, 64
          %v1246 = vpop.permute.xlu0 %1245
          %1247 = vrot.lane.b32.xlu0 %v1151, 64
          %v1248 = vpop.permute.xlu0 %1247
          %1249 = vrot.lane.b32.xlu0 %v1153, 64
          %v1250 = vpop.permute.xlu0 %1249
          %1251 = vrot.lane.b32.xlu0 %v1155, 64
          %v1252 = vpop.permute.xlu0 %1251
          %1253 = vrot.lane.b32.xlu0 %v1157, 64
          %v1254 = vpop.permute.xlu0 %1253
          %1255 = vrot.lane.b32.xlu0 %v1159, 64
          %v1256 = vpop.permute.xlu0 %1255
          %1257 = vrot.lane.b32.xlu0 %v1161, 64
          %v1258 = vpop.permute.xlu0 %1257
          %1259 = vrot.lane.b32.xlu0 %v1163, 64
          %v1260 = vpop.permute.xlu0 %1259
          %1261 = vrot.lane.b32.xlu0 %v1165, 64
          %v1262 = vpop.permute.xlu0 %1261
          %1263 = vrot.lane.b32.xlu0 %v1167, 64
          %v1264 = vpop.permute.xlu0 %1263
          %1265 = vrot.lane.b32.xlu0 %v1169, 64
          %v1266 = vpop.permute.xlu0 %1265
          %1267 = vrot.lane.b32.xlu0 %v1171, 64
          %v1268 = vpop.permute.xlu0 %1267
          %1269 = vrot.lane.b32.xlu0 %v1173, 64
          %v1270 = vpop.permute.xlu0 %1269
          %1271 = vrot.lane.b32.xlu0 %v1175, 64
          %v1272 = vpop.permute.xlu0 %1271
          %1273 = vrot.lane.b32.xlu0 %v1177, 64
          %v1274 = vpop.permute.xlu0 %1273
          %1275 = vrot.lane.b32.xlu0 %v1179, 64
          %v1276 = vpop.permute.xlu0 %1275
          %1277 = vrot.lane.b32.xlu0 %v1181, 64
          %v1278 = vpop.permute.xlu0 %1277
          %1279 = vrot.lane.b32.xlu0 %v1183, 64
          %v1280 = vpop.permute.xlu0 %1279
          %1281 = vrot.lane.b32.xlu0 %v1185, 64
          %v1282 = vpop.permute.xlu0 %1281
          %1283 = vrot.lane.b32.xlu0 %v1187, 64
          %v1284 = vpop.permute.xlu0 %1283
          %1285 = vrot.lane.b32.xlu0 %v1189, 64
          %v1286 = vpop.permute.xlu0 %1285
          %1287 = vrot.lane.b32.xlu0 %v1191, 64
          %v1288 = vpop.permute.xlu0 %1287
          %1313 = vst.msk [vmem:[#allocation4] sm:$0xff] %vm647, %v1242
          %1314 = vst.msk [vmem:[#allocation4 + $0x8] sm:$0xff] %vm647, %v1244
          %1315 = vst.msk [vmem:[#allocation4 + $0x10] sm:$0xff] %vm647, %v1246
          %1316 = vst.msk [vmem:[#allocation4 + $0x18] sm:$0xff] %vm647, %v1248
          %1317 = vst.msk [vmem:[#allocation4 + $0x20] sm:$0xff] %vm647, %v1250
          %1318 = vst.msk [vmem:[#allocation4 + $0x28] sm:$0xff] %vm647, %v1252
          %1319 = vst.msk [vmem:[#allocation4 + $0x30] sm:$0xff] %vm647, %v1254
          %1320 = vst.msk [vmem:[#allocation4 + $0x38] sm:$0xff] %vm647, %v1256
          %1321 = vst.msk [vmem:[#allocation4 + $0x40] sm:$0xff] %vm647, %v1258
          %1322 = vst.msk [vmem:[#allocation4 + $0x48] sm:$0xff] %vm647, %v1260
          %1323 = vst.msk [vmem:[#allocation4 + $0x50] sm:$0xff] %vm647, %v1262
          %1324 = vst.msk [vmem:[#allocation4 + $0x58] sm:$0xff] %vm647, %v1264
          %1325 = vst.msk [vmem:[#allocation4 + $0x60] sm:$0xff] %vm647, %v1266
          %1326 = vst.msk [vmem:[#allocation4 + $0x68] sm:$0xff] %vm647, %v1268
          %1327 = vst.msk [vmem:[#allocation4 + $0x70] sm:$0xff] %vm647, %v1270
          %1328 = vst.msk [vmem:[#allocation4 + $0x78] sm:$0xff] %vm647, %v1272
          %1329 = vst.msk [vmem:[#allocation4 + $0x80] sm:$0xff] %vm647, %v1274
          %1330 = vst.msk [vmem:[#allocation4 + $0x88] sm:$0xff] %vm647, %v1276
          %1331 = vst.msk [vmem:[#allocation4 + $0x90] sm:$0xff] %vm647, %v1278
          %1332 = vst.msk [vmem:[#allocation4 + $0x98] sm:$0xff] %vm647, %v1280
          %1333 = vst.msk [vmem:[#allocation4 + $0xa0] sm:$0xff] %vm647, %v1282
          %1334 = vst.msk [vmem:[#allocation4 + $0xa8] sm:$0xff] %vm647, %v1284
          %1335 = vst.msk [vmem:[#allocation4 + $0xb0] sm:$0xff] %vm647, %v1286
          %1336 = vst.msk [vmem:[#allocation4 + $0xb8] sm:$0xff] %vm647, %v1288
          %1337 = vst.msk [vmem:[#allocation5] sm:$0xff] %vm647, %v1146
          %1338 = vst.msk [vmem:[#allocation5 + $0x8] sm:$0xff] %vm647, %v1148
          %1339 = vst.msk [vmem:[#allocation5 + $0x10] sm:$0xff] %vm647, %v1150
          %1340 = vst.msk [vmem:[#allocation5 + $0x18] sm:$0xff] %vm647, %v1152
          %1341 = vst.msk [vmem:[#allocation5 + $0x20] sm:$0xff] %vm647, %v1154
          %1342 = vst.msk [vmem:[#allocation5 + $0x28] sm:$0xff] %vm647, %v1156
          %1343 = vst.msk [vmem:[#allocation5 + $0x30] sm:$0xff] %vm647, %v1158
          %1344 = vst.msk [vmem:[#allocation5 + $0x38] sm:$0xff] %vm647, %v1160
          %1345 = vst.msk [vmem:[#allocation5 + $0x40] sm:$0xff] %vm647, %v1162
          %1346 = vst.msk [vmem:[#allocation5 + $0x48] sm:$0xff] %vm647, %v1164
          %1347 = vst.msk [vmem:[#allocation5 + $0x50] sm:$0xff] %vm647, %v1166
          %1348 = vst.msk [vmem:[#allocation5 + $0x58] sm:$0xff] %vm647, %v1168
          %1349 = vst.msk [vmem:[#allocation5 + $0x60] sm:$0xff] %vm647, %v1170
          %1350 = vst.msk [vmem:[#allocation5 + $0x68] sm:$0xff] %vm647, %v1172
          %1351 = vst.msk [vmem:[#allocation5 + $0x70] sm:$0xff] %vm647, %v1174
          %1352 = vst.msk [vmem:[#allocation5 + $0x78] sm:$0xff] %vm647, %v1176
          %1353 = vst.msk [vmem:[#allocation5 + $0x80] sm:$0xff] %vm647, %v1178
          %1354 = vst.msk [vmem:[#allocation5 + $0x88] sm:$0xff] %vm647, %v1180
          %1355 = vst.msk [vmem:[#allocation5 + $0x90] sm:$0xff] %vm647, %v1182
          %1356 = vst.msk [vmem:[#allocation5 + $0x98] sm:$0xff] %vm647, %v1184
          %1357 = vst.msk [vmem:[#allocation5 + $0xa0] sm:$0xff] %vm647, %v1186
          %1358 = vst.msk [vmem:[#allocation5 + $0xa8] sm:$0xff] %vm647, %v1188
          %1359 = vst.msk [vmem:[#allocation5 + $0xb0] sm:$0xff] %vm647, %v1190
          %1360 = vst.msk [vmem:[#allocation5 + $0xb8] sm:$0xff] %vm647, %v1192
          %vm1361 = vcmask 1048064
          %1362 = vst.msk [vmem:[#allocation5] sm:$0xff] %vm1361, 1065369472
          %1363 = vst.msk [vmem:[#allocation5 + $0x8] sm:$0xff] %vm1361, 1065369472
          %1364 = vst.msk [vmem:[#allocation5 + $0x10] sm:$0xff] %vm1361, 1065369472
          %1365 = vst.msk [vmem:[#allocation5 + $0x18] sm:$0xff] %vm1361, 1065369472
          %1366 = vst.msk [vmem:[#allocation5 + $0x20] sm:$0xff] %vm1361, 1065369472
          %1367 = vst.msk [vmem:[#allocation5 + $0x28] sm:$0xff] %vm1361, 1065369472
          %1368 = vst.msk [vmem:[#allocation5 + $0x30] sm:$0xff] %vm1361, 1065369472
          %1369 = vst.msk [vmem:[#allocation5 + $0x38] sm:$0xff] %vm1361, 1065369472
          %1370 = vst.msk [vmem:[#allocation5 + $0x40] sm:$0xff] %vm1361, 1065369472
          %1371 = vst.msk [vmem:[#allocation5 + $0x48] sm:$0xff] %vm1361, 1065369472
          %1372 = vst.msk [vmem:[#allocation5 + $0x50] sm:$0xff] %vm1361, 1065369472
          %1373 = vst.msk [vmem:[#allocation5 + $0x58] sm:$0xff] %vm1361, 1065369472
          %1374 = vst.msk [vmem:[#allocation5 + $0x60] sm:$0xff] %vm1361, 1065369472
          %1375 = vst.msk [vmem:[#allocation5 + $0x68] sm:$0xff] %vm1361, 1065369472
          %1376 = vst.msk [vmem:[#allocation5 + $0x70] sm:$0xff] %vm1361, 1065369472
          %1377 = vst.msk [vmem:[#allocation5 + $0x78] sm:$0xff] %vm1361, 1065369472
          %1378 = vst.msk [vmem:[#allocation5 + $0x80] sm:$0xff] %vm1361, 1065369472
          %1379 = vst.msk [vmem:[#allocation5 + $0x88] sm:$0xff] %vm1361, 1065369472
          %1380 = vst.msk [vmem:[#allocation5 + $0x90] sm:$0xff] %vm1361, 1065369472
          %1381 = vst.msk [vmem:[#allocation5 + $0x98] sm:$0xff] %vm1361, 1065369472
          %1382 = vst.msk [vmem:[#allocation5 + $0xa0] sm:$0xff] %vm1361, 1065369472
          %1383 = vst.msk [vmem:[#allocation5 + $0xa8] sm:$0xff] %vm1361, 1065369472
          %1384 = vst.msk [vmem:[#allocation5 + $0xb0] sm:$0xff] %vm1361, 1065369472
          %1385 = vst.msk [vmem:[#allocation5 + $0xb8] sm:$0xff] %vm1361, 1065369472
        $region72: #{tpu_custom_call.1} parent=43 // pred_fallthru
          _
        %s1386 = smul.u32 %s33, 8
        %v1387 = vlaneseq
        %v1388 = vand.u32 %v1387, 127
        %v1389 = vstv %s1386
        %vm1390 = vcmp.ge.s32.totalorder %v1388, %v1389
        %s1391 = sadd.s32 %s1386, 8
        %v1392 = vstv %s1391
        %vm1393 = vcmp.lt.s32.totalorder %v1388, %v1392
        %vm1394 = vmand %vm1390, %vm1393
        %v1395 = vld [vmem:[#allocation4] sm:$0xff]
        %v1396 = vld [vmem:[#allocation4 + $0x8] sm:$0xff]
        %v1397 = vld [vmem:[#allocation4 + $0x10] sm:$0xff]
        %v1398 = vld [vmem:[#allocation4 + $0x18] sm:$0xff]
        %v1399 = vld [vmem:[#allocation4 + $0x20] sm:$0xff]
        %v1400 = vld [vmem:[#allocation4 + $0x28] sm:$0xff]
        %v1401 = vld [vmem:[#allocation4 + $0x30] sm:$0xff]
        %v1402 = vld [vmem:[#allocation4 + $0x38] sm:$0xff]
        %v1403 = vld [vmem:[#allocation4 + $0x40] sm:$0xff]
        %v1404 = vld [vmem:[#allocation4 + $0x48] sm:$0xff]
        %v1405 = vld [vmem:[#allocation4 + $0x50] sm:$0xff]
        %v1406 = vld [vmem:[#allocation4 + $0x58] sm:$0xff]
        %v1407 = vld [vmem:[#allocation4 + $0x60] sm:$0xff]
        %v1408 = vld [vmem:[#allocation4 + $0x68] sm:$0xff]
        %v1409 = vld [vmem:[#allocation4 + $0x70] sm:$0xff]
        %v1410 = vld [vmem:[#allocation4 + $0x78] sm:$0xff]
        %v1411 = vld [vmem:[#allocation4 + $0x80] sm:$0xff]
        %v1412 = vld [vmem:[#allocation4 + $0x88] sm:$0xff]
        %v1413 = vld [vmem:[#allocation4 + $0x90] sm:$0xff]
        %v1414 = vld [vmem:[#allocation4 + $0x98] sm:$0xff]
        %v1415 = vld [vmem:[#allocation4 + $0xa0] sm:$0xff]
        %v1416 = vld [vmem:[#allocation4 + $0xa8] sm:$0xff]
        %v1417 = vld [vmem:[#allocation4 + $0xb0] sm:$0xff]
        %v1418 = vld [vmem:[#allocation4 + $0xb8] sm:$0xff]
        %v1419 = vsel %vm1394, 1, 0
        %vm1420 = vcmp.eq.s32.totalorder %v1419, 1
        %vm1421 = vmpackc.low %vm1420, %vm1420
        %v1422 = vsel %vm1421, 65537, 0
        %v1423 = vlaneseq
        %v1424 = vshrl.u32 %v1423, 7
        %v1425 = vsub.s32 0, %v1424
        %v1426 = vrot.slane %v1422, %v1425
        %vm1427 = vcmp.ne.s16.totalorder %v1426, 0
        %v1428 = vsel %vm1427, %v1395, 0
        %v1429 = vsel %vm1427, %v1396, 0
        %v1430 = vsel %vm1427, %v1397, 0
        %v1431 = vsel %vm1427, %v1398, 0
        %v1432 = vsel %vm1427, %v1399, 0
        %v1433 = vsel %vm1427, %v1400, 0
        %v1434 = vsel %vm1427, %v1401, 0
        %v1435 = vsel %vm1427, %v1402, 0
        %v1436 = vsel %vm1427, %v1403, 0
        %v1437 = vsel %vm1427, %v1404, 0
        %v1438 = vsel %vm1427, %v1405, 0
        %v1439 = vsel %vm1427, %v1406, 0
        %v1440 = vsel %vm1427, %v1407, 0
        %v1441 = vsel %vm1427, %v1408, 0
        %v1442 = vsel %vm1427, %v1409, 0
        %v1443 = vsel %vm1427, %v1410, 0
        %v1444 = vsel %vm1427, %v1411, 0
        %v1445 = vsel %vm1427, %v1412, 0
        %v1446 = vsel %vm1427, %v1413, 0
        %v1447 = vsel %vm1427, %v1414, 0
        %v1448 = vsel %vm1427, %v1415, 0
        %v1449 = vsel %vm1427, %v1416, 0
        %v1450 = vsel %vm1427, %v1417, 0
        %v1451 = vsel %vm1427, %v1418, 0
        %v1452 = vld [vmem:[#allocation3] sm:$0xff]
        %v1453 = vld [vmem:[#allocation3 + $0x8] sm:$0xff]
        %v1454 = vld [vmem:[#allocation3 + $0x10] sm:$0xff]
        %v1455 = vld [vmem:[#allocation3 + $0x18] sm:$0xff]
        %v1456 = vld [vmem:[#allocation3 + $0x20] sm:$0xff]
        %v1457 = vld [vmem:[#allocation3 + $0x28] sm:$0xff]
        %v1458 = vld [vmem:[#allocation3 + $0x30] sm:$0xff]
        %v1459 = vld [vmem:[#allocation3 + $0x38] sm:$0xff]
        %v1460 = vld [vmem:[#allocation3 + $0x40] sm:$0xff]
        %v1461 = vld [vmem:[#allocation3 + $0x48] sm:$0xff]
        %v1462 = vld [vmem:[#allocation3 + $0x50] sm:$0xff]
        %v1463 = vld [vmem:[#allocation3 + $0x58] sm:$0xff]
        %v1464 = vld [vmem:[#allocation3 + $0x60] sm:$0xff]
        %v1465 = vld [vmem:[#allocation3 + $0x68] sm:$0xff]
        %v1466 = vld [vmem:[#allocation3 + $0x70] sm:$0xff]
        %v1467 = vld [vmem:[#allocation3 + $0x78] sm:$0xff]
        %v1468 = vld [vmem:[#allocation3 + $0x80] sm:$0xff]
        %v1469 = vld [vmem:[#allocation3 + $0x88] sm:$0xff]
        %v1470 = vld [vmem:[#allocation3 + $0x90] sm:$0xff]
        %v1471 = vld [vmem:[#allocation3 + $0x98] sm:$0xff]
        %v1472 = vld [vmem:[#allocation3 + $0xa0] sm:$0xff]
        %v1473 = vld [vmem:[#allocation3 + $0xa8] sm:$0xff]
        %v1474 = vld [vmem:[#allocation3 + $0xb0] sm:$0xff]
        %v1475 = vld [vmem:[#allocation3 + $0xb8] sm:$0xff]
        %v1476 = vld [vmem:[%s398] sm:$0xff]
        %v1477 = vld [vmem:[%s398 + $0x8] sm:$0xf]
        %v1478 = vld [vmem:[%s398 + $0xc] sm:$0xff]
        %v1479 = vld [vmem:[%s398 + $0x14] sm:$0xf]
        %v1480 = vld [vmem:[%s398 + $0x18] sm:$0xff]
        %v1481 = vld [vmem:[%s398 + $0x20] sm:$0xf]
        %v1482 = vld [vmem:[%s398 + $0x24] sm:$0xff]
        %v1483 = vld [vmem:[%s398 + $0x2c] sm:$0xf]
        %v1484 = vld [vmem:[%s398 + $0x30] sm:$0xff]
        %v1485 = vld [vmem:[%s398 + $0x38] sm:$0xf]
        %v1486 = vld [vmem:[%s398 + $0x3c] sm:$0xff]
        %v1487 = vld [vmem:[%s398 + $0x44] sm:$0xf]
        %v1488 = vld [vmem:[%s398 + $0x48] sm:$0xff]
        %v1489 = vld [vmem:[%s398 + $0x50] sm:$0xf]
        %v1490 = vld [vmem:[%s398 + $0x54] sm:$0xff]
        %v1491 = vld [vmem:[%s398 + $0x5c] sm:$0xf]
        %v1492 = vld [vmem:[%s398 + $0x60] sm:$0xff]
        %v1493 = vld [vmem:[%s398 + $0x68] sm:$0xf]
        %v1494 = vld [vmem:[%s398 + $0x6c] sm:$0xff]
        %v1495 = vld [vmem:[%s398 + $0x74] sm:$0xf]
        %v1496 = vld [vmem:[%s398 + $0x78] sm:$0xff]
        %v1497 = vld [vmem:[%s398 + $0x80] sm:$0xf]
        %v1498 = vld [vmem:[%s398 + $0x84] sm:$0xff]
        %v1499 = vld [vmem:[%s398 + $0x8c] sm:$0xf]
        %v1500 = vld [vmem:[%s398 + $0x90] sm:$0xff]
        %v1501 = vld [vmem:[%s398 + $0x98] sm:$0xf]
        %v1502 = vld [vmem:[%s398 + $0x9c] sm:$0xff]
        %v1503 = vld [vmem:[%s398 + $0xa4] sm:$0xf]
        %v1504 = vld [vmem:[%s398 + $0xa8] sm:$0xff]
        %v1505 = vld [vmem:[%s398 + $0xb0] sm:$0xf]
        %v1506 = vld [vmem:[%s398 + $0xb4] sm:$0xff]
        %v1507 = vld [vmem:[%s398 + $0xbc] sm:$0xf]
        %v1508 = vld [vmem:[%s398 + $0xc0] sm:$0xff]
        %v1509 = vld [vmem:[%s398 + $0xc8] sm:$0xf]
        %v1510 = vld [vmem:[%s398 + $0xcc] sm:$0xff]
        %v1511 = vld [vmem:[%s398 + $0xd4] sm:$0xf]
        %v1512 = vld [vmem:[%s398 + $0xd8] sm:$0xff]
        %v1513 = vld [vmem:[%s398 + $0xe0] sm:$0xf]
        %v1514 = vld [vmem:[%s398 + $0xe4] sm:$0xff]
        %v1515 = vld [vmem:[%s398 + $0xec] sm:$0xf]
        %v1516 = vld [vmem:[%s398 + $0xf0] sm:$0xff]
        %v1517 = vld [vmem:[%s398 + $0xf8] sm:$0xf]
        %v1518 = vld [vmem:[%s398 + $0xfc] sm:$0xff]
        %v1519 = vld [vmem:[%s398 + $0x104] sm:$0xf]
        %v1520 = vld [vmem:[%s398 + $0x108] sm:$0xff]
        %v1521 = vld [vmem:[%s398 + $0x110] sm:$0xf]
        %v1522 = vld [vmem:[%s398 + $0x114] sm:$0xff]
        %v1523 = vld [vmem:[%s398 + $0x11c] sm:$0xf]
        %v1524 = vld [vmem:[%s398 + $0x120] sm:$0xff]
        %v1525 = vld [vmem:[%s398 + $0x128] sm:$0xf]
        %v1526 = vld [vmem:[%s398 + $0x12c] sm:$0xff]
        %v1527 = vld [vmem:[%s398 + $0x134] sm:$0xf]
        %v1528 = vld [vmem:[%s398 + $0x138] sm:$0xff]
        %v1529 = vld [vmem:[%s398 + $0x140] sm:$0xf]
        %v1530 = vld [vmem:[%s398 + $0x144] sm:$0xff]
        %v1531 = vld [vmem:[%s398 + $0x14c] sm:$0xf]
        %v1532 = vld [vmem:[%s398 + $0x150] sm:$0xff]
        %v1533 = vld [vmem:[%s398 + $0x158] sm:$0xf]
        %v1534 = vld [vmem:[%s398 + $0x15c] sm:$0xff]
        %v1535 = vld [vmem:[%s398 + $0x164] sm:$0xf]
        %v1536 = vld [vmem:[%s398 + $0x168] sm:$0xff]
        %v1537 = vld [vmem:[%s398 + $0x170] sm:$0xf]
        %v1538 = vld [vmem:[%s398 + $0x174] sm:$0xff]
        %v1539 = vld [vmem:[%s398 + $0x17c] sm:$0xf]
        %v1540 = vld [vmem:[%s398 + $0x180] sm:$0xff]
        %v1541 = vld [vmem:[%s398 + $0x188] sm:$0xf]
        %v1542 = vld [vmem:[%s398 + $0x18c] sm:$0xff]
        %v1543 = vld [vmem:[%s398 + $0x194] sm:$0xf]
        %v1544 = vld [vmem:[%s398 + $0x198] sm:$0xff]
        %v1545 = vld [vmem:[%s398 + $0x1a0] sm:$0xf]
        %v1546 = vld [vmem:[%s398 + $0x1a4] sm:$0xff]
        %v1547 = vld [vmem:[%s398 + $0x1ac] sm:$0xf]
        %v1548 = vld [vmem:[%s398 + $0x1b0] sm:$0xff]
        %v1549 = vld [vmem:[%s398 + $0x1b8] sm:$0xf]
        %v1550 = vld [vmem:[%s398 + $0x1bc] sm:$0xff]
        %v1551 = vld [vmem:[%s398 + $0x1c4] sm:$0xf]
        %v1552 = vld [vmem:[%s398 + $0x1c8] sm:$0xff]
        %v1553 = vld [vmem:[%s398 + $0x1d0] sm:$0xf]
        %v1554 = vld [vmem:[%s398 + $0x1d4] sm:$0xff]
        %v1555 = vld [vmem:[%s398 + $0x1dc] sm:$0xf]
        %v1556 = vld [vmem:[%s398 + $0x1e0] sm:$0xff]
        %v1557 = vld [vmem:[%s398 + $0x1e8] sm:$0xf]
        %v1558 = vld [vmem:[%s398 + $0x1ec] sm:$0xff]
        %v1559 = vld [vmem:[%s398 + $0x1f4] sm:$0xf]
        %v1560 = vld [vmem:[%s398 + $0x1f8] sm:$0xff]
        %v1561 = vld [vmem:[%s398 + $0x200] sm:$0xf]
        %v1562 = vld [vmem:[%s398 + $0x204] sm:$0xff]
        %v1563 = vld [vmem:[%s398 + $0x20c] sm:$0xf]
        %v1564 = vld [vmem:[%s398 + $0x210] sm:$0xff]
        %v1565 = vld [vmem:[%s398 + $0x218] sm:$0xf]
        %v1566 = vld [vmem:[%s398 + $0x21c] sm:$0xff]
        %v1567 = vld [vmem:[%s398 + $0x224] sm:$0xf]
        %v1568 = vld [vmem:[%s398 + $0x228] sm:$0xff]
        %v1569 = vld [vmem:[%s398 + $0x230] sm:$0xf]
        %v1570 = vld [vmem:[%s398 + $0x234] sm:$0xff]
        %v1571 = vld [vmem:[%s398 + $0x23c] sm:$0xf]
        %v1572 = vunpack.c.l.bf16 %v1476
        %v1573 = vunpack.c.h.bf16 %v1476
        %v1574 = vunpack.c.l.bf16 %v1477
        %v1575 = vunpack.c.l.bf16 %v1478
        %v1576 = vunpack.c.h.bf16 %v1478
        %v1577 = vunpack.c.l.bf16 %v1479
        %v1578 = vunpack.c.l.bf16 %v1480
        %v1579 = vunpack.c.h.bf16 %v1480
        %v1580 = vunpack.c.l.bf16 %v1481
        %v1581 = vunpack.c.l.bf16 %v1482
        %v1582 = vunpack.c.h.bf16 %v1482
        %v1583 = vunpack.c.l.bf16 %v1483
        %v1584 = vunpack.c.l.bf16 %v1484
        %v1585 = vunpack.c.h.bf16 %v1484
        %v1586 = vunpack.c.l.bf16 %v1485
        %v1587 = vunpack.c.l.bf16 %v1486
        %v1588 = vunpack.c.h.bf16 %v1486
        %v1589 = vunpack.c.l.bf16 %v1487
        %v1590 = vunpack.c.l.bf16 %v1488
        %v1591 = vunpack.c.h.bf16 %v1488
        %v1592 = vunpack.c.l.bf16 %v1489
        %v1593 = vunpack.c.l.bf16 %v1490
        %v1594 = vunpack.c.h.bf16 %v1490
        %v1595 = vunpack.c.l.bf16 %v1491
        %v1596 = vunpack.c.l.bf16 %v1492
        %v1597 = vunpack.c.h.bf16 %v1492
        %v1598 = vunpack.c.l.bf16 %v1493
        %v1599 = vunpack.c.l.bf16 %v1494
        %v1600 = vunpack.c.h.bf16 %v1494
        %v1601 = vunpack.c.l.bf16 %v1495
        %v1602 = vunpack.c.l.bf16 %v1496
        %v1603 = vunpack.c.h.bf16 %v1496
        %v1604 = vunpack.c.l.bf16 %v1497
        %v1605 = vunpack.c.l.bf16 %v1498
        %v1606 = vunpack.c.h.bf16 %v1498
        %v1607 = vunpack.c.l.bf16 %v1499
        %v1608 = vunpack.c.l.bf16 %v1500
        %v1609 = vunpack.c.h.bf16 %v1500
        %v1610 = vunpack.c.l.bf16 %v1501
        %v1611 = vunpack.c.l.bf16 %v1502
        %v1612 = vunpack.c.h.bf16 %v1502
        %v1613 = vunpack.c.l.bf16 %v1503
        %v1614 = vunpack.c.l.bf16 %v1504
        %v1615 = vunpack.c.h.bf16 %v1504
        %v1616 = vunpack.c.l.bf16 %v1505
        %v1617 = vunpack.c.l.bf16 %v1506
        %v1618 = vunpack.c.h.bf16 %v1506
        %v1619 = vunpack.c.l.bf16 %v1507
        %v1620 = vunpack.c.l.bf16 %v1508
        %v1621 = vunpack.c.h.bf16 %v1508
        %v1622 = vunpack.c.l.bf16 %v1509
        %v1623 = vunpack.c.l.bf16 %v1510
        %v1624 = vunpack.c.h.bf16 %v1510
        %v1625 = vunpack.c.l.bf16 %v1511
        %v1626 = vunpack.c.l.bf16 %v1512
        %v1627 = vunpack.c.h.bf16 %v1512
        %v1628 = vunpack.c.l.bf16 %v1513
        %v1629 = vunpack.c.l.bf16 %v1514
        %v1630 = vunpack.c.h.bf16 %v1514
        %v1631 = vunpack.c.l.bf16 %v1515
        %v1632 = vunpack.c.l.bf16 %v1516
        %v1633 = vunpack.c.h.bf16 %v1516
        %v1634 = vunpack.c.l.bf16 %v1517
        %v1635 = vunpack.c.l.bf16 %v1518
        %v1636 = vunpack.c.h.bf16 %v1518
        %v1637 = vunpack.c.l.bf16 %v1519
        %v1638 = vunpack.c.l.bf16 %v1520
        %v1639 = vunpack.c.h.bf16 %v1520
        %v1640 = vunpack.c.l.bf16 %v1521
        %v1641 = vunpack.c.l.bf16 %v1522
        %v1642 = vunpack.c.h.bf16 %v1522
        %v1643 = vunpack.c.l.bf16 %v1523
        %v1644 = vunpack.c.l.bf16 %v1524
        %v1645 = vunpack.c.h.bf16 %v1524
        %v1646 = vunpack.c.l.bf16 %v1525
        %v1647 = vunpack.c.l.bf16 %v1526
        %v1648 = vunpack.c.h.bf16 %v1526
        %v1649 = vunpack.c.l.bf16 %v1527
        %v1650 = vunpack.c.l.bf16 %v1528
        %v1651 = vunpack.c.h.bf16 %v1528
        %v1652 = vunpack.c.l.bf16 %v1529
        %v1653 = vunpack.c.l.bf16 %v1530
        %v1654 = vunpack.c.h.bf16 %v1530
        %v1655 = vunpack.c.l.bf16 %v1531
        %v1656 = vunpack.c.l.bf16 %v1532
        %v1657 = vunpack.c.h.bf16 %v1532
        %v1658 = vunpack.c.l.bf16 %v1533
        %v1659 = vunpack.c.l.bf16 %v1534
        %v1660 = vunpack.c.h.bf16 %v1534
        %v1661 = vunpack.c.l.bf16 %v1535
        %v1662 = vunpack.c.l.bf16 %v1536
        %v1663 = vunpack.c.h.bf16 %v1536
        %v1664 = vunpack.c.l.bf16 %v1537
        %v1665 = vunpack.c.l.bf16 %v1538
        %v1666 = vunpack.c.h.bf16 %v1538
        %v1667 = vunpack.c.l.bf16 %v1539
        %v1668 = vunpack.c.l.bf16 %v1540
        %v1669 = vunpack.c.h.bf16 %v1540
        %v1670 = vunpack.c.l.bf16 %v1541
        %v1671 = vunpack.c.l.bf16 %v1542
        %v1672 = vunpack.c.h.bf16 %v1542
        %v1673 = vunpack.c.l.bf16 %v1543
        %v1674 = vunpack.c.l.bf16 %v1544
        %v1675 = vunpack.c.h.bf16 %v1544
        %v1676 = vunpack.c.l.bf16 %v1545
        %v1677 = vunpack.c.l.bf16 %v1546
        %v1678 = vunpack.c.h.bf16 %v1546
        %v1679 = vunpack.c.l.bf16 %v1547
        %v1680 = vunpack.c.l.bf16 %v1548
        %v1681 = vunpack.c.h.bf16 %v1548
        %v1682 = vunpack.c.l.bf16 %v1549
        %v1683 = vunpack.c.l.bf16 %v1550
        %v1684 = vunpack.c.h.bf16 %v1550
        %v1685 = vunpack.c.l.bf16 %v1551
        %v1686 = vunpack.c.l.bf16 %v1552
        %v1687 = vunpack.c.h.bf16 %v1552
        %v1688 = vunpack.c.l.bf16 %v1553
        %v1689 = vunpack.c.l.bf16 %v1554
        %v1690 = vunpack.c.h.bf16 %v1554
        %v1691 = vunpack.c.l.bf16 %v1555
        %v1692 = vunpack.c.l.bf16 %v1556
        %v1693 = vunpack.c.h.bf16 %v1556
        %v1694 = vunpack.c.l.bf16 %v1557
        %v1695 = vunpack.c.l.bf16 %v1558
        %v1696 = vunpack.c.h.bf16 %v1558
        %v1697 = vunpack.c.l.bf16 %v1559
        %v1698 = vunpack.c.l.bf16 %v1560
        %v1699 = vunpack.c.h.bf16 %v1560
        %v1700 = vunpack.c.l.bf16 %v1561
        %v1701 = vunpack.c.l.bf16 %v1562
        %v1702 = vunpack.c.h.bf16 %v1562
        %v1703 = vunpack.c.l.bf16 %v1563
        %v1704 = vunpack.c.l.bf16 %v1564
        %v1705 = vunpack.c.h.bf16 %v1564
        %v1706 = vunpack.c.l.bf16 %v1565
        %v1707 = vunpack.c.l.bf16 %v1566
        %v1708 = vunpack.c.h.bf16 %v1566
        %v1709 = vunpack.c.l.bf16 %v1567
        %v1710 = vunpack.c.l.bf16 %v1568
        %v1711 = vunpack.c.h.bf16 %v1568
        %v1712 = vunpack.c.l.bf16 %v1569
        %v1713 = vunpack.c.l.bf16 %v1570
        %v1714 = vunpack.c.h.bf16 %v1570
        %v1715 = vunpack.c.l.bf16 %v1571
        %vm1716 = vcmask 523264
        %v1718 = vsel %vm1716, %v1452, 0
        %v1721 = vsel %vm1716, %v1453, 0
        %v1724 = vsel %vm1716, %v1454, 0
        %v1727 = vsel %vm1716, %v1455, 0
        %v1730 = vsel %vm1716, %v1456, 0
        %v1733 = vsel %vm1716, %v1457, 0
        %v1736 = vsel %vm1716, %v1458, 0
        %v1739 = vsel %vm1716, %v1459, 0
        %v1742 = vsel %vm1716, %v1460, 0
        %v1745 = vsel %vm1716, %v1461, 0
        %v1748 = vsel %vm1716, %v1462, 0
        %v1751 = vsel %vm1716, %v1463, 0
        %v1754 = vsel %vm1716, %v1464, 0
        %v1757 = vsel %vm1716, %v1465, 0
        %v1760 = vsel %vm1716, %v1466, 0
        %v1763 = vsel %vm1716, %v1467, 0
        %v1766 = vsel %vm1716, %v1468, 0
        %v1769 = vsel %vm1716, %v1469, 0
        %v1772 = vsel %vm1716, %v1470, 0
        %v1775 = vsel %vm1716, %v1471, 0
        %v1778 = vsel %vm1716, %v1472, 0
        %v1781 = vsel %vm1716, %v1473, 0
        %v1784 = vsel %vm1716, %v1474, 0
        %v1787 = vsel %vm1716, %v1475, 0
        %v1790 = vsel %vm1716, %v1428, 0
        %v1793 = vsel %vm1716, %v1429, 0
        %v1796 = vsel %vm1716, %v1430, 0
        %v1799 = vsel %vm1716, %v1431, 0
        %v1802 = vsel %vm1716, %v1432, 0
        %v1805 = vsel %vm1716, %v1433, 0
        %v1808 = vsel %vm1716, %v1434, 0
        %v1811 = vsel %vm1716, %v1435, 0
        %v1814 = vsel %vm1716, %v1436, 0
        %v1817 = vsel %vm1716, %v1437, 0
        %v1820 = vsel %vm1716, %v1438, 0
        %v1823 = vsel %vm1716, %v1439, 0
        %v1826 = vsel %vm1716, %v1440, 0
        %v1829 = vsel %vm1716, %v1441, 0
        %v1832 = vsel %vm1716, %v1442, 0
        %v1835 = vsel %vm1716, %v1443, 0
        %v1838 = vsel %vm1716, %v1444, 0
        %v1841 = vsel %vm1716, %v1445, 0
        %v1844 = vsel %vm1716, %v1446, 0
        %v1847 = vsel %vm1716, %v1447, 0
        %v1850 = vsel %vm1716, %v1448, 0
        %v1853 = vsel %vm1716, %v1449, 0
        %v1856 = vsel %vm1716, %v1450, 0
        %v1859 = vsel %vm1716, %v1451, 0
        %1861 = vmatprep.subr.bf16.mxu0 0
        %1862 = vmatpush1.bf16.xpose.msra.mxu0 %v1790
        %1863 = vmatprep.subr.bf16.mxu0 0
        %1864 = vmatpush1.bf16.xpose.msra.mxu0 %v1793
        %1865 = vmatprep.subr.bf16.mxu0 0
        %1866 = vmatpush1.bf16.xpose.msra.mxu0 %v1796
        %1867 = vmatprep.subr.bf16.mxu0 0
        %1868 = vmatpush1.bf16.xpose.msra.mxu0 %v1799
        %1869 = vmatprep.subr.bf16.mxu0 0
        %1870 = vmatpush1.bf16.xpose.msra.mxu0 %v1802
        %1871 = vmatprep.subr.bf16.mxu0 0
        %1872 = vmatpush1.bf16.xpose.msra.mxu0 %v1805
        %1873 = vmatprep.subr.bf16.mxu0 0
        %1874 = vmatpush1.bf16.xpose.msra.mxu0 %v1808
        %1875 = vmatprep.subr.bf16.mxu0 0
        %1876 = vmatpush1.bf16.xpose.msra.mxu0 %v1811
        %1877 = vmatprep.subr.bf16.mxu0 0
        %1878 = vmatpush1.bf16.xpose.msra.mxu0 %v1814
        %1879 = vmatprep.subr.bf16.mxu0 0
        %1880 = vmatpush1.bf16.xpose.msra.mxu0 %v1817
        %1881 = vmatprep.subr.bf16.mxu0 0
        %1882 = vmatpush1.bf16.xpose.msra.mxu0 %v1820
        %1883 = vmatprep.subr.bf16.mxu0 0
        %1884 = vmatpush1.bf16.xpose.msra.mxu0 %v1823
        %1885 = vmatprep.subr.bf16.mxu0 0
        %1886 = vmatpush1.bf16.xpose.msra.mxu0 %v1826
        %1887 = vmatprep.subr.bf16.mxu0 0
        %1888 = vmatpush1.bf16.xpose.msra.mxu0 %v1829
        %1889 = vmatprep.subr.bf16.mxu0 0
        %1890 = vmatpush1.bf16.xpose.msra.mxu0 %v1832
        %1891 = vmatprep.subr.bf16.mxu0 0
        %1892 = vmatpush1.bf16.xpose.msra.mxu0 %v1835
        %1893 = vmatprep.mubr.bf16.mxu0 0
        %1894 = vmatmul.mubr.bf16.gmra.mrb[0].mxu0 %v1718
        %v1895 = vpop.f32.mrb[0].mxu0
        %v1896 = vadd.f32 %v1572, %v1895
        %v1897 = vpop.f32.mrb[0].mxu0
        %v1898 = vadd.f32 %v1573, %v1897
        %v1899 = vpop.f32.mrb[0].mxu0
        %v1900 = vadd.f32 %v1575, %v1899
        %v1901 = vpop.f32.mrb[0].mxu0
        %v1902 = vadd.f32 %v1576, %v1901
        %1903 = vmatprep.mubr.bf16.mxu0 0
        %1904 = vmatmul.mubr.bf16.gmra.mrb[0].mxu0 %v1721
        %v1905 = vpop.f32.mrb[0].mxu0
        %v1906 = vadd.f32 %v1578, %v1905
        %v1907 = vpop.f32.mrb[0].mxu0
        %v1908 = vadd.f32 %v1579, %v1907
        %v1909 = vpop.f32.mrb[0].mxu0
        %v1910 = vadd.f32 %v1581, %v1909
        %v1911 = vpop.f32.mrb[0].mxu0
        %v1912 = vadd.f32 %v1582, %v1911
        %1913 = vmatprep.mubr.bf16.mxu0 0
        %1914 = vmatmul.mubr.bf16.gmra.mrb[0].mxu0 %v1724
        %v1915 = vpop.f32.mrb[0].mxu0
        %v1916 = vadd.f32 %v1584, %v1915
        %v1917 = vpop.f32.mrb[0].mxu0
        %v1918 = vadd.f32 %v1585, %v1917
        %v1919 = vpop.f32.mrb[0].mxu0
        %v1920 = vadd.f32 %v1587, %v1919
        %v1921 = vpop.f32.mrb[0].mxu0
        %v1922 = vadd.f32 %v1588, %v1921
        %1923 = vmatprep.mubr.bf16.mxu0 0
        %1924 = vmatmul.mubr.bf16.gmra.mrb[0].mxu0 %v1727
        %v1925 = vpop.f32.mrb[0].mxu0
        %v1926 = vadd.f32 %v1590, %v1925
        %v1927 = vpop.f32.mrb[0].mxu0
        %v1928 = vadd.f32 %v1591, %v1927
        %v1929 = vpop.f32.mrb[0].mxu0
        %v1930 = vadd.f32 %v1593, %v1929
        %v1931 = vpop.f32.mrb[0].mxu0
        %v1932 = vadd.f32 %v1594, %v1931
        %1933 = vmatprep.mubr.bf16.mxu0 0
        %1934 = vmatmul.mubr.bf16.gmra.mrb[0].mxu0 %v1730
        %v1935 = vpop.f32.mrb[0].mxu0
        %v1936 = vadd.f32 %v1596, %v1935
        %v1937 = vpop.f32.mrb[0].mxu0
        %v1938 = vadd.f32 %v1597, %v1937
        %v1939 = vpop.f32.mrb[0].mxu0
        %v1940 = vadd.f32 %v1599, %v1939
        %v1941 = vpop.f32.mrb[0].mxu0
        %v1942 = vadd.f32 %v1600, %v1941
        %1943 = vmatprep.mubr.bf16.mxu0 0
        %1944 = vmatmul.mubr.bf16.gmra.mrb[0].mxu0 %v1733
        %v1945 = vpop.f32.mrb[0].mxu0
        %v1946 = vadd.f32 %v1602, %v1945
        %v1947 = vpop.f32.mrb[0].mxu0
        %v1948 = vadd.f32 %v1603, %v1947
        %v1949 = vpop.f32.mrb[0].mxu0
        %v1950 = vadd.f32 %v1605, %v1949
        %v1951 = vpop.f32.mrb[0].mxu0
        %v1952 = vadd.f32 %v1606, %v1951
        %1953 = vmatprep.mubr.bf16.mxu0 0
        %1954 = vmatmul.mubr.bf16.gmra.mrb[0].mxu0 %v1736
        %v1955 = vpop.f32.mrb[0].mxu0
        %v1956 = vadd.f32 %v1608, %v1955
        %v1957 = vpop.f32.mrb[0].mxu0
        %v1958 = vadd.f32 %v1609, %v1957
        %v1959 = vpop.f32.mrb[0].mxu0
        %v1960 = vadd.f32 %v1611, %v1959
        %v1961 = vpop.f32.mrb[0].mxu0
        %v1962 = vadd.f32 %v1612, %v1961
        %1963 = vmatprep.mubr.bf16.mxu0 0
        %1964 = vmatmul.mubr.bf16.gmra.mrb[0].mxu0 %v1739
        %v1965 = vpop.f32.mrb[0].mxu0
        %v1966 = vadd.f32 %v1614, %v1965
        %v1967 = vpop.f32.mrb[0].mxu0
        %v1968 = vadd.f32 %v1615, %v1967
        %v1969 = vpop.f32.mrb[0].mxu0
        %v1970 = vadd.f32 %v1617, %v1969
        %v1971 = vpop.f32.mrb[0].mxu0
        %v1972 = vadd.f32 %v1618, %v1971
        %1973 = vmatprep.mubr.bf16.mxu0 0
        %1974 = vmatmul.mubr.bf16.gmra.mrb[0].mxu0 %v1742
        %v1975 = vpop.f32.mrb[0].mxu0
        %v1976 = vadd.f32 %v1620, %v1975
        %v1977 = vpop.f32.mrb[0].mxu0
        %v1978 = vadd.f32 %v1621, %v1977
        %v1979 = vpop.f32.mrb[0].mxu0
        %v1980 = vadd.f32 %v1623, %v1979
        %v1981 = vpop.f32.mrb[0].mxu0
        %v1982 = vadd.f32 %v1624, %v1981
        %1983 = vmatprep.mubr.bf16.mxu0 0
        %1984 = vmatmul.mubr.bf16.gmra.mrb[0].mxu0 %v1745
        %v1985 = vpop.f32.mrb[0].mxu0
        %v1986 = vadd.f32 %v1626, %v1985
        %v1987 = vpop.f32.mrb[0].mxu0
        %v1988 = vadd.f32 %v1627, %v1987
        %v1989 = vpop.f32.mrb[0].mxu0
        %v1990 = vadd.f32 %v1629, %v1989
        %v1991 = vpop.f32.mrb[0].mxu0
        %v1992 = vadd.f32 %v1630, %v1991
        %1993 = vmatprep.mubr.bf16.mxu0 0
        %1994 = vmatmul.mubr.bf16.gmra.mrb[0].mxu0 %v1748
        %v1995 = vpop.f32.mrb[0].mxu0
        %v1996 = vadd.f32 %v1632, %v1995
        %v1997 = vpop.f32.mrb[0].mxu0
        %v1998 = vadd.f32 %v1633, %v1997
        %v1999 = vpop.f32.mrb[0].mxu0
        %v2000 = vadd.f32 %v1635, %v1999
        %v2001 = vpop.f32.mrb[0].mxu0
        %v2002 = vadd.f32 %v1636, %v2001
        %2003 = vmatprep.mubr.bf16.mxu0 0
        %2004 = vmatmul.mubr.bf16.gmra.mrb[0].mxu0 %v1751
        %v2005 = vpop.f32.mrb[0].mxu0
        %v2006 = vadd.f32 %v1638, %v2005
        %v2007 = vpop.f32.mrb[0].mxu0
        %v2008 = vadd.f32 %v1639, %v2007
        %v2009 = vpop.f32.mrb[0].mxu0
        %v2010 = vadd.f32 %v1641, %v2009
        %v2011 = vpop.f32.mrb[0].mxu0
        %v2012 = vadd.f32 %v1642, %v2011
        %2013 = vmatprep.mubr.bf16.mxu0 0
        %2014 = vmatmul.mubr.bf16.gmra.mrb[0].mxu0 %v1754
        %v2015 = vpop.f32.mrb[0].mxu0
        %v2016 = vadd.f32 %v1644, %v2015
        %v2017 = vpop.f32.mrb[0].mxu0
        %v2018 = vadd.f32 %v1645, %v2017
        %v2019 = vpop.f32.mrb[0].mxu0
        %v2020 = vadd.f32 %v1647, %v2019
        %v2021 = vpop.f32.mrb[0].mxu0
        %v2022 = vadd.f32 %v1648, %v2021
        %2023 = vmatprep.mubr.bf16.mxu0 0
        %2024 = vmatmul.mubr.bf16.gmra.mrb[0].mxu0 %v1757
        %v2025 = vpop.f32.mrb[0].mxu0
        %v2026 = vadd.f32 %v1650, %v2025
        %v2027 = vpop.f32.mrb[0].mxu0
        %v2028 = vadd.f32 %v1651, %v2027
        %v2029 = vpop.f32.mrb[0].mxu0
        %v2030 = vadd.f32 %v1653, %v2029
        %v2031 = vpop.f32.mrb[0].mxu0
        %v2032 = vadd.f32 %v1654, %v2031
        %2033 = vmatprep.mubr.bf16.mxu0 0
        %2034 = vmatmul.mubr.bf16.gmra.mrb[0].mxu0 %v1760
        %v2035 = vpop.f32.mrb[0].mxu0
        %v2036 = vadd.f32 %v1656, %v2035
        %v2037 = vpop.f32.mrb[0].mxu0
        %v2038 = vadd.f32 %v1657, %v2037
        %v2039 = vpop.f32.mrb[0].mxu0
        %v2040 = vadd.f32 %v1659, %v2039
        %v2041 = vpop.f32.mrb[0].mxu0
        %v2042 = vadd.f32 %v1660, %v2041
        %2043 = vmatprep.mubr.bf16.mxu0 0
        %2044 = vmatmul.mubr.bf16.gmra.mrb[0].mxu0 %v1763
        %v2045 = vpop.f32.mrb[0].mxu0
        %v2046 = vadd.f32 %v1662, %v2045
        %v2047 = vpop.f32.mrb[0].mxu0
        %v2048 = vadd.f32 %v1663, %v2047
        %v2049 = vpop.f32.mrb[0].mxu0
        %v2050 = vadd.f32 %v1665, %v2049
        %v2051 = vpop.f32.mrb[0].mxu0
        %v2052 = vadd.f32 %v1666, %v2051
        %2053 = vmatprep.mubr.bf16.mxu0 0
        %2054 = vmatmul.mubr.bf16.gmra.mrb[0].mxu0 %v1766
        %v2055 = vpop.f32.mrb[0].mxu0
        %v2056 = vadd.f32 %v1668, %v2055
        %v2057 = vpop.f32.mrb[0].mxu0
        %v2058 = vadd.f32 %v1669, %v2057
        %v2059 = vpop.f32.mrb[0].mxu0
        %v2060 = vadd.f32 %v1671, %v2059
        %v2061 = vpop.f32.mrb[0].mxu0
        %v2062 = vadd.f32 %v1672, %v2061
        %2063 = vmatprep.mubr.bf16.mxu0 0
        %2064 = vmatmul.mubr.bf16.gmra.mrb[0].mxu0 %v1769
        %v2065 = vpop.f32.mrb[0].mxu0
        %v2066 = vadd.f32 %v1674, %v2065
        %v2067 = vpop.f32.mrb[0].mxu0
        %v2068 = vadd.f32 %v1675, %v2067
        %v2069 = vpop.f32.mrb[0].mxu0
        %v2070 = vadd.f32 %v1677, %v2069
        %v2071 = vpop.f32.mrb[0].mxu0
        %v2072 = vadd.f32 %v1678, %v2071
        %2073 = vmatprep.mubr.bf16.mxu0 0
        %2074 = vmatmul.mubr.bf16.gmra.mrb[0].mxu0 %v1772
        %v2075 = vpop.f32.mrb[0].mxu0
        %v2076 = vadd.f32 %v1680, %v2075
        %v2077 = vpop.f32.mrb[0].mxu0
        %v2078 = vadd.f32 %v1681, %v2077
        %v2079 = vpop.f32.mrb[0].mxu0
        %v2080 = vadd.f32 %v1683, %v2079
        %v2081 = vpop.f32.mrb[0].mxu0
        %v2082 = vadd.f32 %v1684, %v2081
        %2083 = vmatprep.mubr.bf16.mxu0 0
        %2084 = vmatmul.mubr.bf16.gmra.mrb[0].mxu0 %v1775
        %v2085 = vpop.f32.mrb[0].mxu0
        %v2086 = vadd.f32 %v1686, %v2085
        %v2087 = vpop.f32.mrb[0].mxu0
        %v2088 = vadd.f32 %v1687, %v2087
        %v2089 = vpop.f32.mrb[0].mxu0
        %v2090 = vadd.f32 %v1689, %v2089
        %v2091 = vpop.f32.mrb[0].mxu0
        %v2092 = vadd.f32 %v1690, %v2091
        %2093 = vmatprep.mubr.bf16.mxu0 0
        %2094 = vmatmul.mubr.bf16.gmra.mrb[0].mxu0 %v1778
        %v2095 = vpop.f32.mrb[0].mxu0
        %v2096 = vadd.f32 %v1692, %v2095
        %v2097 = vpop.f32.mrb[0].mxu0
        %v2098 = vadd.f32 %v1693, %v2097
        %v2099 = vpop.f32.mrb[0].mxu0
        %v2100 = vadd.f32 %v1695, %v2099
        %v2101 = vpop.f32.mrb[0].mxu0
        %v2102 = vadd.f32 %v1696, %v2101
        %2103 = vmatprep.mubr.bf16.mxu0 0
        %2104 = vmatmul.mubr.bf16.gmra.mrb[0].mxu0 %v1781
        %v2105 = vpop.f32.mrb[0].mxu0
        %v2106 = vadd.f32 %v1698, %v2105
        %v2107 = vpop.f32.mrb[0].mxu0
        %v2108 = vadd.f32 %v1699, %v2107
        %v2109 = vpop.f32.mrb[0].mxu0
        %v2110 = vadd.f32 %v1701, %v2109
        %v2111 = vpop.f32.mrb[0].mxu0
        %v2112 = vadd.f32 %v1702, %v2111
        %2113 = vmatprep.mubr.bf16.mxu0 0
        %2114 = vmatmul.mubr.bf16.gmra.mrb[0].mxu0 %v1784
        %v2115 = vpop.f32.mrb[0].mxu0
        %v2116 = vadd.f32 %v1704, %v2115
        %v2117 = vpop.f32.mrb[0].mxu0
        %v2118 = vadd.f32 %v1705, %v2117
        %v2119 = vpop.f32.mrb[0].mxu0
        %v2120 = vadd.f32 %v1707, %v2119
        %v2121 = vpop.f32.mrb[0].mxu0
        %v2122 = vadd.f32 %v1708, %v2121
        %2123 = vmatprep.mubr.bf16.mxu0 0
        %2124 = vmatmul.mubr.bf16.gmra.mrb[0].mxu0 %v1787
        %v2125 = vpop.f32.mrb[0].mxu0
        %v2126 = vadd.f32 %v1710, %v2125
        %v2127 = vpop.f32.mrb[0].mxu0
        %v2128 = vadd.f32 %v1711, %v2127
        %v2129 = vpop.f32.mrb[0].mxu0
        %v2130 = vadd.f32 %v1713, %v2129
        %v2131 = vpop.f32.mrb[0].mxu0
        %v2132 = vadd.f32 %v1714, %v2131
        %2133 = vdwg.mxu0
        %2134 = vmatprep.subr.bf16.mxu0 0
        %2135 = vmatpush1.bf16.xpose.msra.mxu0 %v1838
        %2136 = vmatprep.subr.bf16.mxu0 0
        %2137 = vmatpush1.bf16.xpose.msra.mxu0 %v1841
        %2138 = vmatprep.subr.bf16.mxu0 0
        %2139 = vmatpush1.bf16.xpose.msra.mxu0 %v1844
        %2140 = vmatprep.subr.bf16.mxu0 0
        %2141 = vmatpush1.bf16.xpose.msra.mxu0 %v1847
        %2142 = vmatprep.subr.bf16.mxu0 0
        %2143 = vmatpush1.bf16.xpose.msra.mxu0 %v1850
        %2144 = vmatprep.subr.bf16.mxu0 0
        %2145 = vmatpush1.bf16.xpose.msra.mxu0 %v1853
        %2146 = vmatprep.subr.bf16.mxu0 0
        %2147 = vmatpush1.bf16.xpose.msra.mxu0 %v1856
        %2148 = vmatprep.subr.bf16.mxu0 0
        %2149 = vmatpush1.bf16.xpose.msra.mxu0 %v1859
        %2150 = vmatprep.subr.bf16.mxu0 0
        %2151 = vmatpush1.bf16.xpose.msra.mxu0 0
        %2152 = vmatprep.subr.bf16.mxu0 0
        %2153 = vmatpush1.bf16.xpose.msra.mxu0 0
        %2154 = vmatprep.subr.bf16.mxu0 0
        %2155 = vmatpush1.bf16.xpose.msra.mxu0 0
        %2156 = vmatprep.subr.bf16.mxu0 0
        %2157 = vmatpush1.bf16.xpose.msra.mxu0 0
        %2158 = vmatprep.subr.bf16.mxu0 0
        %2159 = vmatpush1.bf16.xpose.msra.mxu0 0
        %2160 = vmatprep.subr.bf16.mxu0 0
        %2161 = vmatpush1.bf16.xpose.msra.mxu0 0
        %2162 = vmatprep.subr.bf16.mxu0 0
        %2163 = vmatpush1.bf16.xpose.msra.mxu0 0
        %2164 = vmatprep.subr.bf16.mxu0 0
        %2165 = vmatpush1.bf16.xpose.msra.mxu0 0
        %2166 = vmatprep.mubr.bf16.mxu0 0
        %2167 = vmatmul.mubr.bf16.gmra.mrb[0].mxu0 %v1718
        %v2168 = vpop.f32.mrb[0].mxu0
        %v2169 = vadd.f32 %v1574, %v2168
        %v2170 = vpop.f32.mrb[0].mxu0
        %v2171 = vpop.f32.mrb[0].mxu0
        %v2172 = vadd.f32 %v1577, %v2171
        %v2173 = vpop.f32.mrb[0].mxu0
        %2174 = vmatprep.mubr.bf16.mxu0 0
        %2175 = vmatmul.mubr.bf16.gmra.mrb[0].mxu0 %v1721
        %v2176 = vpop.f32.mrb[0].mxu0
        %v2177 = vadd.f32 %v1580, %v2176
        %v2178 = vpop.f32.mrb[0].mxu0
        %v2179 = vpop.f32.mrb[0].mxu0
        %v2180 = vadd.f32 %v1583, %v2179
        %v2181 = vpop.f32.mrb[0].mxu0
        %2182 = vmatprep.mubr.bf16.mxu0 0
        %2183 = vmatmul.mubr.bf16.gmra.mrb[0].mxu0 %v1724
        %v2184 = vpop.f32.mrb[0].mxu0
        %v2185 = vadd.f32 %v1586, %v2184
        %v2186 = vpop.f32.mrb[0].mxu0
        %v2187 = vpop.f32.mrb[0].mxu0
        %v2188 = vadd.f32 %v1589, %v2187
        %v2189 = vpop.f32.mrb[0].mxu0
        %2190 = vmatprep.mubr.bf16.mxu0 0
        %2191 = vmatmul.mubr.bf16.gmra.mrb[0].mxu0 %v1727
        %v2192 = vpop.f32.mrb[0].mxu0
        %v2193 = vadd.f32 %v1592, %v2192
        %v2194 = vpop.f32.mrb[0].mxu0
        %v2195 = vpop.f32.mrb[0].mxu0
        %v2196 = vadd.f32 %v1595, %v2195
        %v2197 = vpop.f32.mrb[0].mxu0
        %2198 = vmatprep.mubr.bf16.mxu0 0
        %2199 = vmatmul.mubr.bf16.gmra.mrb[0].mxu0 %v1730
        %v2200 = vpop.f32.mrb[0].mxu0
        %v2201 = vadd.f32 %v1598, %v2200
        %v2202 = vpop.f32.mrb[0].mxu0
        %v2203 = vpop.f32.mrb[0].mxu0
        %v2204 = vadd.f32 %v1601, %v2203
        %v2205 = vpop.f32.mrb[0].mxu0
        %2206 = vmatprep.mubr.bf16.mxu0 0
        %2207 = vmatmul.mubr.bf16.gmra.mrb[0].mxu0 %v1733
        %v2208 = vpop.f32.mrb[0].mxu0
        %v2209 = vadd.f32 %v1604, %v2208
        %v2210 = vpop.f32.mrb[0].mxu0
        %v2211 = vpop.f32.mrb[0].mxu0
        %v2212 = vadd.f32 %v1607, %v2211
        %v2213 = vpop.f32.mrb[0].mxu0
        %2214 = vmatprep.mubr.bf16.mxu0 0
        %2215 = vmatmul.mubr.bf16.gmra.mrb[0].mxu0 %v1736
        %v2216 = vpop.f32.mrb[0].mxu0
        %v2217 = vadd.f32 %v1610, %v2216
        %v2218 = vpop.f32.mrb[0].mxu0
        %v2219 = vpop.f32.mrb[0].mxu0
        %v2220 = vadd.f32 %v1613, %v2219
        %v2221 = vpop.f32.mrb[0].mxu0
        %2222 = vmatprep.mubr.bf16.mxu0 0
        %2223 = vmatmul.mubr.bf16.gmra.mrb[0].mxu0 %v1739
        %v2224 = vpop.f32.mrb[0].mxu0
        %v2225 = vadd.f32 %v1616, %v2224
        %v2226 = vpop.f32.mrb[0].mxu0
        %v2227 = vpop.f32.mrb[0].mxu0
        %v2228 = vadd.f32 %v1619, %v2227
        %v2229 = vpop.f32.mrb[0].mxu0
        %2230 = vmatprep.mubr.bf16.mxu0 0
        %2231 = vmatmul.mubr.bf16.gmra.mrb[0].mxu0 %v1742
        %v2232 = vpop.f32.mrb[0].mxu0
        %v2233 = vadd.f32 %v1622, %v2232
        %v2234 = vpop.f32.mrb[0].mxu0
        %v2235 = vpop.f32.mrb[0].mxu0
        %v2236 = vadd.f32 %v1625, %v2235
        %v2237 = vpop.f32.mrb[0].mxu0
        %2238 = vmatprep.mubr.bf16.mxu0 0
        %2239 = vmatmul.mubr.bf16.gmra.mrb[0].mxu0 %v1745
        %v2240 = vpop.f32.mrb[0].mxu0
        %v2241 = vadd.f32 %v1628, %v2240
        %v2242 = vpop.f32.mrb[0].mxu0
        %v2243 = vpop.f32.mrb[0].mxu0
        %v2244 = vadd.f32 %v1631, %v2243
        %v2245 = vpop.f32.mrb[0].mxu0
        %2246 = vmatprep.mubr.bf16.mxu0 0
        %2247 = vmatmul.mubr.bf16.gmra.mrb[0].mxu0 %v1748
        %v2248 = vpop.f32.mrb[0].mxu0
        %v2249 = vadd.f32 %v1634, %v2248
        %v2250 = vpop.f32.mrb[0].mxu0
        %v2251 = vpop.f32.mrb[0].mxu0
        %v2252 = vadd.f32 %v1637, %v2251
        %v2253 = vpop.f32.mrb[0].mxu0
        %2254 = vmatprep.mubr.bf16.mxu0 0
        %2255 = vmatmul.mubr.bf16.gmra.mrb[0].mxu0 %v1751
        %v2256 = vpop.f32.mrb[0].mxu0
        %v2257 = vadd.f32 %v1640, %v2256
        %v2258 = vpop.f32.mrb[0].mxu0
        %v2259 = vpop.f32.mrb[0].mxu0
        %v2260 = vadd.f32 %v1643, %v2259
        %v2261 = vpop.f32.mrb[0].mxu0
        %2262 = vmatprep.mubr.bf16.mxu0 0
        %2263 = vmatmul.mubr.bf16.gmra.mrb[0].mxu0 %v1754
        %v2264 = vpop.f32.mrb[0].mxu0
        %v2265 = vadd.f32 %v1646, %v2264
        %v2266 = vpop.f32.mrb[0].mxu0
        %v2267 = vpop.f32.mrb[0].mxu0
        %v2268 = vadd.f32 %v1649, %v2267
        %v2269 = vpop.f32.mrb[0].mxu0
        %2270 = vmatprep.mubr.bf16.mxu0 0
        %2271 = vmatmul.mubr.bf16.gmra.mrb[0].mxu0 %v1757
        %v2272 = vpop.f32.mrb[0].mxu0
        %v2273 = vadd.f32 %v1652, %v2272
        %v2274 = vpop.f32.mrb[0].mxu0
        %v2275 = vpop.f32.mrb[0].mxu0
        %v2276 = vadd.f32 %v1655, %v2275
        %v2277 = vpop.f32.mrb[0].mxu0
        %2278 = vmatprep.mubr.bf16.mxu0 0
        %2279 = vmatmul.mubr.bf16.gmra.mrb[0].mxu0 %v1760
        %v2280 = vpop.f32.mrb[0].mxu0
        %v2281 = vadd.f32 %v1658, %v2280
        %v2282 = vpop.f32.mrb[0].mxu0
        %v2283 = vpop.f32.mrb[0].mxu0
        %v2284 = vadd.f32 %v1661, %v2283
        %v2285 = vpop.f32.mrb[0].mxu0
        %2286 = vmatprep.mubr.bf16.mxu0 0
        %2287 = vmatmul.mubr.bf16.gmra.mrb[0].mxu0 %v1763
        %v2288 = vpop.f32.mrb[0].mxu0
        %v2289 = vadd.f32 %v1664, %v2288
        %v2290 = vpop.f32.mrb[0].mxu0
        %v2291 = vpop.f32.mrb[0].mxu0
        %v2292 = vadd.f32 %v1667, %v2291
        %v2293 = vpop.f32.mrb[0].mxu0
        %2294 = vmatprep.mubr.bf16.mxu0 0
        %2295 = vmatmul.mubr.bf16.gmra.mrb[0].mxu0 %v1766
        %v2296 = vpop.f32.mrb[0].mxu0
        %v2297 = vadd.f32 %v1670, %v2296
        %v2298 = vpop.f32.mrb[0].mxu0
        %v2299 = vpop.f32.mrb[0].mxu0
        %v2300 = vadd.f32 %v1673, %v2299
        %v2301 = vpop.f32.mrb[0].mxu0
        %2302 = vmatprep.mubr.bf16.mxu0 0
        %2303 = vmatmul.mubr.bf16.gmra.mrb[0].mxu0 %v1769
        %v2304 = vpop.f32.mrb[0].mxu0
        %v2305 = vadd.f32 %v1676, %v2304
        %v2306 = vpop.f32.mrb[0].mxu0
        %v2307 = vpop.f32.mrb[0].mxu0
        %v2308 = vadd.f32 %v1679, %v2307
        %v2309 = vpop.f32.mrb[0].mxu0
        %2310 = vmatprep.mubr.bf16.mxu0 0
        %2311 = vmatmul.mubr.bf16.gmra.mrb[0].mxu0 %v1772
        %v2312 = vpop.f32.mrb[0].mxu0
        %v2313 = vadd.f32 %v1682, %v2312
        %v2314 = vpop.f32.mrb[0].mxu0
        %v2315 = vpop.f32.mrb[0].mxu0
        %v2316 = vadd.f32 %v1685, %v2315
        %v2317 = vpop.f32.mrb[0].mxu0
        %2318 = vmatprep.mubr.bf16.mxu0 0
        %2319 = vmatmul.mubr.bf16.gmra.mrb[0].mxu0 %v1775
        %v2320 = vpop.f32.mrb[0].mxu0
        %v2321 = vadd.f32 %v1688, %v2320
        %v2322 = vpop.f32.mrb[0].mxu0
        %v2323 = vpop.f32.mrb[0].mxu0
        %v2324 = vadd.f32 %v1691, %v2323
        %v2325 = vpop.f32.mrb[0].mxu0
        %2326 = vmatprep.mubr.bf16.mxu0 0
        %2327 = vmatmul.mubr.bf16.gmra.mrb[0].mxu0 %v1778
        %v2328 = vpop.f32.mrb[0].mxu0
        %v2329 = vadd.f32 %v1694, %v2328
        %v2330 = vpop.f32.mrb[0].mxu0
        %v2331 = vpop.f32.mrb[0].mxu0
        %v2332 = vadd.f32 %v1697, %v2331
        %v2333 = vpop.f32.mrb[0].mxu0
        %2334 = vmatprep.mubr.bf16.mxu0 0
        %2335 = vmatmul.mubr.bf16.gmra.mrb[0].mxu0 %v1781
        %v2336 = vpop.f32.mrb[0].mxu0
        %v2337 = vadd.f32 %v1700, %v2336
        %v2338 = vpop.f32.mrb[0].mxu0
        %v2339 = vpop.f32.mrb[0].mxu0
        %v2340 = vadd.f32 %v1703, %v2339
        %v2341 = vpop.f32.mrb[0].mxu0
        %2342 = vmatprep.mubr.bf16.mxu0 0
        %2343 = vmatmul.mubr.bf16.gmra.mrb[0].mxu0 %v1784
        %v2344 = vpop.f32.mrb[0].mxu0
        %v2345 = vadd.f32 %v1706, %v2344
        %v2346 = vpop.f32.mrb[0].mxu0
        %v2347 = vpop.f32.mrb[0].mxu0
        %v2348 = vadd.f32 %v1709, %v2347
        %v2349 = vpop.f32.mrb[0].mxu0
        %2350 = vmatprep.mubr.bf16.mxu0 0
        %2351 = vmatmul.mubr.bf16.gmra.mrb[0].mxu0 %v1787
        %v2352 = vpop.f32.mrb[0].mxu0
        %v2353 = vadd.f32 %v1712, %v2352
        %v2354 = vpop.f32.mrb[0].mxu0
        %v2355 = vpop.f32.mrb[0].mxu0
        %v2356 = vadd.f32 %v1715, %v2355
        %v2357 = vpop.f32.mrb[0].mxu0
        %2358 = vdwg.mxu0
        %v2359 = vmax.f32 %v1896, %v1898
        %v2360 = vmax.f32 %v2359, %v2169
        %2361 = vmax.xlane.f32.xlu0 %v2360
        %v2362 = vpop.xlane.xlu0 %2361
        %v2363 = vmax.f32 %v1900, %v1902
        %v2364 = vmax.f32 %v2363, %v2172
        %2365 = vmax.xlane.f32.xlu0 %v2364
        %v2366 = vpop.xlane.xlu0 %2365
        %v2367 = vmax.f32 %v1906, %v1908
        %v2368 = vmax.f32 %v2367, %v2177
        %2369 = vmax.xlane.f32.xlu0 %v2368
        %v2370 = vpop.xlane.xlu0 %2369
        %v2371 = vmax.f32 %v1910, %v1912
        %v2372 = vmax.f32 %v2371, %v2180
        %2373 = vmax.xlane.f32.xlu0 %v2372
        %v2374 = vpop.xlane.xlu0 %2373
        %v2375 = vmax.f32 %v1916, %v1918
        %v2376 = vmax.f32 %v2375, %v2185
        %2377 = vmax.xlane.f32.xlu0 %v2376
        %v2378 = vpop.xlane.xlu0 %2377
        %v2379 = vmax.f32 %v1920, %v1922
        %v2380 = vmax.f32 %v2379, %v2188
        %2381 = vmax.xlane.f32.xlu0 %v2380
        %v2382 = vpop.xlane.xlu0 %2381
        %v2383 = vmax.f32 %v1926, %v1928
        %v2384 = vmax.f32 %v2383, %v2193
        %2385 = vmax.xlane.f32.xlu0 %v2384
        %v2386 = vpop.xlane.xlu0 %2385
        %v2387 = vmax.f32 %v1930, %v1932
        %v2388 = vmax.f32 %v2387, %v2196
        %2389 = vmax.xlane.f32.xlu0 %v2388
        %v2390 = vpop.xlane.xlu0 %2389
        %v2391 = vmax.f32 %v1936, %v1938
        %v2392 = vmax.f32 %v2391, %v2201
        %2393 = vmax.xlane.f32.xlu0 %v2392
        %v2394 = vpop.xlane.xlu0 %2393
        %v2395 = vmax.f32 %v1940, %v1942
        %v2396 = vmax.f32 %v2395, %v2204
        %2397 = vmax.xlane.f32.xlu0 %v2396
        %v2398 = vpop.xlane.xlu0 %2397
        %v2399 = vmax.f32 %v1946, %v1948
        %v2400 = vmax.f32 %v2399, %v2209
        %2401 = vmax.xlane.f32.xlu0 %v2400
        %v2402 = vpop.xlane.xlu0 %2401
        %v2403 = vmax.f32 %v1950, %v1952
        %v2404 = vmax.f32 %v2403, %v2212
        %2405 = vmax.xlane.f32.xlu0 %v2404
        %v2406 = vpop.xlane.xlu0 %2405
        %v2407 = vmax.f32 %v1956, %v1958
        %v2408 = vmax.f32 %v2407, %v2217
        %2409 = vmax.xlane.f32.xlu0 %v2408
        %v2410 = vpop.xlane.xlu0 %2409
        %v2411 = vmax.f32 %v1960, %v1962
        %v2412 = vmax.f32 %v2411, %v2220
        %2413 = vmax.xlane.f32.xlu0 %v2412
        %v2414 = vpop.xlane.xlu0 %2413
        %v2415 = vmax.f32 %v1966, %v1968
        %v2416 = vmax.f32 %v2415, %v2225
        %2417 = vmax.xlane.f32.xlu0 %v2416
        %v2418 = vpop.xlane.xlu0 %2417
        %v2419 = vmax.f32 %v1970, %v1972
        %v2420 = vmax.f32 %v2419, %v2228
        %2421 = vmax.xlane.f32.xlu0 %v2420
        %v2422 = vpop.xlane.xlu0 %2421
        %v2423 = vmax.f32 %v1976, %v1978
        %v2424 = vmax.f32 %v2423, %v2233
        %2425 = vmax.xlane.f32.xlu0 %v2424
        %v2426 = vpop.xlane.xlu0 %2425
        %v2427 = vmax.f32 %v1980, %v1982
        %v2428 = vmax.f32 %v2427, %v2236
        %2429 = vmax.xlane.f32.xlu0 %v2428
        %v2430 = vpop.xlane.xlu0 %2429
        %v2431 = vmax.f32 %v1986, %v1988
        %v2432 = vmax.f32 %v2431, %v2241
        %2433 = vmax.xlane.f32.xlu0 %v2432
        %v2434 = vpop.xlane.xlu0 %2433
        %v2435 = vmax.f32 %v1990, %v1992
        %v2436 = vmax.f32 %v2435, %v2244
        %2437 = vmax.xlane.f32.xlu0 %v2436
        %v2438 = vpop.xlane.xlu0 %2437
        %v2439 = vmax.f32 %v1996, %v1998
        %v2440 = vmax.f32 %v2439, %v2249
        %2441 = vmax.xlane.f32.xlu0 %v2440
        %v2442 = vpop.xlane.xlu0 %2441
        %v2443 = vmax.f32 %v2000, %v2002
        %v2444 = vmax.f32 %v2443, %v2252
        %2445 = vmax.xlane.f32.xlu0 %v2444
        %v2446 = vpop.xlane.xlu0 %2445
        %v2447 = vmax.f32 %v2006, %v2008
        %v2448 = vmax.f32 %v2447, %v2257
        %2449 = vmax.xlane.f32.xlu0 %v2448
        %v2450 = vpop.xlane.xlu0 %2449
        %v2451 = vmax.f32 %v2010, %v2012
        %v2452 = vmax.f32 %v2451, %v2260
        %2453 = vmax.xlane.f32.xlu0 %v2452
        %v2454 = vpop.xlane.xlu0 %2453
        %v2455 = vmax.f32 %v2016, %v2018
        %v2456 = vmax.f32 %v2455, %v2265
        %2457 = vmax.xlane.f32.xlu0 %v2456
        %v2458 = vpop.xlane.xlu0 %2457
        %v2459 = vmax.f32 %v2020, %v2022
        %v2460 = vmax.f32 %v2459, %v2268
        %2461 = vmax.xlane.f32.xlu0 %v2460
        %v2462 = vpop.xlane.xlu0 %2461
        %v2463 = vmax.f32 %v2026, %v2028
        %v2464 = vmax.f32 %v2463, %v2273
        %2465 = vmax.xlane.f32.xlu0 %v2464
        %v2466 = vpop.xlane.xlu0 %2465
        %v2467 = vmax.f32 %v2030, %v2032
        %v2468 = vmax.f32 %v2467, %v2276
        %2469 = vmax.xlane.f32.xlu0 %v2468
        %v2470 = vpop.xlane.xlu0 %2469
        %v2471 = vmax.f32 %v2036, %v2038
        %v2472 = vmax.f32 %v2471, %v2281
        %2473 = vmax.xlane.f32.xlu0 %v2472
        %v2474 = vpop.xlane.xlu0 %2473
        %v2475 = vmax.f32 %v2040, %v2042
        %v2476 = vmax.f32 %v2475, %v2284
        %2477 = vmax.xlane.f32.xlu0 %v2476
        %v2478 = vpop.xlane.xlu0 %2477
        %v2479 = vmax.f32 %v2046, %v2048
        %v2480 = vmax.f32 %v2479, %v2289
        %2481 = vmax.xlane.f32.xlu0 %v2480
        %v2482 = vpop.xlane.xlu0 %2481
        %v2483 = vmax.f32 %v2050, %v2052
        %v2484 = vmax.f32 %v2483, %v2292
        %2485 = vmax.xlane.f32.xlu0 %v2484
        %v2486 = vpop.xlane.xlu0 %2485
        %v2487 = vmax.f32 %v2056, %v2058
        %v2488 = vmax.f32 %v2487, %v2297
        %2489 = vmax.xlane.f32.xlu0 %v2488
        %v2490 = vpop.xlane.xlu0 %2489
        %v2491 = vmax.f32 %v2060, %v2062
        %v2492 = vmax.f32 %v2491, %v2300
        %2493 = vmax.xlane.f32.xlu0 %v2492
        %v2494 = vpop.xlane.xlu0 %2493
        %v2495 = vmax.f32 %v2066, %v2068
        %v2496 = vmax.f32 %v2495, %v2305
        %2497 = vmax.xlane.f32.xlu0 %v2496
        %v2498 = vpop.xlane.xlu0 %2497
        %v2499 = vmax.f32 %v2070, %v2072
        %v2500 = vmax.f32 %v2499, %v2308
        %2501 = vmax.xlane.f32.xlu0 %v2500
        %v2502 = vpop.xlane.xlu0 %2501
        %v2503 = vmax.f32 %v2076, %v2078
        %v2504 = vmax.f32 %v2503, %v2313
        %2505 = vmax.xlane.f32.xlu0 %v2504
        %v2506 = vpop.xlane.xlu0 %2505
        %v2507 = vmax.f32 %v2080, %v2082
        %v2508 = vmax.f32 %v2507, %v2316
        %2509 = vmax.xlane.f32.xlu0 %v2508
        %v2510 = vpop.xlane.xlu0 %2509
        %v2511 = vmax.f32 %v2086, %v2088
        %v2512 = vmax.f32 %v2511, %v2321
        %2513 = vmax.xlane.f32.xlu0 %v2512
        %v2514 = vpop.xlane.xlu0 %2513
        %v2515 = vmax.f32 %v2090, %v2092
        %v2516 = vmax.f32 %v2515, %v2324
        %2517 = vmax.xlane.f32.xlu0 %v2516
        %v2518 = vpop.xlane.xlu0 %2517
        %v2519 = vmax.f32 %v2096, %v2098
        %v2520 = vmax.f32 %v2519, %v2329
        %2521 = vmax.xlane.f32.xlu0 %v2520
        %v2522 = vpop.xlane.xlu0 %2521
        %v2523 = vmax.f32 %v2100, %v2102
        %v2524 = vmax.f32 %v2523, %v2332
        %2525 = vmax.xlane.f32.xlu0 %v2524
        %v2526 = vpop.xlane.xlu0 %2525
        %v2527 = vmax.f32 %v2106, %v2108
        %v2528 = vmax.f32 %v2527, %v2337
        %2529 = vmax.xlane.f32.xlu0 %v2528
        %v2530 = vpop.xlane.xlu0 %2529
        %v2531 = vmax.f32 %v2110, %v2112
        %v2532 = vmax.f32 %v2531, %v2340
        %2533 = vmax.xlane.f32.xlu0 %v2532
        %v2534 = vpop.xlane.xlu0 %2533
        %v2535 = vmax.f32 %v2116, %v2118
        %v2536 = vmax.f32 %v2535, %v2345
        %2537 = vmax.xlane.f32.xlu0 %v2536
        %v2538 = vpop.xlane.xlu0 %2537
        %v2539 = vmax.f32 %v2120, %v2122
        %v2540 = vmax.f32 %v2539, %v2348
        %2541 = vmax.xlane.f32.xlu0 %v2540
        %v2542 = vpop.xlane.xlu0 %2541
        %v2543 = vmax.f32 %v2126, %v2128
        %v2544 = vmax.f32 %v2543, %v2353
        %2545 = vmax.xlane.f32.xlu0 %v2544
        %v2546 = vpop.xlane.xlu0 %2545
        %v2547 = vmax.f32 %v2130, %v2132
        %v2548 = vmax.f32 %v2547, %v2356
        %2549 = vmax.xlane.f32.xlu0 %v2548
        %v2550 = vpop.xlane.xlu0 %2549
        %v2551 = vsub.f32 %v1896, %v2362
        %v2552 = vsub.f32 %v1898, %v2362
        %v2553 = vsub.f32 %v2169, %v2362
        %v2554 = vsub.f32 %v1900, %v2366
        %v2555 = vsub.f32 %v1902, %v2366
        %v2556 = vsub.f32 %v2172, %v2366
        %v2557 = vsub.f32 %v1906, %v2370
        %v2558 = vsub.f32 %v1908, %v2370
        %v2559 = vsub.f32 %v2177, %v2370
        %v2560 = vsub.f32 %v1910, %v2374
        %v2561 = vsub.f32 %v1912, %v2374
        %v2562 = vsub.f32 %v2180, %v2374
        %v2563 = vsub.f32 %v1916, %v2378
        %v2564 = vsub.f32 %v1918, %v2378
        %v2565 = vsub.f32 %v2185, %v2378
        %v2566 = vsub.f32 %v1920, %v2382
        %v2567 = vsub.f32 %v1922, %v2382
        %v2568 = vsub.f32 %v2188, %v2382
        %v2569 = vsub.f32 %v1926, %v2386
        %v2570 = vsub.f32 %v1928, %v2386
        %v2571 = vsub.f32 %v2193, %v2386
        %v2572 = vsub.f32 %v1930, %v2390
        %v2573 = vsub.f32 %v1932, %v2390
        %v2574 = vsub.f32 %v2196, %v2390
        %v2575 = vsub.f32 %v1936, %v2394
        %v2576 = vsub.f32 %v1938, %v2394
        %v2577 = vsub.f32 %v2201, %v2394
        %v2578 = vsub.f32 %v1940, %v2398
        %v2579 = vsub.f32 %v1942, %v2398
        %v2580 = vsub.f32 %v2204, %v2398
        %v2581 = vsub.f32 %v1946, %v2402
        %v2582 = vsub.f32 %v1948, %v2402
        %v2583 = vsub.f32 %v2209, %v2402
        %v2584 = vsub.f32 %v1950, %v2406
        %v2585 = vsub.f32 %v1952, %v2406
        %v2586 = vsub.f32 %v2212, %v2406
        %v2587 = vsub.f32 %v1956, %v2410
        %v2588 = vsub.f32 %v1958, %v2410
        %v2589 = vsub.f32 %v2217, %v2410
        %v2590 = vsub.f32 %v1960, %v2414
        %v2591 = vsub.f32 %v1962, %v2414
        %v2592 = vsub.f32 %v2220, %v2414
        %v2593 = vsub.f32 %v1966, %v2418
        %v2594 = vsub.f32 %v1968, %v2418
        %v2595 = vsub.f32 %v2225, %v2418
        %v2596 = vsub.f32 %v1970, %v2422
        %v2597 = vsub.f32 %v1972, %v2422
        %v2598 = vsub.f32 %v2228, %v2422
        %v2599 = vsub.f32 %v1976, %v2426
        %v2600 = vsub.f32 %v1978, %v2426
        %v2601 = vsub.f32 %v2233, %v2426
        %v2602 = vsub.f32 %v1980, %v2430
        %v2603 = vsub.f32 %v1982, %v2430
        %v2604 = vsub.f32 %v2236, %v2430
        %v2605 = vsub.f32 %v1986, %v2434
        %v2606 = vsub.f32 %v1988, %v2434
        %v2607 = vsub.f32 %v2241, %v2434
        %v2608 = vsub.f32 %v1990, %v2438
        %v2609 = vsub.f32 %v1992, %v2438
        %v2610 = vsub.f32 %v2244, %v2438
        %v2611 = vsub.f32 %v1996, %v2442
        %v2612 = vsub.f32 %v1998, %v2442
        %v2613 = vsub.f32 %v2249, %v2442
        %v2614 = vsub.f32 %v2000, %v2446
        %v2615 = vsub.f32 %v2002, %v2446
        %v2616 = vsub.f32 %v2252, %v2446
        %v2617 = vsub.f32 %v2006, %v2450
        %v2618 = vsub.f32 %v2008, %v2450
        %v2619 = vsub.f32 %v2257, %v2450
        %v2620 = vsub.f32 %v2010, %v2454
        %v2621 = vsub.f32 %v2012, %v2454
        %v2622 = vsub.f32 %v2260, %v2454
        %v2623 = vsub.f32 %v2016, %v2458
        %v2624 = vsub.f32 %v2018, %v2458
        %v2625 = vsub.f32 %v2265, %v2458
        %v2626 = vsub.f32 %v2020, %v2462
        %v2627 = vsub.f32 %v2022, %v2462
        %v2628 = vsub.f32 %v2268, %v2462
        %v2629 = vsub.f32 %v2026, %v2466
        %v2630 = vsub.f32 %v2028, %v2466
        %v2631 = vsub.f32 %v2273, %v2466
        %v2632 = vsub.f32 %v2030, %v2470
        %v2633 = vsub.f32 %v2032, %v2470
        %v2634 = vsub.f32 %v2276, %v2470
        %v2635 = vsub.f32 %v2036, %v2474
        %v2636 = vsub.f32 %v2038, %v2474
        %v2637 = vsub.f32 %v2281, %v2474
        %v2638 = vsub.f32 %v2040, %v2478
        %v2639 = vsub.f32 %v2042, %v2478
        %v2640 = vsub.f32 %v2284, %v2478
        %v2641 = vsub.f32 %v2046, %v2482
        %v2642 = vsub.f32 %v2048, %v2482
        %v2643 = vsub.f32 %v2289, %v2482
        %v2644 = vsub.f32 %v2050, %v2486
        %v2645 = vsub.f32 %v2052, %v2486
        %v2646 = vsub.f32 %v2292, %v2486
        %v2647 = vsub.f32 %v2056, %v2490
        %v2648 = vsub.f32 %v2058, %v2490
        %v2649 = vsub.f32 %v2297, %v2490
        %v2650 = vsub.f32 %v2060, %v2494
        %v2651 = vsub.f32 %v2062, %v2494
        %v2652 = vsub.f32 %v2300, %v2494
        %v2653 = vsub.f32 %v2066, %v2498
        %v2654 = vsub.f32 %v2068, %v2498
        %v2655 = vsub.f32 %v2305, %v2498
        %v2656 = vsub.f32 %v2070, %v2502
        %v2657 = vsub.f32 %v2072, %v2502
        %v2658 = vsub.f32 %v2308, %v2502
        %v2659 = vsub.f32 %v2076, %v2506
        %v2660 = vsub.f32 %v2078, %v2506
        %v2661 = vsub.f32 %v2313, %v2506
        %v2662 = vsub.f32 %v2080, %v2510
        %v2663 = vsub.f32 %v2082, %v2510
        %v2664 = vsub.f32 %v2316, %v2510
        %v2665 = vsub.f32 %v2086, %v2514
        %v2666 = vsub.f32 %v2088, %v2514
        %v2667 = vsub.f32 %v2321, %v2514
        %v2668 = vsub.f32 %v2090, %v2518
        %v2669 = vsub.f32 %v2092, %v2518
        %v2670 = vsub.f32 %v2324, %v2518
        %v2671 = vsub.f32 %v2096, %v2522
        %v2672 = vsub.f32 %v2098, %v2522
        %v2673 = vsub.f32 %v2329, %v2522
        %v2674 = vsub.f32 %v2100, %v2526
        %v2675 = vsub.f32 %v2102, %v2526
        %v2676 = vsub.f32 %v2332, %v2526
        %v2677 = vsub.f32 %v2106, %v2530
        %v2678 = vsub.f32 %v2108, %v2530
        %v2679 = vsub.f32 %v2337, %v2530
        %v2680 = vsub.f32 %v2110, %v2534
        %v2681 = vsub.f32 %v2112, %v2534
        %v2682 = vsub.f32 %v2340, %v2534
        %v2683 = vsub.f32 %v2116, %v2538
        %v2684 = vsub.f32 %v2118, %v2538
        %v2685 = vsub.f32 %v2345, %v2538
        %v2686 = vsub.f32 %v2120, %v2542
        %v2687 = vsub.f32 %v2122, %v2542
        %v2688 = vsub.f32 %v2348, %v2542
        %v2689 = vsub.f32 %v2126, %v2546
        %v2690 = vsub.f32 %v2128, %v2546
        %v2691 = vsub.f32 %v2353, %v2546
        %v2692 = vsub.f32 %v2130, %v2550
        %v2693 = vsub.f32 %v2132, %v2550
        %v2694 = vsub.f32 %v2356, %v2550
        %v2695 = vpack.c.bf16 %v2554, %v2551
        %v2696 = vpack.c.bf16 %v2555, %v2552
        %v2697 = vpack.c.bf16 %v2556, %v2553
        %v2698 = vpack.c.bf16 %v2560, %v2557
        %v2699 = vpack.c.bf16 %v2561, %v2558
        %v2700 = vpack.c.bf16 %v2562, %v2559
        %v2701 = vpack.c.bf16 %v2566, %v2563
        %v2702 = vpack.c.bf16 %v2567, %v2564
        %v2703 = vpack.c.bf16 %v2568, %v2565
        %v2704 = vpack.c.bf16 %v2572, %v2569
        %v2705 = vpack.c.bf16 %v2573, %v2570
        %v2706 = vpack.c.bf16 %v2574, %v2571
        %v2707 = vpack.c.bf16 %v2578, %v2575
        %v2708 = vpack.c.bf16 %v2579, %v2576
        %v2709 = vpack.c.bf16 %v2580, %v2577
        %v2710 = vpack.c.bf16 %v2584, %v2581
        %v2711 = vpack.c.bf16 %v2585, %v2582
        %v2712 = vpack.c.bf16 %v2586, %v2583
        %v2713 = vpack.c.bf16 %v2590, %v2587
        %v2714 = vpack.c.bf16 %v2591, %v2588
        %v2715 = vpack.c.bf16 %v2592, %v2589
        %v2716 = vpack.c.bf16 %v2596, %v2593
        %v2717 = vpack.c.bf16 %v2597, %v2594
        %v2718 = vpack.c.bf16 %v2598, %v2595
        %v2719 = vpack.c.bf16 %v2602, %v2599
        %v2720 = vpack.c.bf16 %v2603, %v2600
        %v2721 = vpack.c.bf16 %v2604, %v2601
        %v2722 = vpack.c.bf16 %v2608, %v2605
        %v2723 = vpack.c.bf16 %v2609, %v2606
        %v2724 = vpack.c.bf16 %v2610, %v2607
        %v2725 = vpack.c.bf16 %v2614, %v2611
        %v2726 = vpack.c.bf16 %v2615, %v2612
        %v2727 = vpack.c.bf16 %v2616, %v2613
        %v2728 = vpack.c.bf16 %v2620, %v2617
        %v2729 = vpack.c.bf16 %v2621, %v2618
        %v2730 = vpack.c.bf16 %v2622, %v2619
        %v2731 = vpack.c.bf16 %v2626, %v2623
        %v2732 = vpack.c.bf16 %v2627, %v2624
        %v2733 = vpack.c.bf16 %v2628, %v2625
        %v2734 = vpack.c.bf16 %v2632, %v2629
        %v2735 = vpack.c.bf16 %v2633, %v2630
        %v2736 = vpack.c.bf16 %v2634, %v2631
        %v2737 = vpack.c.bf16 %v2638, %v2635
        %v2738 = vpack.c.bf16 %v2639, %v2636
        %v2739 = vpack.c.bf16 %v2640, %v2637
        %v2740 = vpack.c.bf16 %v2644, %v2641
        %v2741 = vpack.c.bf16 %v2645, %v2642
        %v2742 = vpack.c.bf16 %v2646, %v2643
        %v2743 = vpack.c.bf16 %v2650, %v2647
        %v2744 = vpack.c.bf16 %v2651, %v2648
        %v2745 = vpack.c.bf16 %v2652, %v2649
        %v2746 = vpack.c.bf16 %v2656, %v2653
        %v2747 = vpack.c.bf16 %v2657, %v2654
        %v2748 = vpack.c.bf16 %v2658, %v2655
        %v2749 = vpack.c.bf16 %v2662, %v2659
        %v2750 = vpack.c.bf16 %v2663, %v2660
        %v2751 = vpack.c.bf16 %v2664, %v2661
        %v2752 = vpack.c.bf16 %v2668, %v2665
        %v2753 = vpack.c.bf16 %v2669, %v2666
        %v2754 = vpack.c.bf16 %v2670, %v2667
        %v2755 = vpack.c.bf16 %v2674, %v2671
        %v2756 = vpack.c.bf16 %v2675, %v2672
        %v2757 = vpack.c.bf16 %v2676, %v2673
        %v2758 = vpack.c.bf16 %v2680, %v2677
        %v2759 = vpack.c.bf16 %v2681, %v2678
        %v2760 = vpack.c.bf16 %v2682, %v2679
        %v2761 = vpack.c.bf16 %v2686, %v2683
        %v2762 = vpack.c.bf16 %v2687, %v2684
        %v2763 = vpack.c.bf16 %v2688, %v2685
        %v2764 = vpack.c.bf16 %v2692, %v2689
        %v2765 = vpack.c.bf16 %v2693, %v2690
        %v2766 = vpack.c.bf16 %v2694, %v2691
        %v2768 = vmul.bf16 %v2695, 1069105081
        %v2769 = vpow.bf16.pop %v2768
        %v2771 = vmul.bf16 %v2696, 1069105081
        %v2772 = vpow.bf16.pop %v2771
        %v2774 = vmul.bf16 %v2697, 1069105081
        %v2775 = vpow.bf16.pop %v2774
        %v2777 = vmul.bf16 %v2698, 1069105081
        %v2778 = vpow.bf16.pop %v2777
        %v2780 = vmul.bf16 %v2699, 1069105081
        %v2781 = vpow.bf16.pop %v2780
        %v2783 = vmul.bf16 %v2700, 1069105081
        %v2784 = vpow.bf16.pop %v2783
        %v2786 = vmul.bf16 %v2701, 1069105081
        %v2787 = vpow.bf16.pop %v2786
        %v2789 = vmul.bf16 %v2702, 1069105081
        %v2790 = vpow.bf16.pop %v2789
        %v2792 = vmul.bf16 %v2703, 1069105081
        %v2793 = vpow.bf16.pop %v2792
        %v2795 = vmul.bf16 %v2704, 1069105081
        %v2796 = vpow.bf16.pop %v2795
        %v2798 = vmul.bf16 %v2705, 1069105081
        %v2799 = vpow.bf16.pop %v2798
        %v2801 = vmul.bf16 %v2706, 1069105081
        %v2802 = vpow.bf16.pop %v2801
        %v2804 = vmul.bf16 %v2707, 1069105081
        %v2805 = vpow.bf16.pop %v2804
        %v2807 = vmul.bf16 %v2708, 1069105081
        %v2808 = vpow.bf16.pop %v2807
        %v2810 = vmul.bf16 %v2709, 1069105081
        %v2811 = vpow.bf16.pop %v2810
        %v2813 = vmul.bf16 %v2710, 1069105081
        %v2814 = vpow.bf16.pop %v2813
        %v2816 = vmul.bf16 %v2711, 1069105081
        %v2817 = vpow.bf16.pop %v2816
        %v2819 = vmul.bf16 %v2712, 1069105081
        %v2820 = vpow.bf16.pop %v2819
        %v2822 = vmul.bf16 %v2713, 1069105081
        %v2823 = vpow.bf16.pop %v2822
        %v2825 = vmul.bf16 %v2714, 1069105081
        %v2826 = vpow.bf16.pop %v2825
        %v2828 = vmul.bf16 %v2715, 1069105081
        %v2829 = vpow.bf16.pop %v2828
        %v2831 = vmul.bf16 %v2716, 1069105081
        %v2832 = vpow.bf16.pop %v2831
        %v2834 = vmul.bf16 %v2717, 1069105081
        %v2835 = vpow.bf16.pop %v2834
        %v2837 = vmul.bf16 %v2718, 1069105081
        %v2838 = vpow.bf16.pop %v2837
        %v2840 = vmul.bf16 %v2719, 1069105081
        %v2841 = vpow.bf16.pop %v2840
        %v2843 = vmul.bf16 %v2720, 1069105081
        %v2844 = vpow.bf16.pop %v2843
        %v2846 = vmul.bf16 %v2721, 1069105081
        %v2847 = vpow.bf16.pop %v2846
        %v2849 = vmul.bf16 %v2722, 1069105081
        %v2850 = vpow.bf16.pop %v2849
        %v2852 = vmul.bf16 %v2723, 1069105081
        %v2853 = vpow.bf16.pop %v2852
        %v2855 = vmul.bf16 %v2724, 1069105081
        %v2856 = vpow.bf16.pop %v2855
        %v2858 = vmul.bf16 %v2725, 1069105081
        %v2859 = vpow.bf16.pop %v2858
        %v2861 = vmul.bf16 %v2726, 1069105081
        %v2862 = vpow.bf16.pop %v2861
        %v2864 = vmul.bf16 %v2727, 1069105081
        %v2865 = vpow.bf16.pop %v2864
        %v2867 = vmul.bf16 %v2728, 1069105081
        %v2868 = vpow.bf16.pop %v2867
        %v2870 = vmul.bf16 %v2729, 1069105081
        %v2871 = vpow.bf16.pop %v2870
        %v2873 = vmul.bf16 %v2730, 1069105081
        %v2874 = vpow.bf16.pop %v2873
        %v2876 = vmul.bf16 %v2731, 1069105081
        %v2877 = vpow.bf16.pop %v2876
        %v2879 = vmul.bf16 %v2732, 1069105081
        %v2880 = vpow.bf16.pop %v2879
        %v2882 = vmul.bf16 %v2733, 1069105081
        %v2883 = vpow.bf16.pop %v2882
        %v2885 = vmul.bf16 %v2734, 1069105081
        %v2886 = vpow.bf16.pop %v2885
        %v2888 = vmul.bf16 %v2735, 1069105081
        %v2889 = vpow.bf16.pop %v2888
        %v2891 = vmul.bf16 %v2736, 1069105081
        %v2892 = vpow.bf16.pop %v2891
        %v2894 = vmul.bf16 %v2737, 1069105081
        %v2895 = vpow.bf16.pop %v2894
        %v2897 = vmul.bf16 %v2738, 1069105081
        %v2898 = vpow.bf16.pop %v2897
        %v2900 = vmul.bf16 %v2739, 1069105081
        %v2901 = vpow.bf16.pop %v2900
        %v2903 = vmul.bf16 %v2740, 1069105081
        %v2904 = vpow.bf16.pop %v2903
        %v2906 = vmul.bf16 %v2741, 1069105081
        %v2907 = vpow.bf16.pop %v2906
        %v2909 = vmul.bf16 %v2742, 1069105081
        %v2910 = vpow.bf16.pop %v2909
        %v2912 = vmul.bf16 %v2743, 1069105081
        %v2913 = vpow.bf16.pop %v2912
        %v2915 = vmul.bf16 %v2744, 1069105081
        %v2916 = vpow.bf16.pop %v2915
        %v2918 = vmul.bf16 %v2745, 1069105081
        %v2919 = vpow.bf16.pop %v2918
        %v2921 = vmul.bf16 %v2746, 1069105081
        %v2922 = vpow.bf16.pop %v2921
        %v2924 = vmul.bf16 %v2747, 1069105081
        %v2925 = vpow.bf16.pop %v2924
        %v2927 = vmul.bf16 %v2748, 1069105081
        %v2928 = vpow.bf16.pop %v2927
        %v2930 = vmul.bf16 %v2749, 1069105081
        %v2931 = vpow.bf16.pop %v2930
        %v2933 = vmul.bf16 %v2750, 1069105081
        %v2934 = vpow.bf16.pop %v2933
        %v2936 = vmul.bf16 %v2751, 1069105081
        %v2937 = vpow.bf16.pop %v2936
        %v2939 = vmul.bf16 %v2752, 1069105081
        %v2940 = vpow.bf16.pop %v2939
        %v2942 = vmul.bf16 %v2753, 1069105081
        %v2943 = vpow.bf16.pop %v2942
        %v2945 = vmul.bf16 %v2754, 1069105081
        %v2946 = vpow.bf16.pop %v2945
        %v2948 = vmul.bf16 %v2755, 1069105081
        %v2949 = vpow.bf16.pop %v2948
        %v2951 = vmul.bf16 %v2756, 1069105081
        %v2952 = vpow.bf16.pop %v2951
        %v2954 = vmul.bf16 %v2757, 1069105081
        %v2955 = vpow.bf16.pop %v2954
        %v2957 = vmul.bf16 %v2758, 1069105081
        %v2958 = vpow.bf16.pop %v2957
        %v2960 = vmul.bf16 %v2759, 1069105081
        %v2961 = vpow.bf16.pop %v2960
        %v2963 = vmul.bf16 %v2760, 1069105081
        %v2964 = vpow.bf16.pop %v2963
        %v2966 = vmul.bf16 %v2761, 1069105081
        %v2967 = vpow.bf16.pop %v2966
        %v2969 = vmul.bf16 %v2762, 1069105081
        %v2970 = vpow.bf16.pop %v2969
        %v2972 = vmul.bf16 %v2763, 1069105081
        %v2973 = vpow.bf16.pop %v2972
        %v2975 = vmul.bf16 %v2764, 1069105081
        %v2976 = vpow.bf16.pop %v2975
        %v2978 = vmul.bf16 %v2765, 1069105081
        %v2979 = vpow.bf16.pop %v2978
        %v2981 = vmul.bf16 %v2766, 1069105081
        %v2982 = vpow.bf16.pop %v2981
        %vm2983 = vcmp.eq.s32.totalorder %v1388, 64
        %vm2984 = vmor %vm1394, %vm2983
        %v2985 = vld [vmem:[#allocation5] sm:$0xff]
        %v2986 = vld [vmem:[#allocation5 + $0x8] sm:$0xff]
        %v2987 = vld [vmem:[#allocation5 + $0x10] sm:$0xff]
        %v2988 = vld [vmem:[#allocation5 + $0x18] sm:$0xff]
        %v2989 = vld [vmem:[#allocation5 + $0x20] sm:$0xff]
        %v2990 = vld [vmem:[#allocation5 + $0x28] sm:$0xff]
        %v2991 = vld [vmem:[#allocation5 + $0x30] sm:$0xff]
        %v2992 = vld [vmem:[#allocation5 + $0x38] sm:$0xff]
        %v2993 = vld [vmem:[#allocation5 + $0x40] sm:$0xff]
        %v2994 = vld [vmem:[#allocation5 + $0x48] sm:$0xff]
        %v2995 = vld [vmem:[#allocation5 + $0x50] sm:$0xff]
        %v2996 = vld [vmem:[#allocation5 + $0x58] sm:$0xff]
        %v2997 = vld [vmem:[#allocation5 + $0x60] sm:$0xff]
        %v2998 = vld [vmem:[#allocation5 + $0x68] sm:$0xff]
        %v2999 = vld [vmem:[#allocation5 + $0x70] sm:$0xff]
        %v3000 = vld [vmem:[#allocation5 + $0x78] sm:$0xff]
        %v3001 = vld [vmem:[#allocation5 + $0x80] sm:$0xff]
        %v3002 = vld [vmem:[#allocation5 + $0x88] sm:$0xff]
        %v3003 = vld [vmem:[#allocation5 + $0x90] sm:$0xff]
        %v3004 = vld [vmem:[#allocation5 + $0x98] sm:$0xff]
        %v3005 = vld [vmem:[#allocation5 + $0xa0] sm:$0xff]
        %v3006 = vld [vmem:[#allocation5 + $0xa8] sm:$0xff]
        %v3007 = vld [vmem:[#allocation5 + $0xb0] sm:$0xff]
        %v3008 = vld [vmem:[#allocation5 + $0xb8] sm:$0xff]
        %v3009 = vsel %vm2984, 1, 0
        %vm3010 = vcmp.eq.s32.totalorder %v3009, 1
        %vm3011 = vmpackc.low %vm3010, %vm3010
        %v3012 = vsel %vm3011, 65537, 0
        %v3013 = vlaneseq
        %v3014 = vshrl.u32 %v3013, 7
        %v3015 = vsub.s32 0, %v3014
        %v3016 = vrot.slane %v3012, %v3015
        %vm3017 = vcmp.ne.s16.totalorder %v3016, 0
        %v3018 = vsel %vm3017, %v2985, 0
        %v3019 = vsel %vm3017, %v2986, 0
        %v3020 = vsel %vm3017, %v2987, 0
        %v3021 = vsel %vm3017, %v2988, 0
        %v3022 = vsel %vm3017, %v2989, 0
        %v3023 = vsel %vm3017, %v2990, 0
        %v3024 = vsel %vm3017, %v2991, 0
        %v3025 = vsel %vm3017, %v2992, 0
        %v3026 = vsel %vm3017, %v2993, 0
        %v3027 = vsel %vm3017, %v2994, 0
        %v3028 = vsel %vm3017, %v2995, 0
        %v3029 = vsel %vm3017, %v2996, 0
        %v3030 = vsel %vm3017, %v2997, 0
        %v3031 = vsel %vm3017, %v2998, 0
        %v3032 = vsel %vm3017, %v2999, 0
        %v3033 = vsel %vm3017, %v3000, 0
        %v3034 = vsel %vm3017, %v3001, 0
        %v3035 = vsel %vm3017, %v3002, 0
        %v3036 = vsel %vm3017, %v3003, 0
        %v3037 = vsel %vm3017, %v3004, 0
        %v3038 = vsel %vm3017, %v3005, 0
        %v3039 = vsel %vm3017, %v3006, 0
        %v3040 = vsel %vm3017, %v3007, 0
        %v3041 = vsel %vm3017, %v3008, 0
        %3042 = vmatprep.subr.bf16.mxu0 0
        %3043 = vmatpush1.bf16.msra.mxu0 %v3018
        %3044 = vmatprep.subr.bf16.mxu0 0
        %3045 = vmatpush1.bf16.msra.mxu0 %v3019
        %3046 = vmatprep.subr.bf16.mxu0 0
        %3047 = vmatpush1.bf16.msra.mxu0 %v3020
        %3048 = vmatprep.subr.bf16.mxu0 0
        %3049 = vmatpush1.bf16.msra.mxu0 %v3021
        %3050 = vmatprep.subr.bf16.mxu0 0
        %3051 = vmatpush1.bf16.msra.mxu0 %v3022
        %3052 = vmatprep.subr.bf16.mxu0 0
        %3053 = vmatpush1.bf16.msra.mxu0 %v3023
        %3054 = vmatprep.subr.bf16.mxu0 0
        %3055 = vmatpush1.bf16.msra.mxu0 %v3024
        %3056 = vmatprep.subr.bf16.mxu0 0
        %3057 = vmatpush1.bf16.msra.mxu0 %v3025
        %3058 = vmatprep.subr.bf16.mxu0 0
        %3059 = vmatpush1.bf16.msra.mxu0 %v3026
        %3060 = vmatprep.subr.bf16.mxu0 0
        %3061 = vmatpush1.bf16.msra.mxu0 %v3027
        %3062 = vmatprep.subr.bf16.mxu0 0
        %3063 = vmatpush1.bf16.msra.mxu0 %v3028
        %3064 = vmatprep.subr.bf16.mxu0 0
        %3065 = vmatpush1.bf16.msra.mxu0 %v3029
        %3066 = vmatprep.subr.bf16.mxu0 0
        %3067 = vmatpush1.bf16.msra.mxu0 %v3030
        %3068 = vmatprep.subr.bf16.mxu0 0
        %3069 = vmatpush1.bf16.msra.mxu0 %v3031
        %3070 = vmatprep.subr.bf16.mxu0 0
        %3071 = vmatpush1.bf16.msra.mxu0 %v3032
        %3072 = vmatprep.subr.bf16.mxu0 0
        %3073 = vmatpush1.bf16.msra.mxu0 %v3033
        %3074 = vmatprep.mubr.bf16.mxu0 %v2772
        %3075 = vmatmul.mubr.bf16.gmra.mrb[0].mxu0 %v2769
        %v3076 = vpop.f32.mrb[0].mxu0
        %v3077 = vadd.f32 0.0, %v3076
        %v3078 = vpop.f32.mrb[0].mxu0
        %v3079 = vpop.f32.mrb[0].mxu0
        %v3080 = vadd.f32 0.0, %v3079
        %v3081 = vpop.f32.mrb[0].mxu0
        %3082 = vmatprep.mubr.bf16.mxu0 %v2781
        %3083 = vmatmul.mubr.bf16.gmra.mrb[0].mxu0 %v2778
        %v3084 = vpop.f32.mrb[0].mxu0
        %v3085 = vadd.f32 0.0, %v3084
        %v3086 = vpop.f32.mrb[0].mxu0
        %v3087 = vpop.f32.mrb[0].mxu0
        %v3088 = vadd.f32 0.0, %v3087
        %v3089 = vpop.f32.mrb[0].mxu0
        %3090 = vmatprep.mubr.bf16.mxu0 %v2790
        %3091 = vmatmul.mubr.bf16.gmra.mrb[0].mxu0 %v2787
        %v3092 = vpop.f32.mrb[0].mxu0
        %v3093 = vadd.f32 0.0, %v3092
        %v3094 = vpop.f32.mrb[0].mxu0
        %v3095 = vpop.f32.mrb[0].mxu0
        %v3096 = vadd.f32 0.0, %v3095
        %v3097 = vpop.f32.mrb[0].mxu0
        %3098 = vmatprep.mubr.bf16.mxu0 %v2799
        %3099 = vmatmul.mubr.bf16.gmra.mrb[0].mxu0 %v2796
        %v3100 = vpop.f32.mrb[0].mxu0
        %v3101 = vadd.f32 0.0, %v3100
        %v3102 = vpop.f32.mrb[0].mxu0
        %v3103 = vpop.f32.mrb[0].mxu0
        %v3104 = vadd.f32 0.0, %v3103
        %v3105 = vpop.f32.mrb[0].mxu0
        %3106 = vmatprep.mubr.bf16.mxu0 %v2808
        %3107 = vmatmul.mubr.bf16.gmra.mrb[0].mxu0 %v2805
        %v3108 = vpop.f32.mrb[0].mxu0
        %v3109 = vadd.f32 0.0, %v3108
        %v3110 = vpop.f32.mrb[0].mxu0
        %v3111 = vpop.f32.mrb[0].mxu0
        %v3112 = vadd.f32 0.0, %v3111
        %v3113 = vpop.f32.mrb[0].mxu0
        %3114 = vmatprep.mubr.bf16.mxu0 %v2817
        %3115 = vmatmul.mubr.bf16.gmra.mrb[0].mxu0 %v2814
        %v3116 = vpop.f32.mrb[0].mxu0
        %v3117 = vadd.f32 0.0, %v3116
        %v3118 = vpop.f32.mrb[0].mxu0
        %v3119 = vpop.f32.mrb[0].mxu0
        %v3120 = vadd.f32 0.0, %v3119
        %v3121 = vpop.f32.mrb[0].mxu0
        %3122 = vmatprep.mubr.bf16.mxu0 %v2826
        %3123 = vmatmul.mubr.bf16.gmra.mrb[0].mxu0 %v2823
        %v3124 = vpop.f32.mrb[0].mxu0
        %v3125 = vadd.f32 0.0, %v3124
        %v3126 = vpop.f32.mrb[0].mxu0
        %v3127 = vpop.f32.mrb[0].mxu0
        %v3128 = vadd.f32 0.0, %v3127
        %v3129 = vpop.f32.mrb[0].mxu0
        %3130 = vmatprep.mubr.bf16.mxu0 %v2835
        %3131 = vmatmul.mubr.bf16.gmra.mrb[0].mxu0 %v2832
        %v3132 = vpop.f32.mrb[0].mxu0
        %v3133 = vadd.f32 0.0, %v3132
        %v3134 = vpop.f32.mrb[0].mxu0
        %v3135 = vpop.f32.mrb[0].mxu0
        %v3136 = vadd.f32 0.0, %v3135
        %v3137 = vpop.f32.mrb[0].mxu0
        %3138 = vmatprep.mubr.bf16.mxu0 %v2844
        %3139 = vmatmul.mubr.bf16.gmra.mrb[0].mxu0 %v2841
        %v3140 = vpop.f32.mrb[0].mxu0
        %v3141 = vadd.f32 0.0, %v3140
        %v3142 = vpop.f32.mrb[0].mxu0
        %v3143 = vpop.f32.mrb[0].mxu0
        %v3144 = vadd.f32 0.0, %v3143
        %v3145 = vpop.f32.mrb[0].mxu0
        %3146 = vmatprep.mubr.bf16.mxu0 %v2853
        %3147 = vmatmul.mubr.bf16.gmra.mrb[0].mxu0 %v2850
        %v3148 = vpop.f32.mrb[0].mxu0
        %v3149 = vadd.f32 0.0, %v3148
        %v3150 = vpop.f32.mrb[0].mxu0
        %v3151 = vpop.f32.mrb[0].mxu0
        %v3152 = vadd.f32 0.0, %v3151
        %v3153 = vpop.f32.mrb[0].mxu0
        %3154 = vmatprep.mubr.bf16.mxu0 %v2862
        %3155 = vmatmul.mubr.bf16.gmra.mrb[0].mxu0 %v2859
        %v3156 = vpop.f32.mrb[0].mxu0
        %v3157 = vadd.f32 0.0, %v3156
        %v3158 = vpop.f32.mrb[0].mxu0
        %v3159 = vpop.f32.mrb[0].mxu0
        %v3160 = vadd.f32 0.0, %v3159
        %v3161 = vpop.f32.mrb[0].mxu0
        %3162 = vmatprep.mubr.bf16.mxu0 %v2871
        %3163 = vmatmul.mubr.bf16.gmra.mrb[0].mxu0 %v2868
        %v3164 = vpop.f32.mrb[0].mxu0
        %v3165 = vadd.f32 0.0, %v3164
        %v3166 = vpop.f32.mrb[0].mxu0
        %v3167 = vpop.f32.mrb[0].mxu0
        %v3168 = vadd.f32 0.0, %v3167
        %v3169 = vpop.f32.mrb[0].mxu0
        %3170 = vmatprep.mubr.bf16.mxu0 %v2880
        %3171 = vmatmul.mubr.bf16.gmra.mrb[0].mxu0 %v2877
        %v3172 = vpop.f32.mrb[0].mxu0
        %v3173 = vadd.f32 0.0, %v3172
        %v3174 = vpop.f32.mrb[0].mxu0
        %v3175 = vpop.f32.mrb[0].mxu0
        %v3176 = vadd.f32 0.0, %v3175
        %v3177 = vpop.f32.mrb[0].mxu0
        %3178 = vmatprep.mubr.bf16.mxu0 %v2889
        %3179 = vmatmul.mubr.bf16.gmra.mrb[0].mxu0 %v2886
        %v3180 = vpop.f32.mrb[0].mxu0
        %v3181 = vadd.f32 0.0, %v3180
        %v3182 = vpop.f32.mrb[0].mxu0
        %v3183 = vpop.f32.mrb[0].mxu0
        %v3184 = vadd.f32 0.0, %v3183
        %v3185 = vpop.f32.mrb[0].mxu0
        %3186 = vmatprep.mubr.bf16.mxu0 %v2898
        %3187 = vmatmul.mubr.bf16.gmra.mrb[0].mxu0 %v2895
        %v3188 = vpop.f32.mrb[0].mxu0
        %v3189 = vadd.f32 0.0, %v3188
        %v3190 = vpop.f32.mrb[0].mxu0
        %v3191 = vpop.f32.mrb[0].mxu0
        %v3192 = vadd.f32 0.0, %v3191
        %v3193 = vpop.f32.mrb[0].mxu0
        %3194 = vmatprep.mubr.bf16.mxu0 %v2907
        %3195 = vmatmul.mubr.bf16.gmra.mrb[0].mxu0 %v2904
        %v3196 = vpop.f32.mrb[0].mxu0
        %v3197 = vadd.f32 0.0, %v3196
        %v3198 = vpop.f32.mrb[0].mxu0
        %v3199 = vpop.f32.mrb[0].mxu0
        %v3200 = vadd.f32 0.0, %v3199
        %v3201 = vpop.f32.mrb[0].mxu0
        %3202 = vmatprep.mubr.bf16.mxu0 %v2916
        %3203 = vmatmul.mubr.bf16.gmra.mrb[0].mxu0 %v2913
        %v3204 = vpop.f32.mrb[0].mxu0
        %v3205 = vadd.f32 0.0, %v3204
        %v3206 = vpop.f32.mrb[0].mxu0
        %v3207 = vpop.f32.mrb[0].mxu0
        %v3208 = vadd.f32 0.0, %v3207
        %v3209 = vpop.f32.mrb[0].mxu0
        %3210 = vmatprep.mubr.bf16.mxu0 %v2925
        %3211 = vmatmul.mubr.bf16.gmra.mrb[0].mxu0 %v2922
        %v3212 = vpop.f32.mrb[0].mxu0
        %v3213 = vadd.f32 0.0, %v3212
        %v3214 = vpop.f32.mrb[0].mxu0
        %v3215 = vpop.f32.mrb[0].mxu0
        %v3216 = vadd.f32 0.0, %v3215
        %v3217 = vpop.f32.mrb[0].mxu0
        %3218 = vmatprep.mubr.bf16.mxu0 %v2934
        %3219 = vmatmul.mubr.bf16.gmra.mrb[0].mxu0 %v2931
        %v3220 = vpop.f32.mrb[0].mxu0
        %v3221 = vadd.f32 0.0, %v3220
        %v3222 = vpop.f32.mrb[0].mxu0
        %v3223 = vpop.f32.mrb[0].mxu0
        %v3224 = vadd.f32 0.0, %v3223
        %v3225 = vpop.f32.mrb[0].mxu0
        %3226 = vmatprep.mubr.bf16.mxu0 %v2943
        %3227 = vmatmul.mubr.bf16.gmra.mrb[0].mxu0 %v2940
        %v3228 = vpop.f32.mrb[0].mxu0
        %v3229 = vadd.f32 0.0, %v3228
        %v3230 = vpop.f32.mrb[0].mxu0
        %v3231 = vpop.f32.mrb[0].mxu0
        %v3232 = vadd.f32 0.0, %v3231
        %v3233 = vpop.f32.mrb[0].mxu0
        %3234 = vmatprep.mubr.bf16.mxu0 %v2952
        %3235 = vmatmul.mubr.bf16.gmra.mrb[0].mxu0 %v2949
        %v3236 = vpop.f32.mrb[0].mxu0
        %v3237 = vadd.f32 0.0, %v3236
        %v3238 = vpop.f32.mrb[0].mxu0
        %v3239 = vpop.f32.mrb[0].mxu0
        %v3240 = vadd.f32 0.0, %v3239
        %v3241 = vpop.f32.mrb[0].mxu0
        %3242 = vmatprep.mubr.bf16.mxu0 %v2961
        %3243 = vmatmul.mubr.bf16.gmra.mrb[0].mxu0 %v2958
        %v3244 = vpop.f32.mrb[0].mxu0
        %v3245 = vadd.f32 0.0, %v3244
        %v3246 = vpop.f32.mrb[0].mxu0
        %v3247 = vpop.f32.mrb[0].mxu0
        %v3248 = vadd.f32 0.0, %v3247
        %v3249 = vpop.f32.mrb[0].mxu0
        %3250 = vmatprep.mubr.bf16.mxu0 %v2970
        %3251 = vmatmul.mubr.bf16.gmra.mrb[0].mxu0 %v2967
        %v3252 = vpop.f32.mrb[0].mxu0
        %v3253 = vadd.f32 0.0, %v3252
        %v3254 = vpop.f32.mrb[0].mxu0
        %v3255 = vpop.f32.mrb[0].mxu0
        %v3256 = vadd.f32 0.0, %v3255
        %v3257 = vpop.f32.mrb[0].mxu0
        %3258 = vmatprep.mubr.bf16.mxu0 %v2979
        %3259 = vmatmul.mubr.bf16.gmra.mrb[0].mxu0 %v2976
        %v3260 = vpop.f32.mrb[0].mxu0
        %v3261 = vadd.f32 0.0, %v3260
        %v3262 = vpop.f32.mrb[0].mxu0
        %v3263 = vpop.f32.mrb[0].mxu0
        %v3264 = vadd.f32 0.0, %v3263
        %v3265 = vpop.f32.mrb[0].mxu0
        %3266 = vdwg.mxu0
        %3267 = vmatprep.subr.bf16.mxu0 0
        %3268 = vmatpush1.bf16.msra.mxu0 %v3034
        %3269 = vmatprep.subr.bf16.mxu0 0
        %3270 = vmatpush1.bf16.msra.mxu0 %v3035
        %3271 = vmatprep.subr.bf16.mxu0 0
        %3272 = vmatpush1.bf16.msra.mxu0 %v3036
        %3273 = vmatprep.subr.bf16.mxu0 0
        %3274 = vmatpush1.bf16.msra.mxu0 %v3037
        %3275 = vmatprep.subr.bf16.mxu0 0
        %3276 = vmatpush1.bf16.msra.mxu0 %v3038
        %3277 = vmatprep.subr.bf16.mxu0 0
        %3278 = vmatpush1.bf16.msra.mxu0 %v3039
        %3279 = vmatprep.subr.bf16.mxu0 0
        %3280 = vmatpush1.bf16.msra.mxu0 %v3040
        %3281 = vmatprep.subr.bf16.mxu0 0
        %3282 = vmatpush1.bf16.msra.mxu0 %v3041
        %3283 = vmatprep.subr.bf16.mxu0 0
        %3284 = vmatpush1.bf16.msra.mxu0 0
        %3285 = vmatprep.subr.bf16.mxu0 0
        %3286 = vmatpush1.bf16.msra.mxu0 0
        %3287 = vmatprep.subr.bf16.mxu0 0
        %3288 = vmatpush1.bf16.msra.mxu0 0
        %3289 = vmatprep.subr.bf16.mxu0 0
        %3290 = vmatpush1.bf16.msra.mxu0 0
        %3291 = vmatprep.subr.bf16.mxu0 0
        %3292 = vmatpush1.bf16.msra.mxu0 0
        %3293 = vmatprep.subr.bf16.mxu0 0
        %3294 = vmatpush1.bf16.msra.mxu0 0
        %3295 = vmatprep.subr.bf16.mxu0 0
        %3296 = vmatpush1.bf16.msra.mxu0 0
        %3297 = vmatprep.subr.bf16.mxu0 0
        %3298 = vmatpush1.bf16.msra.mxu0 0
        %3299 = vmatprep.mubr.bf16.mxu0 0
        %3300 = vmatmul.mubr.bf16.gmra.mrb[0].mxu0 %v2775
        %v3301 = vpop.f32.mrb[0].mxu0
        %v3302 = vadd.f32 %v3077, %v3301
        %v3303 = vpop.f32.mrb[0].mxu0
        %v3304 = vpop.f32.mrb[0].mxu0
        %v3305 = vadd.f32 %v3080, %v3304
        %v3306 = vpop.f32.mrb[0].mxu0
        %3307 = vmatprep.mubr.bf16.mxu0 0
        %3308 = vmatmul.mubr.bf16.gmra.mrb[0].mxu0 %v2784
        %v3309 = vpop.f32.mrb[0].mxu0
        %v3310 = vadd.f32 %v3085, %v3309
        %v3311 = vpop.f32.mrb[0].mxu0
        %v3312 = vpop.f32.mrb[0].mxu0
        %v3313 = vadd.f32 %v3088, %v3312
        %v3314 = vpop.f32.mrb[0].mxu0
        %3315 = vmatprep.mubr.bf16.mxu0 0
        %3316 = vmatmul.mubr.bf16.gmra.mrb[0].mxu0 %v2793
        %v3317 = vpop.f32.mrb[0].mxu0
        %v3318 = vadd.f32 %v3093, %v3317
        %v3319 = vpop.f32.mrb[0].mxu0
        %v3320 = vpop.f32.mrb[0].mxu0
        %v3321 = vadd.f32 %v3096, %v3320
        %v3322 = vpop.f32.mrb[0].mxu0
        %3323 = vmatprep.mubr.bf16.mxu0 0
        %3324 = vmatmul.mubr.bf16.gmra.mrb[0].mxu0 %v2802
        %v3325 = vpop.f32.mrb[0].mxu0
        %v3326 = vadd.f32 %v3101, %v3325
        %v3327 = vpop.f32.mrb[0].mxu0
        %v3328 = vpop.f32.mrb[0].mxu0
        %v3329 = vadd.f32 %v3104, %v3328
        %v3330 = vpop.f32.mrb[0].mxu0
        %3331 = vmatprep.mubr.bf16.mxu0 0
        %3332 = vmatmul.mubr.bf16.gmra.mrb[0].mxu0 %v2811
        %v3333 = vpop.f32.mrb[0].mxu0
        %v3334 = vadd.f32 %v3109, %v3333
        %v3335 = vpop.f32.mrb[0].mxu0
        %v3336 = vpop.f32.mrb[0].mxu0
        %v3337 = vadd.f32 %v3112, %v3336
        %v3338 = vpop.f32.mrb[0].mxu0
        %3339 = vmatprep.mubr.bf16.mxu0 0
        %3340 = vmatmul.mubr.bf16.gmra.mrb[0].mxu0 %v2820
        %v3341 = vpop.f32.mrb[0].mxu0
        %v3342 = vadd.f32 %v3117, %v3341
        %v3343 = vpop.f32.mrb[0].mxu0
        %v3344 = vpop.f32.mrb[0].mxu0
        %v3345 = vadd.f32 %v3120, %v3344
        %v3346 = vpop.f32.mrb[0].mxu0
        %3347 = vmatprep.mubr.bf16.mxu0 0
        %3348 = vmatmul.mubr.bf16.gmra.mrb[0].mxu0 %v2829
        %v3349 = vpop.f32.mrb[0].mxu0
        %v3350 = vadd.f32 %v3125, %v3349
        %v3351 = vpop.f32.mrb[0].mxu0
        %v3352 = vpop.f32.mrb[0].mxu0
        %v3353 = vadd.f32 %v3128, %v3352
        %v3354 = vpop.f32.mrb[0].mxu0
        %3355 = vmatprep.mubr.bf16.mxu0 0
        %3356 = vmatmul.mubr.bf16.gmra.mrb[0].mxu0 %v2838
        %v3357 = vpop.f32.mrb[0].mxu0
        %v3358 = vadd.f32 %v3133, %v3357
        %v3359 = vpop.f32.mrb[0].mxu0
        %v3360 = vpop.f32.mrb[0].mxu0
        %v3361 = vadd.f32 %v3136, %v3360
        %v3362 = vpop.f32.mrb[0].mxu0
        %3363 = vmatprep.mubr.bf16.mxu0 0
        %3364 = vmatmul.mubr.bf16.gmra.mrb[0].mxu0 %v2847
        %v3365 = vpop.f32.mrb[0].mxu0
        %v3366 = vadd.f32 %v3141, %v3365
        %v3367 = vpop.f32.mrb[0].mxu0
        %v3368 = vpop.f32.mrb[0].mxu0
        %v3369 = vadd.f32 %v3144, %v3368
        %v3370 = vpop.f32.mrb[0].mxu0
        %3371 = vmatprep.mubr.bf16.mxu0 0
        %3372 = vmatmul.mubr.bf16.gmra.mrb[0].mxu0 %v2856
        %v3373 = vpop.f32.mrb[0].mxu0
        %v3374 = vadd.f32 %v3149, %v3373
        %v3375 = vpop.f32.mrb[0].mxu0
        %v3376 = vpop.f32.mrb[0].mxu0
        %v3377 = vadd.f32 %v3152, %v3376
        %v3378 = vpop.f32.mrb[0].mxu0
        %3379 = vmatprep.mubr.bf16.mxu0 0
        %3380 = vmatmul.mubr.bf16.gmra.mrb[0].mxu0 %v2865
        %v3381 = vpop.f32.mrb[0].mxu0
        %v3382 = vadd.f32 %v3157, %v3381
        %v3383 = vpop.f32.mrb[0].mxu0
        %v3384 = vpop.f32.mrb[0].mxu0
        %v3385 = vadd.f32 %v3160, %v3384
        %v3386 = vpop.f32.mrb[0].mxu0
        %3387 = vmatprep.mubr.bf16.mxu0 0
        %3388 = vmatmul.mubr.bf16.gmra.mrb[0].mxu0 %v2874
        %v3389 = vpop.f32.mrb[0].mxu0
        %v3390 = vadd.f32 %v3165, %v3389
        %v3391 = vpop.f32.mrb[0].mxu0
        %v3392 = vpop.f32.mrb[0].mxu0
        %v3393 = vadd.f32 %v3168, %v3392
        %v3394 = vpop.f32.mrb[0].mxu0
        %3395 = vmatprep.mubr.bf16.mxu0 0
        %3396 = vmatmul.mubr.bf16.gmra.mrb[0].mxu0 %v2883
        %v3397 = vpop.f32.mrb[0].mxu0
        %v3398 = vadd.f32 %v3173, %v3397
        %v3399 = vpop.f32.mrb[0].mxu0
        %v3400 = vpop.f32.mrb[0].mxu0
        %v3401 = vadd.f32 %v3176, %v3400
        %v3402 = vpop.f32.mrb[0].mxu0
        %3403 = vmatprep.mubr.bf16.mxu0 0
        %3404 = vmatmul.mubr.bf16.gmra.mrb[0].mxu0 %v2892
        %v3405 = vpop.f32.mrb[0].mxu0
        %v3406 = vadd.f32 %v3181, %v3405
        %v3407 = vpop.f32.mrb[0].mxu0
        %v3408 = vpop.f32.mrb[0].mxu0
        %v3409 = vadd.f32 %v3184, %v3408
        %v3410 = vpop.f32.mrb[0].mxu0
        %3411 = vmatprep.mubr.bf16.mxu0 0
        %3412 = vmatmul.mubr.bf16.gmra.mrb[0].mxu0 %v2901
        %v3413 = vpop.f32.mrb[0].mxu0
        %v3414 = vadd.f32 %v3189, %v3413
        %v3415 = vpop.f32.mrb[0].mxu0
        %v3416 = vpop.f32.mrb[0].mxu0
        %v3417 = vadd.f32 %v3192, %v3416
        %v3418 = vpop.f32.mrb[0].mxu0
        %3419 = vmatprep.mubr.bf16.mxu0 0
        %3420 = vmatmul.mubr.bf16.gmra.mrb[0].mxu0 %v2910
        %v3421 = vpop.f32.mrb[0].mxu0
        %v3422 = vadd.f32 %v3197, %v3421
        %v3423 = vpop.f32.mrb[0].mxu0
        %v3424 = vpop.f32.mrb[0].mxu0
        %v3425 = vadd.f32 %v3200, %v3424
        %v3426 = vpop.f32.mrb[0].mxu0
        %3427 = vmatprep.mubr.bf16.mxu0 0
        %3428 = vmatmul.mubr.bf16.gmra.mrb[0].mxu0 %v2919
        %v3429 = vpop.f32.mrb[0].mxu0
        %v3430 = vadd.f32 %v3205, %v3429
        %v3431 = vpop.f32.mrb[0].mxu0
        %v3432 = vpop.f32.mrb[0].mxu0
        %v3433 = vadd.f32 %v3208, %v3432
        %v3434 = vpop.f32.mrb[0].mxu0
        %3435 = vmatprep.mubr.bf16.mxu0 0
        %3436 = vmatmul.mubr.bf16.gmra.mrb[0].mxu0 %v2928
        %v3437 = vpop.f32.mrb[0].mxu0
        %v3438 = vadd.f32 %v3213, %v3437
        %v3439 = vpop.f32.mrb[0].mxu0
        %v3440 = vpop.f32.mrb[0].mxu0
        %v3441 = vadd.f32 %v3216, %v3440
        %v3442 = vpop.f32.mrb[0].mxu0
        %3443 = vmatprep.mubr.bf16.mxu0 0
        %3444 = vmatmul.mubr.bf16.gmra.mrb[0].mxu0 %v2937
        %v3445 = vpop.f32.mrb[0].mxu0
        %v3446 = vadd.f32 %v3221, %v3445
        %v3447 = vpop.f32.mrb[0].mxu0
        %v3448 = vpop.f32.mrb[0].mxu0
        %v3449 = vadd.f32 %v3224, %v3448
        %v3450 = vpop.f32.mrb[0].mxu0
        %3451 = vmatprep.mubr.bf16.mxu0 0
        %3452 = vmatmul.mubr.bf16.gmra.mrb[0].mxu0 %v2946
        %v3453 = vpop.f32.mrb[0].mxu0
        %v3454 = vadd.f32 %v3229, %v3453
        %v3455 = vpop.f32.mrb[0].mxu0
        %v3456 = vpop.f32.mrb[0].mxu0
        %v3457 = vadd.f32 %v3232, %v3456
        %v3458 = vpop.f32.mrb[0].mxu0
        %3459 = vmatprep.mubr.bf16.mxu0 0
        %3460 = vmatmul.mubr.bf16.gmra.mrb[0].mxu0 %v2955
        %v3461 = vpop.f32.mrb[0].mxu0
        %v3462 = vadd.f32 %v3237, %v3461
        %v3463 = vpop.f32.mrb[0].mxu0
        %v3464 = vpop.f32.mrb[0].mxu0
        %v3465 = vadd.f32 %v3240, %v3464
        %v3466 = vpop.f32.mrb[0].mxu0
        %3467 = vmatprep.mubr.bf16.mxu0 0
        %3468 = vmatmul.mubr.bf16.gmra.mrb[0].mxu0 %v2964
        %v3469 = vpop.f32.mrb[0].mxu0
        %v3470 = vadd.f32 %v3245, %v3469
        %v3471 = vpop.f32.mrb[0].mxu0
        %v3472 = vpop.f32.mrb[0].mxu0
        %v3473 = vadd.f32 %v3248, %v3472
        %v3474 = vpop.f32.mrb[0].mxu0
        %3475 = vmatprep.mubr.bf16.mxu0 0
        %3476 = vmatmul.mubr.bf16.gmra.mrb[0].mxu0 %v2973
        %v3477 = vpop.f32.mrb[0].mxu0
        %v3478 = vadd.f32 %v3253, %v3477
        %v3479 = vpop.f32.mrb[0].mxu0
        %v3480 = vpop.f32.mrb[0].mxu0
        %v3481 = vadd.f32 %v3256, %v3480
        %v3482 = vpop.f32.mrb[0].mxu0
        %3483 = vmatprep.mubr.bf16.mxu0 0
        %3484 = vmatmul.mubr.bf16.gmra.mrb[0].mxu0 %v2982
        %v3485 = vpop.f32.mrb[0].mxu0
        %v3486 = vadd.f32 %v3261, %v3485
        %v3487 = vpop.f32.mrb[0].mxu0
        %v3488 = vpop.f32.mrb[0].mxu0
        %v3489 = vadd.f32 %v3264, %v3488
        %v3490 = vpop.f32.mrb[0].mxu0
        %3491 = vdwg.mxu0
        %v3492 = vrcp.pop %v3302
        %v3493 = vrcp.pop %v3305
        %v3494 = vrcp.pop %v3310
        %v3495 = vrcp.pop %v3313
        %v3496 = vrcp.pop %v3318
        %v3497 = vrcp.pop %v3321
        %v3498 = vrcp.pop %v3326
        %v3499 = vrcp.pop %v3329
        %v3500 = vrcp.pop %v3334
        %v3501 = vrcp.pop %v3337
        %v3502 = vrcp.pop %v3342
        %v3503 = vrcp.pop %v3345
        %v3504 = vrcp.pop %v3350
        %v3505 = vrcp.pop %v3353
        %v3506 = vrcp.pop %v3358
        %v3507 = vrcp.pop %v3361
        %v3508 = vrcp.pop %v3366
        %v3509 = vrcp.pop %v3369
        %v3510 = vrcp.pop %v3374
        %v3511 = vrcp.pop %v3377
        %v3512 = vrcp.pop %v3382
        %v3513 = vrcp.pop %v3385
        %v3514 = vrcp.pop %v3390
        %v3515 = vrcp.pop %v3393
        %v3516 = vrcp.pop %v3398
        %v3517 = vrcp.pop %v3401
        %v3518 = vrcp.pop %v3406
        %v3519 = vrcp.pop %v3409
        %v3520 = vrcp.pop %v3414
        %v3521 = vrcp.pop %v3417
        %v3522 = vrcp.pop %v3422
        %v3523 = vrcp.pop %v3425
        %v3524 = vrcp.pop %v3430
        %v3525 = vrcp.pop %v3433
        %v3526 = vrcp.pop %v3438
        %v3527 = vrcp.pop %v3441
        %v3528 = vrcp.pop %v3446
        %v3529 = vrcp.pop %v3449
        %v3530 = vrcp.pop %v3454
        %v3531 = vrcp.pop %v3457
        %v3532 = vrcp.pop %v3462
        %v3533 = vrcp.pop %v3465
        %v3534 = vrcp.pop %v3470
        %v3535 = vrcp.pop %v3473
        %v3536 = vrcp.pop %v3478
        %v3537 = vrcp.pop %v3481
        %v3538 = vrcp.pop %v3486
        %v3539 = vrcp.pop %v3489
        %3541 = vset.pattern.permute.xlu0 64
        %3542 = vperm.xlu0 %3541, %v3492
        %v3543 = vpop.permute.xlu0 %3542
        %3546 = vset.pattern.permute.xlu0 64
        %3547 = vperm.xlu0 %3546, %v3493
        %v3548 = vpop.permute.xlu0 %3547
        %3551 = vset.pattern.permute.xlu0 64
        %3552 = vperm.xlu0 %3551, %v3494
        %v3553 = vpop.permute.xlu0 %3552
        %3556 = vset.pattern.permute.xlu0 64
        %3557 = vperm.xlu0 %3556, %v3495
        %v3558 = vpop.permute.xlu0 %3557
        %3561 = vset.pattern.permute.xlu0 64
        %3562 = vperm.xlu0 %3561, %v3496
        %v3563 = vpop.permute.xlu0 %3562
        %3566 = vset.pattern.permute.xlu0 64
        %3567 = vperm.xlu0 %3566, %v3497
        %v3568 = vpop.permute.xlu0 %3567
        %3571 = vset.pattern.permute.xlu0 64
        %3572 = vperm.xlu0 %3571, %v3498
        %v3573 = vpop.permute.xlu0 %3572
        %3576 = vset.pattern.permute.xlu0 64
        %3577 = vperm.xlu0 %3576, %v3499
        %v3578 = vpop.permute.xlu0 %3577
        %3581 = vset.pattern.permute.xlu0 64
        %3582 = vperm.xlu0 %3581, %v3500
        %v3583 = vpop.permute.xlu0 %3582
        %3586 = vset.pattern.permute.xlu0 64
        %3587 = vperm.xlu0 %3586, %v3501
        %v3588 = vpop.permute.xlu0 %3587
        %3591 = vset.pattern.permute.xlu0 64
        %3592 = vperm.xlu0 %3591, %v3502
        %v3593 = vpop.permute.xlu0 %3592
        %3596 = vset.pattern.permute.xlu0 64
        %3597 = vperm.xlu0 %3596, %v3503
        %v3598 = vpop.permute.xlu0 %3597
        %3601 = vset.pattern.permute.xlu0 64
        %3602 = vperm.xlu0 %3601, %v3504
        %v3603 = vpop.permute.xlu0 %3602
        %3606 = vset.pattern.permute.xlu0 64
        %3607 = vperm.xlu0 %3606, %v3505
        %v3608 = vpop.permute.xlu0 %3607
        %3611 = vset.pattern.permute.xlu0 64
        %3612 = vperm.xlu0 %3611, %v3506
        %v3613 = vpop.permute.xlu0 %3612
        %3616 = vset.pattern.permute.xlu0 64
        %3617 = vperm.xlu0 %3616, %v3507
        %v3618 = vpop.permute.xlu0 %3617
        %3621 = vset.pattern.permute.xlu0 64
        %3622 = vperm.xlu0 %3621, %v3508
        %v3623 = vpop.permute.xlu0 %3622
        %3626 = vset.pattern.permute.xlu0 64
        %3627 = vperm.xlu0 %3626, %v3509
        %v3628 = vpop.permute.xlu0 %3627
        %3631 = vset.pattern.permute.xlu0 64
        %3632 = vperm.xlu0 %3631, %v3510
        %v3633 = vpop.permute.xlu0 %3632
        %3636 = vset.pattern.permute.xlu0 64
        %3637 = vperm.xlu0 %3636, %v3511
        %v3638 = vpop.permute.xlu0 %3637
        %3641 = vset.pattern.permute.xlu0 64
        %3642 = vperm.xlu0 %3641, %v3512
        %v3643 = vpop.permute.xlu0 %3642
        %3646 = vset.pattern.permute.xlu0 64
        %3647 = vperm.xlu0 %3646, %v3513
        %v3648 = vpop.permute.xlu0 %3647
        %3651 = vset.pattern.permute.xlu0 64
        %3652 = vperm.xlu0 %3651, %v3514
        %v3653 = vpop.permute.xlu0 %3652
        %3656 = vset.pattern.permute.xlu0 64
        %3657 = vperm.xlu0 %3656, %v3515
        %v3658 = vpop.permute.xlu0 %3657
        %3661 = vset.pattern.permute.xlu0 64
        %3662 = vperm.xlu0 %3661, %v3516
        %v3663 = vpop.permute.xlu0 %3662
        %3666 = vset.pattern.permute.xlu0 64
        %3667 = vperm.xlu0 %3666, %v3517
        %v3668 = vpop.permute.xlu0 %3667
        %3671 = vset.pattern.permute.xlu0 64
        %3672 = vperm.xlu0 %3671, %v3518
        %v3673 = vpop.permute.xlu0 %3672
        %3676 = vset.pattern.permute.xlu0 64
        %3677 = vperm.xlu0 %3676, %v3519
        %v3678 = vpop.permute.xlu0 %3677
        %3681 = vset.pattern.permute.xlu0 64
        %3682 = vperm.xlu0 %3681, %v3520
        %v3683 = vpop.permute.xlu0 %3682
        %3686 = vset.pattern.permute.xlu0 64
        %3687 = vperm.xlu0 %3686, %v3521
        %v3688 = vpop.permute.xlu0 %3687
        %3691 = vset.pattern.permute.xlu0 64
        %3692 = vperm.xlu0 %3691, %v3522
        %v3693 = vpop.permute.xlu0 %3692
        %3696 = vset.pattern.permute.xlu0 64
        %3697 = vperm.xlu0 %3696, %v3523
        %v3698 = vpop.permute.xlu0 %3697
        %3701 = vset.pattern.permute.xlu0 64
        %3702 = vperm.xlu0 %3701, %v3524
        %v3703 = vpop.permute.xlu0 %3702
        %3706 = vset.pattern.permute.xlu0 64
        %3707 = vperm.xlu0 %3706, %v3525
        %v3708 = vpop.permute.xlu0 %3707
        %3711 = vset.pattern.permute.xlu0 64
        %3712 = vperm.xlu0 %3711, %v3526
        %v3713 = vpop.permute.xlu0 %3712
        %3716 = vset.pattern.permute.xlu0 64
        %3717 = vperm.xlu0 %3716, %v3527
        %v3718 = vpop.permute.xlu0 %3717
        %3721 = vset.pattern.permute.xlu0 64
        %3722 = vperm.xlu0 %3721, %v3528
        %v3723 = vpop.permute.xlu0 %3722
        %3726 = vset.pattern.permute.xlu0 64
        %3727 = vperm.xlu0 %3726, %v3529
        %v3728 = vpop.permute.xlu0 %3727
        %3731 = vset.pattern.permute.xlu0 64
        %3732 = vperm.xlu0 %3731, %v3530
        %v3733 = vpop.permute.xlu0 %3732
        %3736 = vset.pattern.permute.xlu0 64
        %3737 = vperm.xlu0 %3736, %v3531
        %v3738 = vpop.permute.xlu0 %3737
        %3741 = vset.pattern.permute.xlu0 64
        %3742 = vperm.xlu0 %3741, %v3532
        %v3743 = vpop.permute.xlu0 %3742
        %3746 = vset.pattern.permute.xlu0 64
        %3747 = vperm.xlu0 %3746, %v3533
        %v3748 = vpop.permute.xlu0 %3747
        %3751 = vset.pattern.permute.xlu0 64
        %3752 = vperm.xlu0 %3751, %v3534
        %v3753 = vpop.permute.xlu0 %3752
        %3756 = vset.pattern.permute.xlu0 64
        %3757 = vperm.xlu0 %3756, %v3535
        %v3758 = vpop.permute.xlu0 %3757
        %3761 = vset.pattern.permute.xlu0 64
        %3762 = vperm.xlu0 %3761, %v3536
        %v3763 = vpop.permute.xlu0 %3762
        %3766 = vset.pattern.permute.xlu0 64
        %3767 = vperm.xlu0 %3766, %v3537
        %v3768 = vpop.permute.xlu0 %3767
        %3771 = vset.pattern.permute.xlu0 64
        %3772 = vperm.xlu0 %3771, %v3538
        %v3773 = vpop.permute.xlu0 %3772
        %3776 = vset.pattern.permute.xlu0 64
        %3777 = vperm.xlu0 %3776, %v3539
        %v3778 = vpop.permute.xlu0 %3777
        %v3780 = vmul.f32 %v3302, %v3543
        %v3781 = vmul.f32 %v3305, %v3548
        %v3782 = vmul.f32 %v3310, %v3553
        %v3783 = vmul.f32 %v3313, %v3558
        %v3784 = vmul.f32 %v3318, %v3563
        %v3785 = vmul.f32 %v3321, %v3568
        %v3786 = vmul.f32 %v3326, %v3573
        %v3787 = vmul.f32 %v3329, %v3578
        %v3788 = vmul.f32 %v3334, %v3583
        %v3789 = vmul.f32 %v3337, %v3588
        %v3790 = vmul.f32 %v3342, %v3593
        %v3791 = vmul.f32 %v3345, %v3598
        %v3792 = vmul.f32 %v3350, %v3603
        %v3793 = vmul.f32 %v3353, %v3608
        %v3794 = vmul.f32 %v3358, %v3613
        %v3795 = vmul.f32 %v3361, %v3618
        %v3796 = vmul.f32 %v3366, %v3623
        %v3797 = vmul.f32 %v3369, %v3628
        %v3798 = vmul.f32 %v3374, %v3633
        %v3799 = vmul.f32 %v3377, %v3638
        %v3800 = vmul.f32 %v3382, %v3643
        %v3801 = vmul.f32 %v3385, %v3648
        %v3802 = vmul.f32 %v3390, %v3653
        %v3803 = vmul.f32 %v3393, %v3658
        %v3804 = vmul.f32 %v3398, %v3663
        %v3805 = vmul.f32 %v3401, %v3668
        %v3806 = vmul.f32 %v3406, %v3673
        %v3807 = vmul.f32 %v3409, %v3678
        %v3808 = vmul.f32 %v3414, %v3683
        %v3809 = vmul.f32 %v3417, %v3688
        %v3810 = vmul.f32 %v3422, %v3693
        %v3811 = vmul.f32 %v3425, %v3698
        %v3812 = vmul.f32 %v3430, %v3703
        %v3813 = vmul.f32 %v3433, %v3708
        %v3814 = vmul.f32 %v3438, %v3713
        %v3815 = vmul.f32 %v3441, %v3718
        %v3816 = vmul.f32 %v3446, %v3723
        %v3817 = vmul.f32 %v3449, %v3728
        %v3818 = vmul.f32 %v3454, %v3733
        %v3819 = vmul.f32 %v3457, %v3738
        %v3820 = vmul.f32 %v3462, %v3743
        %v3821 = vmul.f32 %v3465, %v3748
        %v3822 = vmul.f32 %v3470, %v3753
        %v3823 = vmul.f32 %v3473, %v3758
        %v3824 = vmul.f32 %v3478, %v3763
        %v3825 = vmul.f32 %v3481, %v3768
        %v3826 = vmul.f32 %v3486, %v3773
        %v3827 = vmul.f32 %v3489, %v3778
        // Predicated region
        $region73: #{tpu_custom_call.1} parent=43 // pred_check
          %p3828 = pneg %p466
        $region74: #{tpu_custom_call.1} parent=43 // pred_check_branch
          %3830 = sbr.rel (%p3828) target = $region76
        $region75: #{tpu_custom_call.1} parent=43 // pred_region
          %3831 = vst.msk [vmem:[#allocation6] sm:$0xff] %vm1716, %v3780
          %3832 = vst.msk [vmem:[#allocation6 + $0x8] sm:$0xff] %vm1716, %v3781
          %3833 = vst.msk [vmem:[#allocation6 + $0x10] sm:$0xff] %vm1716, %v3782
          %3834 = vst.msk [vmem:[#allocation6 + $0x18] sm:$0xff] %vm1716, %v3783
          %3835 = vst.msk [vmem:[#allocation6 + $0x20] sm:$0xff] %vm1716, %v3784
          %3836 = vst.msk [vmem:[#allocation6 + $0x28] sm:$0xff] %vm1716, %v3785
          %3837 = vst.msk [vmem:[#allocation6 + $0x30] sm:$0xff] %vm1716, %v3786
          %3838 = vst.msk [vmem:[#allocation6 + $0x38] sm:$0xff] %vm1716, %v3787
          %3839 = vst.msk [vmem:[#allocation6 + $0x40] sm:$0xff] %vm1716, %v3788
          %3840 = vst.msk [vmem:[#allocation6 + $0x48] sm:$0xff] %vm1716, %v3789
          %3841 = vst.msk [vmem:[#allocation6 + $0x50] sm:$0xff] %vm1716, %v3790
          %3842 = vst.msk [vmem:[#allocation6 + $0x58] sm:$0xff] %vm1716, %v3791
          %3843 = vst.msk [vmem:[#allocation6 + $0x60] sm:$0xff] %vm1716, %v3792
          %3844 = vst.msk [vmem:[#allocation6 + $0x68] sm:$0xff] %vm1716, %v3793
          %3845 = vst.msk [vmem:[#allocation6 + $0x70] sm:$0xff] %vm1716, %v3794
          %3846 = vst.msk [vmem:[#allocation6 + $0x78] sm:$0xff] %vm1716, %v3795
          %3847 = vst.msk [vmem:[#allocation6 + $0x80] sm:$0xff] %vm1716, %v3796
          %3848 = vst.msk [vmem:[#allocation6 + $0x88] sm:$0xff] %vm1716, %v3797
          %3849 = vst.msk [vmem:[#allocation6 + $0x90] sm:$0xff] %vm1716, %v3798
          %3850 = vst.msk [vmem:[#allocation6 + $0x98] sm:$0xff] %vm1716, %v3799
          %3851 = vst.msk [vmem:[#allocation6 + $0xa0] sm:$0xff] %vm1716, %v3800
          %3852 = vst.msk [vmem:[#allocation6 + $0xa8] sm:$0xff] %vm1716, %v3801
          %3853 = vst.msk [vmem:[#allocation6 + $0xb0] sm:$0xff] %vm1716, %v3802
          %3854 = vst.msk [vmem:[#allocation6 + $0xb8] sm:$0xff] %vm1716, %v3803
          %3855 = vst.msk [vmem:[#allocation6 + $0xc0] sm:$0xff] %vm1716, %v3804
          %3856 = vst.msk [vmem:[#allocation6 + $0xc8] sm:$0xff] %vm1716, %v3805
          %3857 = vst.msk [vmem:[#allocation6 + $0xd0] sm:$0xff] %vm1716, %v3806
          %3858 = vst.msk [vmem:[#allocation6 + $0xd8] sm:$0xff] %vm1716, %v3807
          %3859 = vst.msk [vmem:[#allocation6 + $0xe0] sm:$0xff] %vm1716, %v3808
          %3860 = vst.msk [vmem:[#allocation6 + $0xe8] sm:$0xff] %vm1716, %v3809
          %3861 = vst.msk [vmem:[#allocation6 + $0xf0] sm:$0xff] %vm1716, %v3810
          %3862 = vst.msk [vmem:[#allocation6 + $0xf8] sm:$0xff] %vm1716, %v3811
          %3863 = vst.msk [vmem:[#allocation6 + $0x100] sm:$0xff] %vm1716, %v3812
          %3864 = vst.msk [vmem:[#allocation6 + $0x108] sm:$0xff] %vm1716, %v3813
          %3865 = vst.msk [vmem:[#allocation6 + $0x110] sm:$0xff] %vm1716, %v3814
          %3866 = vst.msk [vmem:[#allocation6 + $0x118] sm:$0xff] %vm1716, %v3815
          %3867 = vst.msk [vmem:[#allocation6 + $0x120] sm:$0xff] %vm1716, %v3816
          %3868 = vst.msk [vmem:[#allocation6 + $0x128] sm:$0xff] %vm1716, %v3817
          %3869 = vst.msk [vmem:[#allocation6 + $0x130] sm:$0xff] %vm1716, %v3818
          %3870 = vst.msk [vmem:[#allocation6 + $0x138] sm:$0xff] %vm1716, %v3819
          %3871 = vst.msk [vmem:[#allocation6 + $0x140] sm:$0xff] %vm1716, %v3820
          %3872 = vst.msk [vmem:[#allocation6 + $0x148] sm:$0xff] %vm1716, %v3821
          %3873 = vst.msk [vmem:[#allocation6 + $0x150] sm:$0xff] %vm1716, %v3822
          %3874 = vst.msk [vmem:[#allocation6 + $0x158] sm:$0xff] %vm1716, %v3823
          %3875 = vst.msk [vmem:[#allocation6 + $0x160] sm:$0xff] %vm1716, %v3824
          %3876 = vst.msk [vmem:[#allocation6 + $0x168] sm:$0xff] %vm1716, %v3825
          %3877 = vst.msk [vmem:[#allocation6 + $0x170] sm:$0xff] %vm1716, %v3826
          %3878 = vst.msk [vmem:[#allocation6 + $0x178] sm:$0xff] %vm1716, %v3827
        $region76: #{tpu_custom_call.1} parent=43 // pred_fallthru
          _
        %p3879 = scmp.ne.s32.totalorder %s33, 0
        // Predicated region
        $region77: #{tpu_custom_call.1} parent=43 // pred_check
          %p3880 = pneg %p3879
        $region78: #{tpu_custom_call.1} parent=43 // pred_check_branch
          %3882 = sbr.rel (%p3880) target = $region80
        $region79: #{tpu_custom_call.1} parent=43 // pred_region
          %v3883 = vld [vmem:[#allocation6] sm:$0xff]
          %v3884 = vld [vmem:[#allocation6 + $0x8] sm:$0xff]
          %v3885 = vld [vmem:[#allocation6 + $0x10] sm:$0xff]
          %v3886 = vld [vmem:[#allocation6 + $0x18] sm:$0xff]
          %v3887 = vld [vmem:[#allocation6 + $0x20] sm:$0xff]
          %v3888 = vld [vmem:[#allocation6 + $0x28] sm:$0xff]
          %v3889 = vld [vmem:[#allocation6 + $0x30] sm:$0xff]
          %v3890 = vld [vmem:[#allocation6 + $0x38] sm:$0xff]
          %v3891 = vld [vmem:[#allocation6 + $0x40] sm:$0xff]
          %v3892 = vld [vmem:[#allocation6 + $0x48] sm:$0xff]
          %v3893 = vld [vmem:[#allocation6 + $0x50] sm:$0xff]
          %v3894 = vld [vmem:[#allocation6 + $0x58] sm:$0xff]
          %v3895 = vld [vmem:[#allocation6 + $0x60] sm:$0xff]
          %v3896 = vld [vmem:[#allocation6 + $0x68] sm:$0xff]
          %v3897 = vld [vmem:[#allocation6 + $0x70] sm:$0xff]
          %v3898 = vld [vmem:[#allocation6 + $0x78] sm:$0xff]
          %v3899 = vld [vmem:[#allocation6 + $0x80] sm:$0xff]
          %v3900 = vld [vmem:[#allocation6 + $0x88] sm:$0xff]
          %v3901 = vld [vmem:[#allocation6 + $0x90] sm:$0xff]
          %v3902 = vld [vmem:[#allocation6 + $0x98] sm:$0xff]
          %v3903 = vld [vmem:[#allocation6 + $0xa0] sm:$0xff]
          %v3904 = vld [vmem:[#allocation6 + $0xa8] sm:$0xff]
          %v3905 = vld [vmem:[#allocation6 + $0xb0] sm:$0xff]
          %v3906 = vld [vmem:[#allocation6 + $0xb8] sm:$0xff]
          %v3907 = vld [vmem:[#allocation6 + $0xc0] sm:$0xff]
          %v3908 = vld [vmem:[#allocation6 + $0xc8] sm:$0xff]
          %v3909 = vld [vmem:[#allocation6 + $0xd0] sm:$0xff]
          %v3910 = vld [vmem:[#allocation6 + $0xd8] sm:$0xff]
          %v3911 = vld [vmem:[#allocation6 + $0xe0] sm:$0xff]
          %v3912 = vld [vmem:[#allocation6 + $0xe8] sm:$0xff]
          %v3913 = vld [vmem:[#allocation6 + $0xf0] sm:$0xff]
          %v3914 = vld [vmem:[#allocation6 + $0xf8] sm:$0xff]
          %v3915 = vld [vmem:[#allocation6 + $0x100] sm:$0xff]
          %v3916 = vld [vmem:[#allocation6 + $0x108] sm:$0xff]
          %v3917 = vld [vmem:[#allocation6 + $0x110] sm:$0xff]
          %v3918 = vld [vmem:[#allocation6 + $0x118] sm:$0xff]
          %v3919 = vld [vmem:[#allocation6 + $0x120] sm:$0xff]
          %v3920 = vld [vmem:[#allocation6 + $0x128] sm:$0xff]
          %v3921 = vld [vmem:[#allocation6 + $0x130] sm:$0xff]
          %v3922 = vld [vmem:[#allocation6 + $0x138] sm:$0xff]
          %v3923 = vld [vmem:[#allocation6 + $0x140] sm:$0xff]
          %v3924 = vld [vmem:[#allocation6 + $0x148] sm:$0xff]
          %v3925 = vld [vmem:[#allocation6 + $0x150] sm:$0xff]
          %v3926 = vld [vmem:[#allocation6 + $0x158] sm:$0xff]
          %v3927 = vld [vmem:[#allocation6 + $0x160] sm:$0xff]
          %v3928 = vld [vmem:[#allocation6 + $0x168] sm:$0xff]
          %v3929 = vld [vmem:[#allocation6 + $0x170] sm:$0xff]
          %v3930 = vld [vmem:[#allocation6 + $0x178] sm:$0xff]
          %v3931 = vadd.f32 %v3883, %v3780
          %v3932 = vadd.f32 %v3884, %v3781
          %v3933 = vadd.f32 %v3885, %v3782
          %v3934 = vadd.f32 %v3886, %v3783
          %v3935 = vadd.f32 %v3887, %v3784
          %v3936 = vadd.f32 %v3888, %v3785
          %v3937 = vadd.f32 %v3889, %v3786
          %v3938 = vadd.f32 %v3890, %v3787
          %v3939 = vadd.f32 %v3891, %v3788
          %v3940 = vadd.f32 %v3892, %v3789
          %v3941 = vadd.f32 %v3893, %v3790
          %v3942 = vadd.f32 %v3894, %v3791
          %v3943 = vadd.f32 %v3895, %v3792
          %v3944 = vadd.f32 %v3896, %v3793
          %v3945 = vadd.f32 %v3897, %v3794
          %v3946 = vadd.f32 %v3898, %v3795
          %v3947 = vadd.f32 %v3899, %v3796
          %v3948 = vadd.f32 %v3900, %v3797
          %v3949 = vadd.f32 %v3901, %v3798
          %v3950 = vadd.f32 %v3902, %v3799
          %v3951 = vadd.f32 %v3903, %v3800
          %v3952 = vadd.f32 %v3904, %v3801
          %v3953 = vadd.f32 %v3905, %v3802
          %v3954 = vadd.f32 %v3906, %v3803
          %v3955 = vadd.f32 %v3907, %v3804
          %v3956 = vadd.f32 %v3908, %v3805
          %v3957 = vadd.f32 %v3909, %v3806
          %v3958 = vadd.f32 %v3910, %v3807
          %v3959 = vadd.f32 %v3911, %v3808
          %v3960 = vadd.f32 %v3912, %v3809
          %v3961 = vadd.f32 %v3913, %v3810
          %v3962 = vadd.f32 %v3914, %v3811
          %v3963 = vadd.f32 %v3915, %v3812
          %v3964 = vadd.f32 %v3916, %v3813
          %v3965 = vadd.f32 %v3917, %v3814
          %v3966 = vadd.f32 %v3918, %v3815
          %v3967 = vadd.f32 %v3919, %v3816
          %v3968 = vadd.f32 %v3920, %v3817
          %v3969 = vadd.f32 %v3921, %v3818
          %v3970 = vadd.f32 %v3922, %v3819
          %v3971 = vadd.f32 %v3923, %v3820
          %v3972 = vadd.f32 %v3924, %v3821
          %v3973 = vadd.f32 %v3925, %v3822
          %v3974 = vadd.f32 %v3926, %v3823
          %v3975 = vadd.f32 %v3927, %v3824
          %v3976 = vadd.f32 %v3928, %v3825
          %v3977 = vadd.f32 %v3929, %v3826
          %v3978 = vadd.f32 %v3930, %v3827
          %3979 = vst.msk [vmem:[#allocation6] sm:$0xff] %vm1716, %v3931
          %3980 = vst.msk [vmem:[#allocation6 + $0x8] sm:$0xff] %vm1716, %v3932
          %3981 = vst.msk [vmem:[#allocation6 + $0x10] sm:$0xff] %vm1716, %v3933
          %3982 = vst.msk [vmem:[#allocation6 + $0x18] sm:$0xff] %vm1716, %v3934
          %3983 = vst.msk [vmem:[#allocation6 + $0x20] sm:$0xff] %vm1716, %v3935
          %3984 = vst.msk [vmem:[#allocation6 + $0x28] sm:$0xff] %vm1716, %v3936
          %3985 = vst.msk [vmem:[#allocation6 + $0x30] sm:$0xff] %vm1716, %v3937
          %3986 = vst.msk [vmem:[#allocation6 + $0x38] sm:$0xff] %vm1716, %v3938
          %3987 = vst.msk [vmem:[#allocation6 + $0x40] sm:$0xff] %vm1716, %v3939
          %3988 = vst.msk [vmem:[#allocation6 + $0x48] sm:$0xff] %vm1716, %v3940
          %3989 = vst.msk [vmem:[#allocation6 + $0x50] sm:$0xff] %vm1716, %v3941
          %3990 = vst.msk [vmem:[#allocation6 + $0x58] sm:$0xff] %vm1716, %v3942
          %3991 = vst.msk [vmem:[#allocation6 + $0x60] sm:$0xff] %vm1716, %v3943
          %3992 = vst.msk [vmem:[#allocation6 + $0x68] sm:$0xff] %vm1716, %v3944
          %3993 = vst.msk [vmem:[#allocation6 + $0x70] sm:$0xff] %vm1716, %v3945
          %3994 = vst.msk [vmem:[#allocation6 + $0x78] sm:$0xff] %vm1716, %v3946
          %3995 = vst.msk [vmem:[#allocation6 + $0x80] sm:$0xff] %vm1716, %v3947
          %3996 = vst.msk [vmem:[#allocation6 + $0x88] sm:$0xff] %vm1716, %v3948
          %3997 = vst.msk [vmem:[#allocation6 + $0x90] sm:$0xff] %vm1716, %v3949
          %3998 = vst.msk [vmem:[#allocation6 + $0x98] sm:$0xff] %vm1716, %v3950
          %3999 = vst.msk [vmem:[#allocation6 + $0xa0] sm:$0xff] %vm1716, %v3951
          %4000 = vst.msk [vmem:[#allocation6 + $0xa8] sm:$0xff] %vm1716, %v3952
          %4001 = vst.msk [vmem:[#allocation6 + $0xb0] sm:$0xff] %vm1716, %v3953
          %4002 = vst.msk [vmem:[#allocation6 + $0xb8] sm:$0xff] %vm1716, %v3954
          %4003 = vst.msk [vmem:[#allocation6 + $0xc0] sm:$0xff] %vm1716, %v3955
          %4004 = vst.msk [vmem:[#allocation6 + $0xc8] sm:$0xff] %vm1716, %v3956
          %4005 = vst.msk [vmem:[#allocation6 + $0xd0] sm:$0xff] %vm1716, %v3957
          %4006 = vst.msk [vmem:[#allocation6 + $0xd8] sm:$0xff] %vm1716, %v3958
          %4007 = vst.msk [vmem:[#allocation6 + $0xe0] sm:$0xff] %vm1716, %v3959
          %4008 = vst.msk [vmem:[#allocation6 + $0xe8] sm:$0xff] %vm1716, %v3960
          %4009 = vst.msk [vmem:[#allocation6 + $0xf0] sm:$0xff] %vm1716, %v3961
          %4010 = vst.msk [vmem:[#allocation6 + $0xf8] sm:$0xff] %vm1716, %v3962
          %4011 = vst.msk [vmem:[#allocation6 + $0x100] sm:$0xff] %vm1716, %v3963
          %4012 = vst.msk [vmem:[#allocation6 + $0x108] sm:$0xff] %vm1716, %v3964
          %4013 = vst.msk [vmem:[#allocation6 + $0x110] sm:$0xff] %vm1716, %v3965
          %4014 = vst.msk [vmem:[#allocation6 + $0x118] sm:$0xff] %vm1716, %v3966
          %4015 = vst.msk [vmem:[#allocation6 + $0x120] sm:$0xff] %vm1716, %v3967
          %4016 = vst.msk [vmem:[#allocation6 + $0x128] sm:$0xff] %vm1716, %v3968
          %4017 = vst.msk [vmem:[#allocation6 + $0x130] sm:$0xff] %vm1716, %v3969
          %4018 = vst.msk [vmem:[#allocation6 + $0x138] sm:$0xff] %vm1716, %v3970
          %4019 = vst.msk [vmem:[#allocation6 + $0x140] sm:$0xff] %vm1716, %v3971
          %4020 = vst.msk [vmem:[#allocation6 + $0x148] sm:$0xff] %vm1716, %v3972
          %4021 = vst.msk [vmem:[#allocation6 + $0x150] sm:$0xff] %vm1716, %v3973
          %4022 = vst.msk [vmem:[#allocation6 + $0x158] sm:$0xff] %vm1716, %v3974
          %4023 = vst.msk [vmem:[#allocation6 + $0x160] sm:$0xff] %vm1716, %v3975
          %4024 = vst.msk [vmem:[#allocation6 + $0x168] sm:$0xff] %vm1716, %v3976
          %4025 = vst.msk [vmem:[#allocation6 + $0x170] sm:$0xff] %vm1716, %v3977
          %4026 = vst.msk [vmem:[#allocation6 + $0x178] sm:$0xff] %vm1716, %v3978
        $region80: #{tpu_custom_call.1} parent=43 // pred_fallthru
          _
        %p4027 = scmp.eq.s32.totalorder %s33, 7
        // Predicated region
        $region81: #{tpu_custom_call.1} parent=43 // pred_check
          %p4028 = pneg %p4027
        $region82: #{tpu_custom_call.1} parent=43 // pred_check_branch
          %4030 = sbr.rel (%p4028) target = $region84
        $region83: #{tpu_custom_call.1} parent=43 // pred_region
          %v4031 = vld [vmem:[#allocation6] sm:$0xff]
          %v4032 = vld [vmem:[#allocation6 + $0x8] sm:$0xff]
          %v4033 = vld [vmem:[#allocation6 + $0x10] sm:$0xff]
          %v4034 = vld [vmem:[#allocation6 + $0x18] sm:$0xff]
          %v4035 = vld [vmem:[#allocation6 + $0x20] sm:$0xff]
          %v4036 = vld [vmem:[#allocation6 + $0x28] sm:$0xff]
          %v4037 = vld [vmem:[#allocation6 + $0x30] sm:$0xff]
          %v4038 = vld [vmem:[#allocation6 + $0x38] sm:$0xff]
          %v4039 = vld [vmem:[#allocation6 + $0x40] sm:$0xff]
          %v4040 = vld [vmem:[#allocation6 + $0x48] sm:$0xff]
          %v4041 = vld [vmem:[#allocation6 + $0x50] sm:$0xff]
          %v4042 = vld [vmem:[#allocation6 + $0x58] sm:$0xff]
          %v4043 = vld [vmem:[#allocation6 + $0x60] sm:$0xff]
          %v4044 = vld [vmem:[#allocation6 + $0x68] sm:$0xff]
          %v4045 = vld [vmem:[#allocation6 + $0x70] sm:$0xff]
          %v4046 = vld [vmem:[#allocation6 + $0x78] sm:$0xff]
          %v4047 = vld [vmem:[#allocation6 + $0x80] sm:$0xff]
          %v4048 = vld [vmem:[#allocation6 + $0x88] sm:$0xff]
          %v4049 = vld [vmem:[#allocation6 + $0x90] sm:$0xff]
          %v4050 = vld [vmem:[#allocation6 + $0x98] sm:$0xff]
          %v4051 = vld [vmem:[#allocation6 + $0xa0] sm:$0xff]
          %v4052 = vld [vmem:[#allocation6 + $0xa8] sm:$0xff]
          %v4053 = vld [vmem:[#allocation6 + $0xb0] sm:$0xff]
          %v4054 = vld [vmem:[#allocation6 + $0xb8] sm:$0xff]
          %v4055 = vld [vmem:[#allocation6 + $0xc0] sm:$0xff]
          %v4056 = vld [vmem:[#allocation6 + $0xc8] sm:$0xff]
          %v4057 = vld [vmem:[#allocation6 + $0xd0] sm:$0xff]
          %v4058 = vld [vmem:[#allocation6 + $0xd8] sm:$0xff]
          %v4059 = vld [vmem:[#allocation6 + $0xe0] sm:$0xff]
          %v4060 = vld [vmem:[#allocation6 + $0xe8] sm:$0xff]
          %v4061 = vld [vmem:[#allocation6 + $0xf0] sm:$0xff]
          %v4062 = vld [vmem:[#allocation6 + $0xf8] sm:$0xff]
          %v4063 = vld [vmem:[#allocation6 + $0x100] sm:$0xff]
          %v4064 = vld [vmem:[#allocation6 + $0x108] sm:$0xff]
          %v4065 = vld [vmem:[#allocation6 + $0x110] sm:$0xff]
          %v4066 = vld [vmem:[#allocation6 + $0x118] sm:$0xff]
          %v4067 = vld [vmem:[#allocation6 + $0x120] sm:$0xff]
          %v4068 = vld [vmem:[#allocation6 + $0x128] sm:$0xff]
          %v4069 = vld [vmem:[#allocation6 + $0x130] sm:$0xff]
          %v4070 = vld [vmem:[#allocation6 + $0x138] sm:$0xff]
          %v4071 = vld [vmem:[#allocation6 + $0x140] sm:$0xff]
          %v4072 = vld [vmem:[#allocation6 + $0x148] sm:$0xff]
          %v4073 = vld [vmem:[#allocation6 + $0x150] sm:$0xff]
          %v4074 = vld [vmem:[#allocation6 + $0x158] sm:$0xff]
          %v4075 = vld [vmem:[#allocation6 + $0x160] sm:$0xff]
          %v4076 = vld [vmem:[#allocation6 + $0x168] sm:$0xff]
          %v4077 = vld [vmem:[#allocation6 + $0x170] sm:$0xff]
          %v4078 = vld [vmem:[#allocation6 + $0x178] sm:$0xff]
          %v4079 = vld [vmem:[%s381] sm:$0xff]
          %v4080 = vld [vmem:[%s381 + $0x8] sm:$0xff]
          %v4081 = vld [vmem:[%s381 + $0x10] sm:$0xff]
          %v4082 = vld [vmem:[%s381 + $0x18] sm:$0xff]
          %v4083 = vld [vmem:[%s381 + $0x20] sm:$0xff]
          %v4084 = vld [vmem:[%s381 + $0x28] sm:$0xff]
          %v4085 = vld [vmem:[%s381 + $0x30] sm:$0xff]
          %v4086 = vld [vmem:[%s381 + $0x38] sm:$0xff]
          %v4087 = vld [vmem:[%s389] sm:$0x1]
          %v4089 = vlaneseq
          %v4090 = vshrl.u32 %v4089, 7
          %v4091 = vsub.s32 0, %v4090
          %v4092 = vrot.slane %v4087, %v4091
          %v4095 = vsel %vm1716, %v4031, 0
          %v4098 = vsel %vm1716, %v4032, 0
          %v4101 = vsel %vm1716, %v4033, 0
          %v4104 = vsel %vm1716, %v4034, 0
          %v4107 = vsel %vm1716, %v4035, 0
          %v4110 = vsel %vm1716, %v4036, 0
          %v4113 = vsel %vm1716, %v4037, 0
          %v4116 = vsel %vm1716, %v4038, 0
          %v4119 = vsel %vm1716, %v4039, 0
          %v4122 = vsel %vm1716, %v4040, 0
          %v4125 = vsel %vm1716, %v4041, 0
          %v4128 = vsel %vm1716, %v4042, 0
          %v4131 = vsel %vm1716, %v4043, 0
          %v4134 = vsel %vm1716, %v4044, 0
          %v4137 = vsel %vm1716, %v4045, 0
          %v4140 = vsel %vm1716, %v4046, 0
          %v4143 = vsel %vm1716, %v4047, 0
          %v4146 = vsel %vm1716, %v4048, 0
          %v4149 = vsel %vm1716, %v4049, 0
          %v4152 = vsel %vm1716, %v4050, 0
          %v4155 = vsel %vm1716, %v4051, 0
          %v4158 = vsel %vm1716, %v4052, 0
          %v4161 = vsel %vm1716, %v4053, 0
          %v4164 = vsel %vm1716, %v4054, 0
          %v4167 = vsel %vm1716, %v4055, 0
          %v4170 = vsel %vm1716, %v4056, 0
          %v4173 = vsel %vm1716, %v4057, 0
          %v4176 = vsel %vm1716, %v4058, 0
          %v4179 = vsel %vm1716, %v4059, 0
          %v4182 = vsel %vm1716, %v4060, 0
          %v4185 = vsel %vm1716, %v4061, 0
          %v4188 = vsel %vm1716, %v4062, 0
          %v4191 = vsel %vm1716, %v4063, 0
          %v4194 = vsel %vm1716, %v4064, 0
          %v4197 = vsel %vm1716, %v4065, 0
          %v4200 = vsel %vm1716, %v4066, 0
          %v4203 = vsel %vm1716, %v4067, 0
          %v4206 = vsel %vm1716, %v4068, 0
          %v4209 = vsel %vm1716, %v4069, 0
          %v4212 = vsel %vm1716, %v4070, 0
          %v4215 = vsel %vm1716, %v4071, 0
          %v4218 = vsel %vm1716, %v4072, 0
          %v4221 = vsel %vm1716, %v4073, 0
          %v4224 = vsel %vm1716, %v4074, 0
          %v4227 = vsel %vm1716, %v4075, 0
          %v4230 = vsel %vm1716, %v4076, 0
          %v4233 = vsel %vm1716, %v4077, 0
          %v4236 = vsel %vm1716, %v4078, 0
          %4238 = vmatprep.subr.mxu0 0.0
          %4239 = vmatpush1.msra.mxu0 %v4079
          %4240 = vmatprep.subr.mxu0 0.0
          %4241 = vmatpush1.msra.mxu0 %v4080
          %4242 = vmatprep.subr.mxu0 0.0
          %4243 = vmatpush1.msra.mxu0 %v4081
          %4244 = vmatprep.subr.mxu0 0.0
          %4245 = vmatpush1.msra.mxu0 %v4082
          %4246 = vmatprep.subr.mxu0 0.0
          %4247 = vmatpush1.msra.mxu0 %v4083
          %4248 = vmatprep.subr.mxu0 0.0
          %4249 = vmatpush1.msra.mxu0 %v4084
          %4250 = vmatprep.subr.mxu0 0.0
          %4251 = vmatpush1.msra.mxu0 %v4085
          %4252 = vmatprep.subr.mxu0 0.0
          %4253 = vmatpush1.msra.mxu0 %v4086
          %4254 = vmatprep.subr.mxu0 0.0
          %4255 = vmatpush1.msra.mxu0 0.0
          %4256 = vmatprep.subr.mxu0 0.0
          %4257 = vmatpush1.msra.mxu0 0.0
          %4258 = vmatprep.subr.mxu0 0.0
          %4259 = vmatpush1.msra.mxu0 0.0
          %4260 = vmatprep.subr.mxu0 0.0
          %4261 = vmatpush1.msra.mxu0 0.0
          %4262 = vmatprep.subr.mxu0 0.0
          %4263 = vmatpush1.msra.mxu0 0.0
          %4264 = vmatprep.subr.mxu0 0.0
          %4265 = vmatpush1.msra.mxu0 0.0
          %4266 = vmatprep.subr.mxu0 0.0
          %4267 = vmatpush1.msra.mxu0 0.0
          %4268 = vmatprep.subr.mxu0 0.0
          %4269 = vmatpush1.msra.mxu0 0.0
          %4270 = vmatprep.subr.mxu0 0.0
          %4271 = vmatpush1.msra.mxu0 0.0
          %4272 = vmatprep.subr.mxu0 0.0
          %4273 = vmatpush1.msra.mxu0 0.0
          %4274 = vmatprep.subr.mxu0 0.0
          %4275 = vmatpush1.msra.mxu0 0.0
          %4276 = vmatprep.subr.mxu0 0.0
          %4277 = vmatpush1.msra.mxu0 0.0
          %4278 = vmatprep.subr.mxu0 0.0
          %4279 = vmatpush1.msra.mxu0 0.0
          %4280 = vmatprep.subr.mxu0 0.0
          %4281 = vmatpush1.msra.mxu0 0.0
          %4282 = vmatprep.subr.mxu0 0.0
          %4283 = vmatpush1.msra.mxu0 0.0
          %4284 = vmatprep.subr.mxu0 0.0
          %4285 = vmatpush1.msra.mxu0 0.0
          %4286 = vmatprep.subr.mxu0 0.0
          %4287 = vmatpush1.msra.mxu0 0.0
          %4288 = vmatprep.subr.mxu0 0.0
          %4289 = vmatpush1.msra.mxu0 0.0
          %4290 = vmatprep.subr.mxu0 0.0
          %4291 = vmatpush1.msra.mxu0 0.0
          %4292 = vmatprep.subr.mxu0 0.0
          %4293 = vmatpush1.msra.mxu0 0.0
          %4294 = vmatprep.subr.mxu0 0.0
          %4295 = vmatpush1.msra.mxu0 0.0
          %4296 = vmatprep.subr.mxu0 0.0
          %4297 = vmatpush1.msra.mxu0 0.0
          %4298 = vmatprep.subr.mxu0 0.0
          %4299 = vmatpush1.msra.mxu0 0.0
          %4300 = vmatprep.subr.mxu0 0.0
          %4301 = vmatpush1.msra.mxu0 0.0
          %4302 = vmatprep.mubr.f32.mxu0 0.0
          %4303 = vmatmul.mubr.f32.gmra.mrb[0].mxu0 %v4095
          %v4304 = vpop.f32.mrb[0].mxu0
          %v4305 = vadd.f32 %v4092, %v4304
          %v4306 = vpop.f32.mrb[0].mxu0
          %4307 = vmatprep.mubr.f32.mxu0 0.0
          %4308 = vmatmul.mubr.f32.gmra.mrb[0].mxu0 %v4098
          %v4309 = vpop.f32.mrb[0].mxu0
          %v4310 = vadd.f32 %v4092, %v4309
          %v4311 = vpop.f32.mrb[0].mxu0
          %4312 = vmatprep.mubr.f32.mxu0 0.0
          %4313 = vmatmul.mubr.f32.gmra.mrb[0].mxu0 %v4101
          %v4314 = vpop.f32.mrb[0].mxu0
          %v4315 = vadd.f32 %v4092, %v4314
          %v4316 = vpop.f32.mrb[0].mxu0
          %4317 = vmatprep.mubr.f32.mxu0 0.0
          %4318 = vmatmul.mubr.f32.gmra.mrb[0].mxu0 %v4104
          %v4319 = vpop.f32.mrb[0].mxu0
          %v4320 = vadd.f32 %v4092, %v4319
          %v4321 = vpop.f32.mrb[0].mxu0
          %4322 = vmatprep.mubr.f32.mxu0 0.0
          %4323 = vmatmul.mubr.f32.gmra.mrb[0].mxu0 %v4107
          %v4324 = vpop.f32.mrb[0].mxu0
          %v4325 = vadd.f32 %v4092, %v4324
          %v4326 = vpop.f32.mrb[0].mxu0
          %4327 = vmatprep.mubr.f32.mxu0 0.0
          %4328 = vmatmul.mubr.f32.gmra.mrb[0].mxu0 %v4110
          %v4329 = vpop.f32.mrb[0].mxu0
          %v4330 = vadd.f32 %v4092, %v4329
          %v4331 = vpop.f32.mrb[0].mxu0
          %4332 = vmatprep.mubr.f32.mxu0 0.0
          %4333 = vmatmul.mubr.f32.gmra.mrb[0].mxu0 %v4113
          %v4334 = vpop.f32.mrb[0].mxu0
          %v4335 = vadd.f32 %v4092, %v4334
          %v4336 = vpop.f32.mrb[0].mxu0
          %4337 = vmatprep.mubr.f32.mxu0 0.0
          %4338 = vmatmul.mubr.f32.gmra.mrb[0].mxu0 %v4116
          %v4339 = vpop.f32.mrb[0].mxu0
          %v4340 = vadd.f32 %v4092, %v4339
          %v4341 = vpop.f32.mrb[0].mxu0
          %4342 = vmatprep.mubr.f32.mxu0 0.0
          %4343 = vmatmul.mubr.f32.gmra.mrb[0].mxu0 %v4119
          %v4344 = vpop.f32.mrb[0].mxu0
          %v4345 = vadd.f32 %v4092, %v4344
          %v4346 = vpop.f32.mrb[0].mxu0
          %4347 = vmatprep.mubr.f32.mxu0 0.0
          %4348 = vmatmul.mubr.f32.gmra.mrb[0].mxu0 %v4122
          %v4349 = vpop.f32.mrb[0].mxu0
          %v4350 = vadd.f32 %v4092, %v4349
          %v4351 = vpop.f32.mrb[0].mxu0
          %4352 = vmatprep.mubr.f32.mxu0 0.0
          %4353 = vmatmul.mubr.f32.gmra.mrb[0].mxu0 %v4125
          %v4354 = vpop.f32.mrb[0].mxu0
          %v4355 = vadd.f32 %v4092, %v4354
          %v4356 = vpop.f32.mrb[0].mxu0
          %4357 = vmatprep.mubr.f32.mxu0 0.0
          %4358 = vmatmul.mubr.f32.gmra.mrb[0].mxu0 %v4128
          %v4359 = vpop.f32.mrb[0].mxu0
          %v4360 = vadd.f32 %v4092, %v4359
          %v4361 = vpop.f32.mrb[0].mxu0
          %4362 = vmatprep.mubr.f32.mxu0 0.0
          %4363 = vmatmul.mubr.f32.gmra.mrb[0].mxu0 %v4131
          %v4364 = vpop.f32.mrb[0].mxu0
          %v4365 = vadd.f32 %v4092, %v4364
          %v4366 = vpop.f32.mrb[0].mxu0
          %4367 = vmatprep.mubr.f32.mxu0 0.0
          %4368 = vmatmul.mubr.f32.gmra.mrb[0].mxu0 %v4134
          %v4369 = vpop.f32.mrb[0].mxu0
          %v4370 = vadd.f32 %v4092, %v4369
          %v4371 = vpop.f32.mrb[0].mxu0
          %4372 = vmatprep.mubr.f32.mxu0 0.0
          %4373 = vmatmul.mubr.f32.gmra.mrb[0].mxu0 %v4137
          %v4374 = vpop.f32.mrb[0].mxu0
          %v4375 = vadd.f32 %v4092, %v4374
          %v4376 = vpop.f32.mrb[0].mxu0
          %4377 = vmatprep.mubr.f32.mxu0 0.0
          %4378 = vmatmul.mubr.f32.gmra.mrb[0].mxu0 %v4140
          %v4379 = vpop.f32.mrb[0].mxu0
          %v4380 = vadd.f32 %v4092, %v4379
          %v4381 = vpop.f32.mrb[0].mxu0
          %4382 = vmatprep.mubr.f32.mxu0 0.0
          %4383 = vmatmul.mubr.f32.gmra.mrb[0].mxu0 %v4143
          %v4384 = vpop.f32.mrb[0].mxu0
          %v4385 = vadd.f32 %v4092, %v4384
          %v4386 = vpop.f32.mrb[0].mxu0
          %4387 = vmatprep.mubr.f32.mxu0 0.0
          %4388 = vmatmul.mubr.f32.gmra.mrb[0].mxu0 %v4146
          %v4389 = vpop.f32.mrb[0].mxu0
          %v4390 = vadd.f32 %v4092, %v4389
          %v4391 = vpop.f32.mrb[0].mxu0
          %4392 = vmatprep.mubr.f32.mxu0 0.0
          %4393 = vmatmul.mubr.f32.gmra.mrb[0].mxu0 %v4149
          %v4394 = vpop.f32.mrb[0].mxu0
          %v4395 = vadd.f32 %v4092, %v4394
          %v4396 = vpop.f32.mrb[0].mxu0
          %4397 = vmatprep.mubr.f32.mxu0 0.0
          %4398 = vmatmul.mubr.f32.gmra.mrb[0].mxu0 %v4152
          %v4399 = vpop.f32.mrb[0].mxu0
          %v4400 = vadd.f32 %v4092, %v4399
          %v4401 = vpop.f32.mrb[0].mxu0
          %4402 = vmatprep.mubr.f32.mxu0 0.0
          %4403 = vmatmul.mubr.f32.gmra.mrb[0].mxu0 %v4155
          %v4404 = vpop.f32.mrb[0].mxu0
          %v4405 = vadd.f32 %v4092, %v4404
          %v4406 = vpop.f32.mrb[0].mxu0
          %4407 = vmatprep.mubr.f32.mxu0 0.0
          %4408 = vmatmul.mubr.f32.gmra.mrb[0].mxu0 %v4158
          %v4409 = vpop.f32.mrb[0].mxu0
          %v4410 = vadd.f32 %v4092, %v4409
          %v4411 = vpop.f32.mrb[0].mxu0
          %4412 = vmatprep.mubr.f32.mxu0 0.0
          %4413 = vmatmul.mubr.f32.gmra.mrb[0].mxu0 %v4161
          %v4414 = vpop.f32.mrb[0].mxu0
          %v4415 = vadd.f32 %v4092, %v4414
          %v4416 = vpop.f32.mrb[0].mxu0
          %4417 = vmatprep.mubr.f32.mxu0 0.0
          %4418 = vmatmul.mubr.f32.gmra.mrb[0].mxu0 %v4164
          %v4419 = vpop.f32.mrb[0].mxu0
          %v4420 = vadd.f32 %v4092, %v4419
          %v4421 = vpop.f32.mrb[0].mxu0
          %4422 = vmatprep.mubr.f32.mxu0 0.0
          %4423 = vmatmul.mubr.f32.gmra.mrb[0].mxu0 %v4167
          %v4424 = vpop.f32.mrb[0].mxu0
          %v4425 = vadd.f32 %v4092, %v4424
          %v4426 = vpop.f32.mrb[0].mxu0
          %4427 = vmatprep.mubr.f32.mxu0 0.0
          %4428 = vmatmul.mubr.f32.gmra.mrb[0].mxu0 %v4170
          %v4429 = vpop.f32.mrb[0].mxu0
          %v4430 = vadd.f32 %v4092, %v4429
          %v4431 = vpop.f32.mrb[0].mxu0
          %4432 = vmatprep.mubr.f32.mxu0 0.0
          %4433 = vmatmul.mubr.f32.gmra.mrb[0].mxu0 %v4173
          %v4434 = vpop.f32.mrb[0].mxu0
          %v4435 = vadd.f32 %v4092, %v4434
          %v4436 = vpop.f32.mrb[0].mxu0
          %4437 = vmatprep.mubr.f32.mxu0 0.0
          %4438 = vmatmul.mubr.f32.gmra.mrb[0].mxu0 %v4176
          %v4439 = vpop.f32.mrb[0].mxu0
          %v4440 = vadd.f32 %v4092, %v4439
          %v4441 = vpop.f32.mrb[0].mxu0
          %4442 = vmatprep.mubr.f32.mxu0 0.0
          %4443 = vmatmul.mubr.f32.gmra.mrb[0].mxu0 %v4179
          %v4444 = vpop.f32.mrb[0].mxu0
          %v4445 = vadd.f32 %v4092, %v4444
          %v4446 = vpop.f32.mrb[0].mxu0
          %4447 = vmatprep.mubr.f32.mxu0 0.0
          %4448 = vmatmul.mubr.f32.gmra.mrb[0].mxu0 %v4182
          %v4449 = vpop.f32.mrb[0].mxu0
          %v4450 = vadd.f32 %v4092, %v4449
          %v4451 = vpop.f32.mrb[0].mxu0
          %4452 = vmatprep.mubr.f32.mxu0 0.0
          %4453 = vmatmul.mubr.f32.gmra.mrb[0].mxu0 %v4185
          %v4454 = vpop.f32.mrb[0].mxu0
          %v4455 = vadd.f32 %v4092, %v4454
          %v4456 = vpop.f32.mrb[0].mxu0
          %4457 = vmatprep.mubr.f32.mxu0 0.0
          %4458 = vmatmul.mubr.f32.gmra.mrb[0].mxu0 %v4188
          %v4459 = vpop.f32.mrb[0].mxu0
          %v4460 = vadd.f32 %v4092, %v4459
          %v4461 = vpop.f32.mrb[0].mxu0
          %4462 = vmatprep.mubr.f32.mxu0 0.0
          %4463 = vmatmul.mubr.f32.gmra.mrb[0].mxu0 %v4191
          %v4464 = vpop.f32.mrb[0].mxu0
          %v4465 = vadd.f32 %v4092, %v4464
          %v4466 = vpop.f32.mrb[0].mxu0
          %4467 = vmatprep.mubr.f32.mxu0 0.0
          %4468 = vmatmul.mubr.f32.gmra.mrb[0].mxu0 %v4194
          %v4469 = vpop.f32.mrb[0].mxu0
          %v4470 = vadd.f32 %v4092, %v4469
          %v4471 = vpop.f32.mrb[0].mxu0
          %4472 = vmatprep.mubr.f32.mxu0 0.0
          %4473 = vmatmul.mubr.f32.gmra.mrb[0].mxu0 %v4197
          %v4474 = vpop.f32.mrb[0].mxu0
          %v4475 = vadd.f32 %v4092, %v4474
          %v4476 = vpop.f32.mrb[0].mxu0
          %4477 = vmatprep.mubr.f32.mxu0 0.0
          %4478 = vmatmul.mubr.f32.gmra.mrb[0].mxu0 %v4200
          %v4479 = vpop.f32.mrb[0].mxu0
          %v4480 = vadd.f32 %v4092, %v4479
          %v4481 = vpop.f32.mrb[0].mxu0
          %4482 = vmatprep.mubr.f32.mxu0 0.0
          %4483 = vmatmul.mubr.f32.gmra.mrb[0].mxu0 %v4203
          %v4484 = vpop.f32.mrb[0].mxu0
          %v4485 = vadd.f32 %v4092, %v4484
          %v4486 = vpop.f32.mrb[0].mxu0
          %4487 = vmatprep.mubr.f32.mxu0 0.0
          %4488 = vmatmul.mubr.f32.gmra.mrb[0].mxu0 %v4206
          %v4489 = vpop.f32.mrb[0].mxu0
          %v4490 = vadd.f32 %v4092, %v4489
          %v4491 = vpop.f32.mrb[0].mxu0
          %4492 = vmatprep.mubr.f32.mxu0 0.0
          %4493 = vmatmul.mubr.f32.gmra.mrb[0].mxu0 %v4209
          %v4494 = vpop.f32.mrb[0].mxu0
          %v4495 = vadd.f32 %v4092, %v4494
          %v4496 = vpop.f32.mrb[0].mxu0
          %4497 = vmatprep.mubr.f32.mxu0 0.0
          %4498 = vmatmul.mubr.f32.gmra.mrb[0].mxu0 %v4212
          %v4499 = vpop.f32.mrb[0].mxu0
          %v4500 = vadd.f32 %v4092, %v4499
          %v4501 = vpop.f32.mrb[0].mxu0
          %4502 = vmatprep.mubr.f32.mxu0 0.0
          %4503 = vmatmul.mubr.f32.gmra.mrb[0].mxu0 %v4215
          %v4504 = vpop.f32.mrb[0].mxu0
          %v4505 = vadd.f32 %v4092, %v4504
          %v4506 = vpop.f32.mrb[0].mxu0
          %4507 = vmatprep.mubr.f32.mxu0 0.0
          %4508 = vmatmul.mubr.f32.gmra.mrb[0].mxu0 %v4218
          %v4509 = vpop.f32.mrb[0].mxu0
          %v4510 = vadd.f32 %v4092, %v4509
          %v4511 = vpop.f32.mrb[0].mxu0
          %4512 = vmatprep.mubr.f32.mxu0 0.0
          %4513 = vmatmul.mubr.f32.gmra.mrb[0].mxu0 %v4221
          %v4514 = vpop.f32.mrb[0].mxu0
          %v4515 = vadd.f32 %v4092, %v4514
          %v4516 = vpop.f32.mrb[0].mxu0
          %4517 = vmatprep.mubr.f32.mxu0 0.0
          %4518 = vmatmul.mubr.f32.gmra.mrb[0].mxu0 %v4224
          %v4519 = vpop.f32.mrb[0].mxu0
          %v4520 = vadd.f32 %v4092, %v4519
          %v4521 = vpop.f32.mrb[0].mxu0
          %4522 = vmatprep.mubr.f32.mxu0 0.0
          %4523 = vmatmul.mubr.f32.gmra.mrb[0].mxu0 %v4227
          %v4524 = vpop.f32.mrb[0].mxu0
          %v4525 = vadd.f32 %v4092, %v4524
          %v4526 = vpop.f32.mrb[0].mxu0
          %4527 = vmatprep.mubr.f32.mxu0 0.0
          %4528 = vmatmul.mubr.f32.gmra.mrb[0].mxu0 %v4230
          %v4529 = vpop.f32.mrb[0].mxu0
          %v4530 = vadd.f32 %v4092, %v4529
          %v4531 = vpop.f32.mrb[0].mxu0
          %4532 = vmatprep.mubr.f32.mxu0 0.0
          %4533 = vmatmul.mubr.f32.gmra.mrb[0].mxu0 %v4233
          %v4534 = vpop.f32.mrb[0].mxu0
          %v4535 = vadd.f32 %v4092, %v4534
          %v4536 = vpop.f32.mrb[0].mxu0
          %4537 = vmatprep.mubr.f32.mxu0 0.0
          %4538 = vmatmul.mubr.f32.gmra.mrb[0].mxu0 %v4236
          %v4539 = vpop.f32.mrb[0].mxu0
          %v4540 = vadd.f32 %v4092, %v4539
          %v4541 = vpop.f32.mrb[0].mxu0
          %4542 = vdwg.mxu0
          %4543 = vst.msk [vmem:[#allocation2] sm:$0xff] %vm1716, %v4305
          %4544 = vst.msk [vmem:[#allocation2 + $0x8] sm:$0xff] %vm1716, %v4310
          %4545 = vst.msk [vmem:[#allocation2 + $0x10] sm:$0xff] %vm1716, %v4315
          %4546 = vst.msk [vmem:[#allocation2 + $0x18] sm:$0xff] %vm1716, %v4320
          %4547 = vst.msk [vmem:[#allocation2 + $0x20] sm:$0xff] %vm1716, %v4325
          %4548 = vst.msk [vmem:[#allocation2 + $0x28] sm:$0xff] %vm1716, %v4330
          %4549 = vst.msk [vmem:[#allocation2 + $0x30] sm:$0xff] %vm1716, %v4335
          %4550 = vst.msk [vmem:[#allocation2 + $0x38] sm:$0xff] %vm1716, %v4340
          %4551 = vst.msk [vmem:[#allocation2 + $0x40] sm:$0xff] %vm1716, %v4345
          %4552 = vst.msk [vmem:[#allocation2 + $0x48] sm:$0xff] %vm1716, %v4350
          %4553 = vst.msk [vmem:[#allocation2 + $0x50] sm:$0xff] %vm1716, %v4355
          %4554 = vst.msk [vmem:[#allocation2 + $0x58] sm:$0xff] %vm1716, %v4360
          %4555 = vst.msk [vmem:[#allocation2 + $0x60] sm:$0xff] %vm1716, %v4365
          %4556 = vst.msk [vmem:[#allocation2 + $0x68] sm:$0xff] %vm1716, %v4370
          %4557 = vst.msk [vmem:[#allocation2 + $0x70] sm:$0xff] %vm1716, %v4375
          %4558 = vst.msk [vmem:[#allocation2 + $0x78] sm:$0xff] %vm1716, %v4380
          %4559 = vst.msk [vmem:[#allocation2 + $0x80] sm:$0xff] %vm1716, %v4385
          %4560 = vst.msk [vmem:[#allocation2 + $0x88] sm:$0xff] %vm1716, %v4390
          %4561 = vst.msk [vmem:[#allocation2 + $0x90] sm:$0xff] %vm1716, %v4395
          %4562 = vst.msk [vmem:[#allocation2 + $0x98] sm:$0xff] %vm1716, %v4400
          %4563 = vst.msk [vmem:[#allocation2 + $0xa0] sm:$0xff] %vm1716, %v4405
          %4564 = vst.msk [vmem:[#allocation2 + $0xa8] sm:$0xff] %vm1716, %v4410
          %4565 = vst.msk [vmem:[#allocation2 + $0xb0] sm:$0xff] %vm1716, %v4415
          %4566 = vst.msk [vmem:[#allocation2 + $0xb8] sm:$0xff] %vm1716, %v4420
          %4567 = vst.msk [vmem:[#allocation2 + $0xc0] sm:$0xff] %vm1716, %v4425
          %4568 = vst.msk [vmem:[#allocation2 + $0xc8] sm:$0xff] %vm1716, %v4430
          %4569 = vst.msk [vmem:[#allocation2 + $0xd0] sm:$0xff] %vm1716, %v4435
          %4570 = vst.msk [vmem:[#allocation2 + $0xd8] sm:$0xff] %vm1716, %v4440
          %4571 = vst.msk [vmem:[#allocation2 + $0xe0] sm:$0xff] %vm1716, %v4445
          %4572 = vst.msk [vmem:[#allocation2 + $0xe8] sm:$0xff] %vm1716, %v4450
          %4573 = vst.msk [vmem:[#allocation2 + $0xf0] sm:$0xff] %vm1716, %v4455
          %4574 = vst.msk [vmem:[#allocation2 + $0xf8] sm:$0xff] %vm1716, %v4460
          %4575 = vst.msk [vmem:[#allocation2 + $0x100] sm:$0xff] %vm1716, %v4465
          %4576 = vst.msk [vmem:[#allocation2 + $0x108] sm:$0xff] %vm1716, %v4470
          %4577 = vst.msk [vmem:[#allocation2 + $0x110] sm:$0xff] %vm1716, %v4475
          %4578 = vst.msk [vmem:[#allocation2 + $0x118] sm:$0xff] %vm1716, %v4480
          %4579 = vst.msk [vmem:[#allocation2 + $0x120] sm:$0xff] %vm1716, %v4485
          %4580 = vst.msk [vmem:[#allocation2 + $0x128] sm:$0xff] %vm1716, %v4490
          %4581 = vst.msk [vmem:[#allocation2 + $0x130] sm:$0xff] %vm1716, %v4495
          %4582 = vst.msk [vmem:[#allocation2 + $0x138] sm:$0xff] %vm1716, %v4500
          %4583 = vst.msk [vmem:[#allocation2 + $0x140] sm:$0xff] %vm1716, %v4505
          %4584 = vst.msk [vmem:[#allocation2 + $0x148] sm:$0xff] %vm1716, %v4510
          %4585 = vst.msk [vmem:[#allocation2 + $0x150] sm:$0xff] %vm1716, %v4515
          %4586 = vst.msk [vmem:[#allocation2 + $0x158] sm:$0xff] %vm1716, %v4520
          %4587 = vst.msk [vmem:[#allocation2 + $0x160] sm:$0xff] %vm1716, %v4525
          %4588 = vst.msk [vmem:[#allocation2 + $0x168] sm:$0xff] %vm1716, %v4530
          %4589 = vst.msk [vmem:[#allocation2 + $0x170] sm:$0xff] %vm1716, %v4535
          %4590 = vst.msk [vmem:[#allocation2 + $0x178] sm:$0xff] %vm1716, %v4540
        $region84: #{tpu_custom_call.1} parent=43 // pred_fallthru
          _
        %p4591 = scmp.eq.s32.totalorder %s32, 1
        %p4592 = pnand %p4027, %p4591
        %p4593 = pneg %p4592
        // Predicated region
        $region85: #{tpu_custom_call.1} parent=43 // pred_check
          _
        $region86: #{tpu_custom_call.1} parent=43 // pred_check_branch
          %4595 = sbr.rel (%p4592) target = $region88
        $region87: #{tpu_custom_call.1} parent=43 // pred_region
          %v4596 = vld [vmem:[#allocation2] sm:$0xff]
          %v4597 = vld [vmem:[#allocation2 + $0x8] sm:$0xff]
          %v4598 = vld [vmem:[#allocation2 + $0x10] sm:$0xff]
          %v4599 = vld [vmem:[#allocation2 + $0x18] sm:$0xff]
          %v4600 = vld [vmem:[#allocation2 + $0x20] sm:$0xff]
          %v4601 = vld [vmem:[#allocation2 + $0x28] sm:$0xff]
          %v4602 = vld [vmem:[#allocation2 + $0x30] sm:$0xff]
          %v4603 = vld [vmem:[#allocation2 + $0x38] sm:$0xff]
          %v4604 = vld [vmem:[#allocation2 + $0x40] sm:$0xff]
          %v4605 = vld [vmem:[#allocation2 + $0x48] sm:$0xff]
          %v4606 = vld [vmem:[#allocation2 + $0x50] sm:$0xff]
          %v4607 = vld [vmem:[#allocation2 + $0x58] sm:$0xff]
          %v4608 = vld [vmem:[#allocation2 + $0x60] sm:$0xff]
          %v4609 = vld [vmem:[#allocation2 + $0x68] sm:$0xff]
          %v4610 = vld [vmem:[#allocation2 + $0x70] sm:$0xff]
          %v4611 = vld [vmem:[#allocation2 + $0x78] sm:$0xff]
          %v4612 = vld [vmem:[#allocation2 + $0x80] sm:$0xff]
          %v4613 = vld [vmem:[#allocation2 + $0x88] sm:$0xff]
          %v4614 = vld [vmem:[#allocation2 + $0x90] sm:$0xff]
          %v4615 = vld [vmem:[#allocation2 + $0x98] sm:$0xff]
          %v4616 = vld [vmem:[#allocation2 + $0xa0] sm:$0xff]
          %v4617 = vld [vmem:[#allocation2 + $0xa8] sm:$0xff]
          %v4618 = vld [vmem:[#allocation2 + $0xb0] sm:$0xff]
          %v4619 = vld [vmem:[#allocation2 + $0xb8] sm:$0xff]
          %v4620 = vld [vmem:[#allocation2 + $0xc0] sm:$0xff]
          %v4621 = vld [vmem:[#allocation2 + $0xc8] sm:$0xff]
          %v4622 = vld [vmem:[#allocation2 + $0xd0] sm:$0xff]
          %v4623 = vld [vmem:[#allocation2 + $0xd8] sm:$0xff]
          %v4624 = vld [vmem:[#allocation2 + $0xe0] sm:$0xff]
          %v4625 = vld [vmem:[#allocation2 + $0xe8] sm:$0xff]
          %v4626 = vld [vmem:[#allocation2 + $0xf0] sm:$0xff]
          %v4627 = vld [vmem:[#allocation2 + $0xf8] sm:$0xff]
          %v4628 = vld [vmem:[#allocation2 + $0x100] sm:$0xff]
          %v4629 = vld [vmem:[#allocation2 + $0x108] sm:$0xff]
          %v4630 = vld [vmem:[#allocation2 + $0x110] sm:$0xff]
          %v4631 = vld [vmem:[#allocation2 + $0x118] sm:$0xff]
          %v4632 = vld [vmem:[#allocation2 + $0x120] sm:$0xff]
          %v4633 = vld [vmem:[#allocation2 + $0x128] sm:$0xff]
          %v4634 = vld [vmem:[#allocation2 + $0x130] sm:$0xff]
          %v4635 = vld [vmem:[#allocation2 + $0x138] sm:$0xff]
          %v4636 = vld [vmem:[#allocation2 + $0x140] sm:$0xff]
          %v4637 = vld [vmem:[#allocation2 + $0x148] sm:$0xff]
          %v4638 = vld [vmem:[#allocation2 + $0x150] sm:$0xff]
          %v4639 = vld [vmem:[#allocation2 + $0x158] sm:$0xff]
          %v4640 = vld [vmem:[#allocation2 + $0x160] sm:$0xff]
          %v4641 = vld [vmem:[#allocation2 + $0x168] sm:$0xff]
          %v4642 = vld [vmem:[#allocation2 + $0x170] sm:$0xff]
          %v4643 = vld [vmem:[#allocation2 + $0x178] sm:$0xff]
          %4644 = vst.msk [vmem:[%s460] sm:$0xff] %vm1716, %v4596
          %4645 = vst.msk [vmem:[%s460 + $0x8] sm:$0xff] %vm1716, %v4597
          %4646 = vst.msk [vmem:[%s460 + $0x10] sm:$0xff] %vm1716, %v4598
          %4647 = vst.msk [vmem:[%s460 + $0x18] sm:$0xff] %vm1716, %v4599
          %4648 = vst.msk [vmem:[%s460 + $0x20] sm:$0xff] %vm1716, %v4600
          %4649 = vst.msk [vmem:[%s460 + $0x28] sm:$0xff] %vm1716, %v4601
          %4650 = vst.msk [vmem:[%s460 + $0x30] sm:$0xff] %vm1716, %v4602
          %4651 = vst.msk [vmem:[%s460 + $0x38] sm:$0xff] %vm1716, %v4603
          %4652 = vst.msk [vmem:[%s460 + $0x40] sm:$0xff] %vm1716, %v4604
          %4653 = vst.msk [vmem:[%s460 + $0x48] sm:$0xff] %vm1716, %v4605
          %4654 = vst.msk [vmem:[%s460 + $0x50] sm:$0xff] %vm1716, %v4606
          %4655 = vst.msk [vmem:[%s460 + $0x58] sm:$0xff] %vm1716, %v4607
          %4656 = vst.msk [vmem:[%s460 + $0x60] sm:$0xff] %vm1716, %v4608
          %4657 = vst.msk [vmem:[%s460 + $0x68] sm:$0xff] %vm1716, %v4609
          %4658 = vst.msk [vmem:[%s460 + $0x70] sm:$0xff] %vm1716, %v4610
          %4659 = vst.msk [vmem:[%s460 + $0x78] sm:$0xff] %vm1716, %v4611
          %4660 = vst.msk [vmem:[%s460 + $0x80] sm:$0xff] %vm1716, %v4612
          %4661 = vst.msk [vmem:[%s460 + $0x88] sm:$0xff] %vm1716, %v4613
          %4662 = vst.msk [vmem:[%s460 + $0x90] sm:$0xff] %vm1716, %v4614
          %4663 = vst.msk [vmem:[%s460 + $0x98] sm:$0xff] %vm1716, %v4615
          %4664 = vst.msk [vmem:[%s460 + $0xa0] sm:$0xff] %vm1716, %v4616
          %4665 = vst.msk [vmem:[%s460 + $0xa8] sm:$0xff] %vm1716, %v4617
          %4666 = vst.msk [vmem:[%s460 + $0xb0] sm:$0xff] %vm1716, %v4618
          %4667 = vst.msk [vmem:[%s460 + $0xb8] sm:$0xff] %vm1716, %v4619
          %4668 = vst.msk [vmem:[%s460 + $0xc0] sm:$0xff] %vm1716, %v4620
          %4669 = vst.msk [vmem:[%s460 + $0xc8] sm:$0xff] %vm1716, %v4621
          %4670 = vst.msk [vmem:[%s460 + $0xd0] sm:$0xff] %vm1716, %v4622
          %4671 = vst.msk [vmem:[%s460 + $0xd8] sm:$0xff] %vm1716, %v4623
          %4672 = vst.msk [vmem:[%s460 + $0xe0] sm:$0xff] %vm1716, %v4624
          %4673 = vst.msk [vmem:[%s460 + $0xe8] sm:$0xff] %vm1716, %v4625
          %4674 = vst.msk [vmem:[%s460 + $0xf0] sm:$0xff] %vm1716, %v4626
          %4675 = vst.msk [vmem:[%s460 + $0xf8] sm:$0xff] %vm1716, %v4627
          %4676 = vst.msk [vmem:[%s460 + $0x100] sm:$0xff] %vm1716, %v4628
          %4677 = vst.msk [vmem:[%s460 + $0x108] sm:$0xff] %vm1716, %v4629
          %4678 = vst.msk [vmem:[%s460 + $0x110] sm:$0xff] %vm1716, %v4630
          %4679 = vst.msk [vmem:[%s460 + $0x118] sm:$0xff] %vm1716, %v4631
          %4680 = vst.msk [vmem:[%s460 + $0x120] sm:$0xff] %vm1716, %v4632
          %4681 = vst.msk [vmem:[%s460 + $0x128] sm:$0xff] %vm1716, %v4633
          %4682 = vst.msk [vmem:[%s460 + $0x130] sm:$0xff] %vm1716, %v4634
          %4683 = vst.msk [vmem:[%s460 + $0x138] sm:$0xff] %vm1716, %v4635
          %4684 = vst.msk [vmem:[%s460 + $0x140] sm:$0xff] %vm1716, %v4636
          %4685 = vst.msk [vmem:[%s460 + $0x148] sm:$0xff] %vm1716, %v4637
          %4686 = vst.msk [vmem:[%s460 + $0x150] sm:$0xff] %vm1716, %v4638
          %4687 = vst.msk [vmem:[%s460 + $0x158] sm:$0xff] %vm1716, %v4639
          %4688 = vst.msk [vmem:[%s460 + $0x160] sm:$0xff] %vm1716, %v4640
          %4689 = vst.msk [vmem:[%s460 + $0x168] sm:$0xff] %vm1716, %v4641
          %4690 = vst.msk [vmem:[%s460 + $0x170] sm:$0xff] %vm1716, %v4642
          %4691 = vst.msk [vmem:[%s460 + $0x178] sm:$0xff] %vm1716, %v4643
        $region88: #{tpu_custom_call.1} parent=43 // pred_fallthru
          _
        %p4692 = scmp.lt.s32.totalorder %s31, 1
        %s4693 = scalar_select %p4692, %s31, 1
        %s4694 = smul.addr %s4693, 48
        %s4695 = smul.addr %s4694, 8
        %s4696 = scalar_lea.vmem %s6, %s4695
        // Predicated region
        $region89: #{tpu_custom_call.1} parent=43 // pred_check
          %p4697 = pneg %p221
        $region90: #{tpu_custom_call.1} parent=43 // pred_check_branch
          %4699 = sbr.rel (%p4697) target = $region92
        $region91: #{tpu_custom_call.1} parent=43 // pred_region
          _
        $region92: #{tpu_custom_call.1} parent=43 // pred_fallthru
          _
      $region44: #{tpu_custom_call.1} parent=5 // pred_fallthru
        _
      %p4700 = scmp.le.s32.totalorder 2, %s21
      // Predicated region
      $region93: #{tpu_custom_call.1} parent=5 // pred_check
        %p4701 = pneg %p4700
      $region94: #{tpu_custom_call.1} parent=5 // pred_check_branch
        %4703 = sbr.rel (%p4701) target = $region96
      $region95: #{tpu_custom_call.1} parent=5 // pred_region
        %s4704 = ssub.s32 %s21, 2
        // Predicated region
        $region97: #{tpu_custom_call.1} parent=95 // pred_check
          %p4705 = pneg %p227
        $region98: #{tpu_custom_call.1} parent=95 // pred_check_branch
          %4707 = sbr.rel (%p4705) target = $region100
        $region99: #{tpu_custom_call.1} parent=95 // pred_region
          %p4708 = scmp.lt.s32.totalorder %s34, 1
          %s4709 = scalar_select %p4708, %s34, 1
          %s4710 = smul.addr %s4709, 48
          %s4711 = smul.addr %s4710, 8
          %s4712 = scalar_lea.vmem %s6, %s4711
        $region100: #{tpu_custom_call.1} parent=95 // pred_fallthru
          _
      $region96: #{tpu_custom_call.1} parent=5 // pred_fallthru
        _
    $region6: #{tpu_custom_call.1} parent=1 // loop_footer
      %s25 = sadd.s32 1, %s21
    $region7: #{tpu_custom_call.1} parent=1 // loop_footer_branch
      %20 = sbr.rel target = $region3
    $region8: #{tpu_custom_call.1} parent=1 // loop_exit
      _
    %4713 = vsyncpa [#allocation8], 1
    %s4714 = scalar_lea.sflag [#allocation8], 1
    %4715 = vsyncpa %s4714, 1
    %4716 = vsyncpa [#allocation10], 1
    %s4717 = scalar_lea.sflag [#allocation10], 1
    %4718 = vsyncpa %s4717, 1
    %4719 = vsyncpa [#allocation13], 1
    %s4720 = scalar_lea.sflag [#allocation13], 1
    %4721 = vsyncpa %s4720, 1

</llo_original>
